<compile_context>
chip_gen: v7x
topology: tpu7x:2x2x1
jax: 0.10.0
libtpu: 0.0.40
codegen_flags: <defaults>
</compile_context>

<pallas_src>
import jax
import jax.numpy as jnp
from jax.experimental import pallas as pl
from jax.experimental.pallas import tpu as pltpu


# ------------------------------- helpers -------------------------------------
def _round_up(n, m):
    return ((n + m - 1) // m) * m


def _pick_chunk(n, target, multiple=1):
    """Largest divisor of n that is <= target and a multiple of `multiple`,
    else fall back to n (full-extent block is always legal)."""
    target = max(1, min(n, target))
    for c in range(target, 0, -1):
        if n % c == 0 and c % multiple == 0:
            return c
    return n


def _pick_batch_chunk(bp):
    """Batch block: whole batch if small, otherwise split (multiple of 8) so a
    second TensorCore (v7x) can take the other half via the 'parallel' axis."""
    if bp < 16:
        return bp
    return _pick_chunk(bp, bp // 2, multiple=8)


# -------------------------- fused GRU layer kernel ----------------------------
def _make_gru_layer_kernel(t_chunk, h_pad, unroll, fuse_head):
    """One GRU layer.  Per grid step (b, c): DMA x chunk (t_chunk, b_chunk, D),
    run the recurrence with the hidden state in an f32 VMEM scratch carried
    across time chunks.  Input projection + hidden projection are each ONE
    fused (.,3*Hp) MXU dot per timestep.  If fuse_head, the Linear head is
    applied at the last time chunk and only (b_chunk, C) logits are emitted."""
    HP = h_pad

    def kernel(*refs):
        if fuse_head:
            (x_ref, wih_ref, bih_ref, whh_ref, bhn_ref, wl_ref, bl_ref,
             out_ref, h_scratch) = refs
        else:
            (x_ref, wih_ref, bih_ref, whh_ref, bhn_ref,
             y_ref, h_scratch) = refs

        c = pl.program_id(1)

        @pl.when(c == 0)
        def _init():
            h_scratch[...] = jnp.zeros_like(h_scratch)

        wih = wih_ref[...]          # (D, 3*HP)   bf16, resident
        bih = bih_ref[...]          # (1, 3*HP)   f32  (b_r,b_z pre-added; b_n = bih_n)
        whh = whh_ref[...]          # (HP, 3*HP)  bf16, resident
        bhn = bhn_ref[...]          # (1, HP)     f32  (bhh_n, multiplied by r)

        def step(i, h):
            x_t = x_ref[i]                                              # (b, D)
            gx = jnp.dot(x_t, wih, preferred_element_type=jnp.float32) + bih
            gh = jnp.dot(h.astype(whh.dtype), whh,
                         preferred_element_type=jnp.float32)
            r = jax.nn.sigmoid(gx[:, 0:HP] + gh[:, 0:HP])
            z = jax.nn.sigmoid(gx[:, HP:2 * HP] + gh[:, HP:2 * HP])
            n = jnp.tanh(gx[:, 2 * HP:3 * HP] + r * (gh[:, 2 * HP:3 * HP] + bhn))
            h_new = (1.0 - z) * n + z * h
            if not fuse_head:
                y_ref[i] = h_new.astype(y_ref.dtype)
            return h_new

        h_final = jax.lax.fori_loop(0, t_chunk, step, h_scratch[...],
                                    unroll=unroll)
        h_scratch[...] = h_final

        if fuse_head:
            @pl.when(c == pl.num_programs(1) - 1)
            def _finalize():
                logits = jnp.dot(h_final.astype(wl_ref.dtype), wl_ref[...],
                                 preferred_element_type=jnp.float32) + bl_ref[...]
                out_ref[...] = logits.astype(out_ref.dtype)

    return kernel


def gru_layer_seq(x_seq, wih, bih, whh, bhn, *, t_chunk, b_chunk, unroll):
    """x_seq: (T, B_pad, D) bf16 -> (T, B_pad, HP) bf16 hidden sequence."""
    T, Bp, D = x_seq.shape
    HP = whh.shape[0]
    grid = (Bp // b_chunk, T // t_chunk)
    x_spec = pl.BlockSpec((t_chunk, b_chunk, D), lambda b, c: (c, b, 0))
    wih_spec = pl.BlockSpec((D, 3 * HP), lambda b, c: (0, 0))
    bih_spec = pl.BlockSpec((1, 3 * HP), lambda b, c: (0, 0))
    whh_spec = pl.BlockSpec((HP, 3 * HP), lambda b, c: (0, 0))
    bhn_spec = pl.BlockSpec((1, HP), lambda b, c: (0, 0))
    y_spec = pl.BlockSpec((t_chunk, b_chunk, HP), lambda b, c: (c, b, 0))
    return pl.pallas_call(
        _make_gru_layer_kernel(t_chunk, HP, unroll, fuse_head=False),
        out_shape=jax.ShapeDtypeStruct((T, Bp, HP), jnp.bfloat16),
        grid_spec=pltpu.PrefetchScalarGridSpec(
            num_scalar_prefetch=0,
            grid=grid,
            in_specs=[x_spec, wih_spec, bih_spec, whh_spec, bhn_spec],
            out_specs=y_spec,
            scratch_shapes=[pltpu.VMEM((b_chunk, HP), jnp.float32)],
        ),
        compiler_params=pltpu.CompilerParams(
            dimension_semantics=("parallel", "arbitrary")),
    )(x_seq, wih, bih, whh, bhn)


def gru_layer_final(x_seq, wih, bih, whh, bhn, w_lin, b_lin,
                    *, t_chunk, b_chunk, unroll):
    """Last GRU layer fused with the Linear head: (T, B_pad, D) -> (B_pad, C)."""
    T, Bp, D = x_seq.shape
    HP = whh.shape[0]
    C = w_lin.shape[1]
    grid = (Bp // b_chunk, T // t_chunk)
    x_spec = pl.BlockSpec((t_chunk, b_chunk, D), lambda b, c: (c, b, 0))
    wih_spec = pl.BlockSpec((D, 3 * HP), lambda b, c: (0, 0))
    bih_spec = pl.BlockSpec((1, 3 * HP), lambda b, c: (0, 0))
    whh_spec = pl.BlockSpec((HP, 3 * HP), lambda b, c: (0, 0))
    bhn_spec = pl.BlockSpec((1, HP), lambda b, c: (0, 0))
    wl_spec = pl.BlockSpec((HP, C), lambda b, c: (0, 0))
    bl_spec = pl.BlockSpec((1, C), lambda b, c: (0, 0))
    out_spec = pl.BlockSpec((b_chunk, C), lambda b, c: (b, 0))
    return pl.pallas_call(
        _make_gru_layer_kernel(t_chunk, HP, unroll, fuse_head=True),
        out_shape=jax.ShapeDtypeStruct((Bp, C), jnp.float32),
        grid_spec=pltpu.PrefetchScalarGridSpec(
            num_scalar_prefetch=0,
            grid=grid,
            in_specs=[x_spec, wih_spec, bih_spec, whh_spec, bhn_spec,
                      wl_spec, bl_spec],
            out_specs=out_spec,
            scratch_shapes=[pltpu.VMEM((b_chunk, HP), jnp.float32)],
        ),
        compiler_params=pltpu.CompilerParams(
            dimension_semantics=("parallel", "arbitrary")),
    )(x_seq, wih, bih, whh, bhn, w_lin, b_lin)


# ----------------------------- parameters ------------------------------------
def init_params(key, embedding_dim, hidden_size, num_classes, num_layers,
                dtype=jnp.bfloat16):
    """PyTorch-style init U(-1/sqrt(H), 1/sqrt(H)).  Returns (packed, raw):
    `packed` holds the fused/padded/transposed kernel weights (Hp = ceil128(H),
    per-gate blocks at 128-aligned column offsets, zero padding elsewhere);
    `raw` holds the PyTorch-layout f32 weights for the pure-JAX reference."""
    H = hidden_size
    HP = _round_up(H, 128)
    k = 1.0 / jnp.sqrt(float(H))
    keys = jax.random.split(key, num_layers * 4 + 2)
    ki = 0
    gru, gru_raw = [], []
    for layer in range(num_layers):
        in_dim = embedding_dim if layer == 0 else H
        in_dim_p = embedding_dim if layer == 0 else HP
        wih = jax.random.uniform(keys[ki], (3 * H, in_dim),
                                 minval=-k, maxval=k, dtype=jnp.float32); ki += 1
        whh = jax.random.uniform(keys[ki], (3 * H, H),
                                 minval=-k, maxval=k, dtype=jnp.float32); ki += 1
        bih = jax.random.uniform(keys[ki], (3 * H,),
                                 minval=-k, maxval=k, dtype=jnp.float32); ki += 1
        bhh = jax.random.uniform(keys[ki], (3 * H,),
                                 minval=-k, maxval=k, dtype=jnp.float32); ki += 1
        gru_raw.append({"wih": wih, "whh": whh, "bih": bih, "bhh": bhh})

        wih_f = jnp.zeros((in_dim_p, 3 * HP), jnp.float32)
        whh_f = jnp.zeros((HP, 3 * HP), jnp.float32)
        for g in range(3):           # gate order: r, z, n (PyTorch)
            wih_f = wih_f.at[:in_dim, g * HP:g * HP + H].set(
                wih[g * H:(g + 1) * H, :].T)
            whh_f = whh_f.at[:H, g * HP:g * HP + H].set(
                whh[g * H:(g + 1) * H, :].T)
        # bih+bhh pre-added for r/z gates; n gate gets bih_n only (bhh_n stays
        # inside r*(.) per the PyTorch GRU formula).
        bih_f = jnp.zeros((1, 3 * HP), jnp.float32)
        bih_f = bih_f.at[0, 0:H].set(bih[0:H] + bhh[0:H])
        bih_f = bih_f.at[0, HP:HP + H].set(bih[H:2 * H] + bhh[H:2 * H])
        bih_f = bih_f.at[0, 2 * HP:2 * HP + H].set(bih[2 * H:3 * H])
        bhn_f = jnp.zeros((1, HP), jnp.float32).at[0, :H].set(bhh[2 * H:3 * H])
        gru.append({"wih": wih_f.astype(dtype), "bih": bih_f,
                    "whh": whh_f.astype(dtype), "bhn": bhn_f})

    wl = jax.random.uniform(keys[ki], (num_classes, H),
                            minval=-k, maxval=k, dtype=jnp.float32); ki += 1
    bl = jax.random.uniform(keys[ki], (num_classes,),
                            minval=-k, maxval=k, dtype=jnp.float32)
    wl_f = jnp.zeros((HP, num_classes), jnp.float32).at[:H, :].set(wl.T)
    packed = {"gru": gru,
              "linear": {"w": wl_f.astype(dtype), "b": bl.reshape(1, -1)}}
    raw = {"gru": gru_raw, "linear": {"w": wl, "b": bl.reshape(1, -1)}}
    return packed, raw


# ----------------------------- model forward ---------------------------------
def gru_imdb_forward(params, x, *, t_chunk=64):
    """x: (B, T, E) batch-first float32.  Returns (B, num_classes) float32."""
    B, T, E = x.shape
    num_layers = len(params["gru"])
    Bp = _round_up(B, 8)                       # sublane-aligned batch
    x = jnp.pad(x, ((0, Bp - B), (0, 0), (0, 0)))
    # time-major, bf16 activations (all math stays f32 inside the kernels)
    # TODO(synk): the (B,T,E)->(T,B,E) transpose could be folded into the
    # layer-0 BlockSpec index map; kept as a cheap XLA pass for clarity.
    h_seq = jnp.transpose(x, (1, 0, 2)).astype(jnp.bfloat16)   # (T, Bp, E)

    tc = _pick_chunk(T, t_chunk)
    unroll = _pick_chunk(tc, 8)
    b_chunk = _pick_batch_chunk(Bp)

    logits = None
    for li, lp in enumerate(params["gru"]):
        if li < num_layers - 1:
            h_seq = gru_layer_seq(h_seq, lp["wih"], lp["bih"], lp["whh"],
                                  lp["bhn"], t_chunk=tc, b_chunk=b_chunk,
                                  unroll=unroll)
            # TODO(synk): training-mode dropout (p=0.3) would apply here.
        else:
            logits = gru_layer_final(h_seq, lp["wih"], lp["bih"], lp["whh"],
                                     lp["bhn"], params["linear"]["w"],
                                     params["linear"]["b"], t_chunk=tc,
                                     b_chunk=b_chunk, unroll=unroll)
    return logits[:B]


# --------------------------- pure-JAX reference -------------------------------
def gru_imdb_reference(raw, x):
    """f32 reference with PyTorch-layout weights (eval mode, dropout no-op)."""
    out = x
    for lp in raw["gru"]:
        wih, whh, bih, bhh = lp["wih"], lp["whh"], lp["bih"], lp["bhh"]
        H = whh.shape[1]
        h = jnp.zeros((out.shape[0], H), jnp.float32)
        ys = []
        for t in range(out.shape[1]):
            xt = out[:, t, :]
            gi = xt @ wih.T + bih
            gh = h @ whh.T + bhh
            r = jax.nn.sigmoid(gi[:, 0:H] + gh[:, 0:H])
            z = jax.nn.sigmoid(gi[:, H:2 * H] + gh[:, H:2 * H])
            n = jnp.tanh(gi[:, 2 * H:3 * H] + r * gh[:, 2 * H:3 * H])
            h = (1.0 - z) * n + z * h
            ys.append(h)
        out = jnp.stack(ys, axis=1)
    return out[:, -1, :] @ raw["linear"]["w"].T + raw["linear"]["b"]


if __name__ == "__main__":
    batch, seq_len = 2, 8
    embedding_dim, hidden_size, num_classes, num_layers = 16, 32, 2, 2

    key = jax.random.PRNGKey(0)
    k_params, k_x = jax.random.split(key)
    params, raw = init_params(k_params, embedding_dim, hidden_size,
                              num_classes, num_layers)
    x = jax.random.normal(k_x, (batch, seq_len, embedding_dim), dtype=jnp.float32)

    out = jax.jit(gru_imdb_forward)(params, x)
    jax.block_until_ready(out)
    assert out.shape == (batch, num_classes)

    ref = gru_imdb_reference(raw, x)
    max_err = float(jnp.max(jnp.abs(out - ref)))
    assert max_err < 0.15, f"mismatch vs f32 reference: max abs err = {max_err}"
    print("KERNEL_OK")
</pallas_src>

<mosaic_0001>
module attributes {stable_mosaic.version = 11 : i64} {
  func.func @kernel(%arg0: i32, %arg1: i32, %arg2: memref<8x8x16xbf16, #tpu.memory_space<vmem>>, %arg3: memref<16x384xbf16, #tpu.memory_space<vmem>>, %arg4: memref<1x384xf32, #tpu.memory_space<vmem>>, %arg5: memref<128x384xbf16, #tpu.memory_space<vmem>>, %arg6: memref<1x128xf32, #tpu.memory_space<vmem>>, %arg7: memref<8x8x128xbf16, #tpu.memory_space<vmem>>, %arg8: memref<8x128xf32, #tpu.memory_space<vmem>>) attributes {dimension_semantics = [#tpu.dimension_semantics<parallel>, #tpu.dimension_semantics<arbitrary>], iteration_bounds = array<i64: 1, 1>, scalar_prefetch = 0 : i64, scratch_operands = 1 : i64, tpu.core_type = #tpu.core_type<tc>, window_params = [{transform_indices = @transform_0, window_bounds = array<i64: 8, 8, 16>}, {pipeline_mode = #tpu.pipeline_mode<synchronous>, transform_indices = @transform_1, window_bounds = array<i64: 16, 384>}, {pipeline_mode = #tpu.pipeline_mode<synchronous>, transform_indices = @transform_2, window_bounds = array<i64: 1, 384>}, {pipeline_mode = #tpu.pipeline_mode<synchronous>, transform_indices = @transform_3, window_bounds = array<i64: 128, 384>}, {pipeline_mode = #tpu.pipeline_mode<synchronous>, transform_indices = @transform_4, window_bounds = array<i64: 1, 128>}, {transform_indices = @transform_5, window_bounds = array<i64: 8, 8, 128>}]} {
    %c0_i32 = arith.constant 0 : i32
    %0 = arith.cmpi eq, %arg1, %c0_i32 : i32
    %1 = arith.extui %0 : i1 to i32
    %c0_i32_0 = arith.constant 0 : i32
    %2 = arith.cmpi ne, %1, %c0_i32_0 : i32
    scf.if %2 {
      %cst_84 = arith.constant 0.000000e+00 : f32
      %337 = vector.broadcast %cst_84 : f32 to vector<8x128xf32>
      %c0_85 = arith.constant 0 : index
      %c0_86 = arith.constant 0 : index
      %338 = vector.load %arg8[%c0_85, %c0_86] : memref<8x128xf32, #tpu.memory_space<vmem>>, vector<8x128xf32>
      tpu.vector_store %arg8[%c0_85, %c0_86], %337 {strides = array<i32>} : memref<8x128xf32, #tpu.memory_space<vmem>>, vector<8x128xf32>,
    } else {
    }
    %c0 = arith.constant 0 : index
    %c0_1 = arith.constant 0 : index
    %3 = vector.load %arg3[%c0, %c0_1] : memref<16x384xbf16, #tpu.memory_space<vmem>>, vector<16x384xbf16>
    %c0_2 = arith.constant 0 : index
    %c0_3 = arith.constant 0 : index
    %4 = vector.load %arg4[%c0_2, %c0_3] : memref<1x384xf32, #tpu.memory_space<vmem>>, vector<1x384xf32>
    %c0_4 = arith.constant 0 : index
    %c0_5 = arith.constant 0 : index
    %5 = vector.load %arg5[%c0_4, %c0_5] : memref<128x384xbf16, #tpu.memory_space<vmem>>, vector<128x384xbf16>
    %c0_6 = arith.constant 0 : index
    %c0_7 = arith.constant 0 : index
    %6 = vector.load %arg6[%c0_6, %c0_7] : memref<1x128xf32, #tpu.memory_space<vmem>>, vector<1x128xf32>
    %c0_8 = arith.constant 0 : index
    %c0_9 = arith.constant 0 : index
    %7 = vector.load %arg8[%c0_8, %c0_9] : memref<8x128xf32, #tpu.memory_space<vmem>>, vector<8x128xf32>
    %c0_i32_10 = arith.constant 0 : i32
    %8 = arith.index_cast %c0_i32_10 : i32 to index
    %c0_11 = arith.constant 0 : index
    %c0_12 = arith.constant 0 : index
    %9 = vector.load %arg2[%8, %c0_11, %c0_12] : memref<8x8x16xbf16, #tpu.memory_space<vmem>>, vector<1x8x16xbf16>
    %10 = vector.shape_cast %9 : vector<1x8x16xbf16> to vector<8x16xbf16>
    %cst = arith.constant dense<0.000000e+00> : vector<8x384xf32>
    %11 = tpu.matmul %10, %3, %cst {dimension_numbers = #tpu.dot_dimension_numbers<[1], [0], [0], [1], [0, 0, 1, 1], [], []>} : vector<8x16xbf16>, vector<16x384xbf16>, vector<8x384xf32> -> vector<8x384xf32>
    %12 = vector.broadcast %4 : vector<1x384xf32> to vector<8x384xf32>
    %13 = arith.addf %11, %12 : vector<8x384xf32>
    %14 = arith.truncf %7 : vector<8x128xf32> to vector<8x128xbf16>
    %cst_13 = arith.constant dense<0.000000e+00> : vector<8x384xf32>
    %15 = tpu.matmul %14, %5, %cst_13 {dimension_numbers = #tpu.dot_dimension_numbers<[1], [0], [0], [1], [0, 0, 1, 1], [], []>} : vector<8x128xbf16>, vector<128x384xbf16>, vector<8x384xf32> -> vector<8x384xf32>
    %16 = vector.extract_strided_slice %13 {offsets = [0, 0], sizes = [8, 128], strides = [1, 1]} : vector<8x384xf32> to vector<8x128xf32>
    %17 = vector.extract_strided_slice %15 {offsets = [0, 0], sizes = [8, 128], strides = [1, 1]} : vector<8x384xf32> to vector<8x128xf32>
    %18 = arith.addf %16, %17 : vector<8x128xf32>
    %19 = arith.negf %18 : vector<8x128xf32>
    %20 = math.exp %19 : vector<8x128xf32>
    %cst_14 = arith.constant 1.000000e+00 : f32
    %21 = vector.broadcast %cst_14 : f32 to vector<8x128xf32>
    %22 = arith.addf %21, %20 : vector<8x128xf32>
    %23 = arith.divf %21, %22 : vector<8x128xf32>
    %24 = vector.extract_strided_slice %13 {offsets = [0, 128], sizes = [8, 128], strides = [1, 1]} : vector<8x384xf32> to vector<8x128xf32>
    %25 = vector.extract_strided_slice %15 {offsets = [0, 128], sizes = [8, 128], strides = [1, 1]} : vector<8x384xf32> to vector<8x128xf32>
    %26 = arith.addf %24, %25 : vector<8x128xf32>
    %27 = arith.negf %26 : vector<8x128xf32>
    %28 = math.exp %27 : vector<8x128xf32>
    %cst_15 = arith.constant 1.000000e+00 : f32
    %29 = vector.broadcast %cst_15 : f32 to vector<8x128xf32>
    %30 = arith.addf %29, %28 : vector<8x128xf32>
    %31 = arith.divf %29, %30 : vector<8x128xf32>
    %32 = vector.extract_strided_slice %13 {offsets = [0, 256], sizes = [8, 128], strides = [1, 1]} : vector<8x384xf32> to vector<8x128xf32>
    %33 = vector.extract_strided_slice %15 {offsets = [0, 256], sizes = [8, 128], strides = [1, 1]} : vector<8x384xf32> to vector<8x128xf32>
    %34 = vector.broadcast %6 : vector<1x128xf32> to vector<8x128xf32>
    %35 = arith.addf %33, %34 : vector<8x128xf32>
    %36 = arith.mulf %23, %35 : vector<8x128xf32>
    %37 = arith.addf %32, %36 : vector<8x128xf32>
    %38 = math.tanh %37 : vector<8x128xf32>
    %cst_16 = arith.constant 1.000000e+00 : f32
    %39 = vector.broadcast %cst_16 : f32 to vector<8x128xf32>
    %40 = arith.subf %39, %31 : vector<8x128xf32>
    %41 = arith.mulf %40, %38 : vector<8x128xf32>
    %42 = arith.mulf %31, %7 : vector<8x128xf32>
    %43 = arith.addf %41, %42 : vector<8x128xf32>
    %44 = arith.truncf %43 : vector<8x128xf32> to vector<8x128xbf16>
    %45 = arith.index_cast %c0_i32_10 : i32 to index
    %c0_17 = arith.constant 0 : index
    %c0_18 = arith.constant 0 : index
    %46 = vector.load %arg7[%45, %c0_17, %c0_18] : memref<8x8x128xbf16, #tpu.memory_space<vmem>>, vector<1x8x128xbf16>
    %47 = vector.shape_cast %46 : vector<1x8x128xbf16> to vector<8x128xbf16>
    %48 = vector.shape_cast %44 : vector<8x128xbf16> to vector<1x8x128xbf16>
    tpu.vector_store %arg7[%45, %c0_17, %c0_18], %48 {strides = array<i32>} : memref<8x8x128xbf16, #tpu.memory_space<vmem>>, vector<1x8x128xbf16>,
    %c1_i32 = arith.constant 1 : i32
    %49 = arith.index_cast %c1_i32 : i32 to index
    %c0_19 = arith.constant 0 : index
    %c0_20 = arith.constant 0 : index
    %50 = vector.load %arg2[%49, %c0_19, %c0_20] : memref<8x8x16xbf16, #tpu.memory_space<vmem>>, vector<1x8x16xbf16>
    %51 = vector.shape_cast %50 : vector<1x8x16xbf16> to vector<8x16xbf16>
    %cst_21 = arith.constant dense<0.000000e+00> : vector<8x384xf32>
    %52 = tpu.matmul %51, %3, %cst_21 {dimension_numbers = #tpu.dot_dimension_numbers<[1], [0], [0], [1], [0, 0, 1, 1], [], []>} : vector<8x16xbf16>, vector<16x384xbf16>, vector<8x384xf32> -> vector<8x384xf32>
    %53 = vector.broadcast %4 : vector<1x384xf32> to vector<8x384xf32>
    %54 = arith.addf %52, %53 : vector<8x384xf32>
    %55 = arith.truncf %43 : vector<8x128xf32> to vector<8x128xbf16>
    %cst_22 = arith.constant dense<0.000000e+00> : vector<8x384xf32>
    %56 = tpu.matmul %55, %5, %cst_22 {dimension_numbers = #tpu.dot_dimension_numbers<[1], [0], [0], [1], [0, 0, 1, 1], [], []>} : vector<8x128xbf16>, vector<128x384xbf16>, vector<8x384xf32> -> vector<8x384xf32>
    %57 = vector.extract_strided_slice %54 {offsets = [0, 0], sizes = [8, 128], strides = [1, 1]} : vector<8x384xf32> to vector<8x128xf32>
    %58 = vector.extract_strided_slice %56 {offsets = [0, 0], sizes = [8, 128], strides = [1, 1]} : vector<8x384xf32> to vector<8x128xf32>
    %59 = arith.addf %57, %58 : vector<8x128xf32>
    %60 = arith.negf %59 : vector<8x128xf32>
    %61 = math.exp %60 : vector<8x128xf32>
    %cst_23 = arith.constant 1.000000e+00 : f32
    %62 = vector.broadcast %cst_23 : f32 to vector<8x128xf32>
    %63 = arith.addf %62, %61 : vector<8x128xf32>
    %64 = arith.divf %62, %63 : vector<8x128xf32>
    %65 = vector.extract_strided_slice %54 {offsets = [0, 128], sizes = [8, 128], strides = [1, 1]} : vector<8x384xf32> to vector<8x128xf32>
    %66 = vector.extract_strided_slice %56 {offsets = [0, 128], sizes = [8, 128], strides = [1, 1]} : vector<8x384xf32> to vector<8x128xf32>
    %67 = arith.addf %65, %66 : vector<8x128xf32>
    %68 = arith.negf %67 : vector<8x128xf32>
    %69 = math.exp %68 : vector<8x128xf32>
    %cst_24 = arith.constant 1.000000e+00 : f32
    %70 = vector.broadcast %cst_24 : f32 to vector<8x128xf32>
    %71 = arith.addf %70, %69 : vector<8x128xf32>
    %72 = arith.divf %70, %71 : vector<8x128xf32>
    %73 = vector.extract_strided_slice %54 {offsets = [0, 256], sizes = [8, 128], strides = [1, 1]} : vector<8x384xf32> to vector<8x128xf32>
    %74 = vector.extract_strided_slice %56 {offsets = [0, 256], sizes = [8, 128], strides = [1, 1]} : vector<8x384xf32> to vector<8x128xf32>
    %75 = vector.broadcast %6 : vector<1x128xf32> to vector<8x128xf32>
    %76 = arith.addf %74, %75 : vector<8x128xf32>
    %77 = arith.mulf %64, %76 : vector<8x128xf32>
    %78 = arith.addf %73, %77 : vector<8x128xf32>
    %79 = math.tanh %78 : vector<8x128xf32>
    %cst_25 = arith.constant 1.000000e+00 : f32
    %80 = vector.broadcast %cst_25 : f32 to vector<8x128xf32>
    %81 = arith.subf %80, %72 : vector<8x128xf32>
    %82 = arith.mulf %81, %79 : vector<8x128xf32>
    %83 = arith.mulf %72, %43 : vector<8x128xf32>
    %84 = arith.addf %82, %83 : vector<8x128xf32>
    %85 = arith.truncf %84 : vector<8x128xf32> to vector<8x128xbf16>
    %86 = arith.index_cast %c1_i32 : i32 to index
    %c0_26 = arith.constant 0 : index
    %c0_27 = arith.constant 0 : index
    %87 = vector.load %arg7[%86, %c0_26, %c0_27] : memref<8x8x128xbf16, #tpu.memory_space<vmem>>, vector<1x8x128xbf16>
    %88 = vector.shape_cast %87 : vector<1x8x128xbf16> to vector<8x128xbf16>
    %89 = vector.shape_cast %85 : vector<8x128xbf16> to vector<1x8x128xbf16>
    tpu.vector_store %arg7[%86, %c0_26, %c0_27], %89 {strides = array<i32>} : memref<8x8x128xbf16, #tpu.memory_space<vmem>>, vector<1x8x128xbf16>,
    %c2_i32 = arith.constant 2 : i32
    %90 = arith.index_cast %c2_i32 : i32 to index
    %c0_28 = arith.constant 0 : index
    %c0_29 = arith.constant 0 : index
    %91 = vector.load %arg2[%90, %c0_28, %c0_29] : memref<8x8x16xbf16, #tpu.memory_space<vmem>>, vector<1x8x16xbf16>
    %92 = vector.shape_cast %91 : vector<1x8x16xbf16> to vector<8x16xbf16>
    %cst_30 = arith.constant dense<0.000000e+00> : vector<8x384xf32>
    %93 = tpu.matmul %92, %3, %cst_30 {dimension_numbers = #tpu.dot_dimension_numbers<[1], [0], [0], [1], [0, 0, 1, 1], [], []>} : vector<8x16xbf16>, vector<16x384xbf16>, vector<8x384xf32> -> vector<8x384xf32>
    %94 = vector.broadcast %4 : vector<1x384xf32> to vector<8x384xf32>
    %95 = arith.addf %93, %94 : vector<8x384xf32>
    %96 = arith.truncf %84 : vector<8x128xf32> to vector<8x128xbf16>
    %cst_31 = arith.constant dense<0.000000e+00> : vector<8x384xf32>
    %97 = tpu.matmul %96, %5, %cst_31 {dimension_numbers = #tpu.dot_dimension_numbers<[1], [0], [0], [1], [0, 0, 1, 1], [], []>} : vector<8x128xbf16>, vector<128x384xbf16>, vector<8x384xf32> -> vector<8x384xf32>
    %98 = vector.extract_strided_slice %95 {offsets = [0, 0], sizes = [8, 128], strides = [1, 1]} : vector<8x384xf32> to vector<8x128xf32>
    %99 = vector.extract_strided_slice %97 {offsets = [0, 0], sizes = [8, 128], strides = [1, 1]} : vector<8x384xf32> to vector<8x128xf32>
    %100 = arith.addf %98, %99 : vector<8x128xf32>
    %101 = arith.negf %100 : vector<8x128xf32>
    %102 = math.exp %101 : vector<8x128xf32>
    %cst_32 = arith.constant 1.000000e+00 : f32
    %103 = vector.broadcast %cst_32 : f32 to vector<8x128xf32>
    %104 = arith.addf %103, %102 : vector<8x128xf32>
    %105 = arith.divf %103, %104 : vector<8x128xf32>
    %106 = vector.extract_strided_slice %95 {offsets = [0, 128], sizes = [8, 128], strides = [1, 1]} : vector<8x384xf32> to vector<8x128xf32>
    %107 = vector.extract_strided_slice %97 {offsets = [0, 128], sizes = [8, 128], strides = [1, 1]} : vector<8x384xf32> to vector<8x128xf32>
    %108 = arith.addf %106, %107 : vector<8x128xf32>
    %109 = arith.negf %108 : vector<8x128xf32>
    %110 = math.exp %109 : vector<8x128xf32>
    %cst_33 = arith.constant 1.000000e+00 : f32
    %111 = vector.broadcast %cst_33 : f32 to vector<8x128xf32>
    %112 = arith.addf %111, %110 : vector<8x128xf32>
    %113 = arith.divf %111, %112 : vector<8x128xf32>
    %114 = vector.extract_strided_slice %95 {offsets = [0, 256], sizes = [8, 128], strides = [1, 1]} : vector<8x384xf32> to vector<8x128xf32>
    %115 = vector.extract_strided_slice %97 {offsets = [0, 256], sizes = [8, 128], strides = [1, 1]} : vector<8x384xf32> to vector<8x128xf32>
    %116 = vector.broadcast %6 : vector<1x128xf32> to vector<8x128xf32>
    %117 = arith.addf %115, %116 : vector<8x128xf32>
    %118 = arith.mulf %105, %117 : vector<8x128xf32>
    %119 = arith.addf %114, %118 : vector<8x128xf32>
    %120 = math.tanh %119 : vector<8x128xf32>
    %cst_34 = arith.constant 1.000000e+00 : f32
    %121 = vector.broadcast %cst_34 : f32 to vector<8x128xf32>
    %122 = arith.subf %121, %113 : vector<8x128xf32>
    %123 = arith.mulf %122, %120 : vector<8x128xf32>
    %124 = arith.mulf %113, %84 : vector<8x128xf32>
    %125 = arith.addf %123, %124 : vector<8x128xf32>
    %126 = arith.truncf %125 : vector<8x128xf32> to vector<8x128xbf16>
    %127 = arith.index_cast %c2_i32 : i32 to index
    %c0_35 = arith.constant 0 : index
    %c0_36 = arith.constant 0 : index
    %128 = vector.load %arg7[%127, %c0_35, %c0_36] : memref<8x8x128xbf16, #tpu.memory_space<vmem>>, vector<1x8x128xbf16>
    %129 = vector.shape_cast %128 : vector<1x8x128xbf16> to vector<8x128xbf16>
    %130 = vector.shape_cast %126 : vector<8x128xbf16> to vector<1x8x128xbf16>
    tpu.vector_store %arg7[%127, %c0_35, %c0_36], %130 {strides = array<i32>} : memref<8x8x128xbf16, #tpu.memory_space<vmem>>, vector<1x8x128xbf16>,
    %c3_i32 = arith.constant 3 : i32
    %131 = arith.index_cast %c3_i32 : i32 to index
    %c0_37 = arith.constant 0 : index
    %c0_38 = arith.constant 0 : index
    %132 = vector.load %arg2[%131, %c0_37, %c0_38] : memref<8x8x16xbf16, #tpu.memory_space<vmem>>, vector<1x8x16xbf16>
    %133 = vector.shape_cast %132 : vector<1x8x16xbf16> to vector<8x16xbf16>
    %cst_39 = arith.constant dense<0.000000e+00> : vector<8x384xf32>
    %134 = tpu.matmul %133, %3, %cst_39 {dimension_numbers = #tpu.dot_dimension_numbers<[1], [0], [0], [1], [0, 0, 1, 1], [], []>} : vector<8x16xbf16>, vector<16x384xbf16>, vector<8x384xf32> -> vector<8x384xf32>
    %135 = vector.broadcast %4 : vector<1x384xf32> to vector<8x384xf32>
    %136 = arith.addf %134, %135 : vector<8x384xf32>
    %137 = arith.truncf %125 : vector<8x128xf32> to vector<8x128xbf16>
    %cst_40 = arith.constant dense<0.000000e+00> : vector<8x384xf32>
    %138 = tpu.matmul %137, %5, %cst_40 {dimension_numbers = #tpu.dot_dimension_numbers<[1], [0], [0], [1], [0, 0, 1, 1], [], []>} : vector<8x128xbf16>, vector<128x384xbf16>, vector<8x384xf32> -> vector<8x384xf32>
    %139 = vector.extract_strided_slice %136 {offsets = [0, 0], sizes = [8, 128], strides = [1, 1]} : vector<8x384xf32> to vector<8x128xf32>
    %140 = vector.extract_strided_slice %138 {offsets = [0, 0], sizes = [8, 128], strides = [1, 1]} : vector<8x384xf32> to vector<8x128xf32>
    %141 = arith.addf %139, %140 : vector<8x128xf32>
    %142 = arith.negf %141 : vector<8x128xf32>
    %143 = math.exp %142 : vector<8x128xf32>
    %cst_41 = arith.constant 1.000000e+00 : f32
    %144 = vector.broadcast %cst_41 : f32 to vector<8x128xf32>
    %145 = arith.addf %144, %143 : vector<8x128xf32>
    %146 = arith.divf %144, %145 : vector<8x128xf32>
    %147 = vector.extract_strided_slice %136 {offsets = [0, 128], sizes = [8, 128], strides = [1, 1]} : vector<8x384xf32> to vector<8x128xf32>
    %148 = vector.extract_strided_slice %138 {offsets = [0, 128], sizes = [8, 128], strides = [1, 1]} : vector<8x384xf32> to vector<8x128xf32>
    %149 = arith.addf %147, %148 : vector<8x128xf32>
    %150 = arith.negf %149 : vector<8x128xf32>
    %151 = math.exp %150 : vector<8x128xf32>
    %cst_42 = arith.constant 1.000000e+00 : f32
    %152 = vector.broadcast %cst_42 : f32 to vector<8x128xf32>
    %153 = arith.addf %152, %151 : vector<8x128xf32>
    %154 = arith.divf %152, %153 : vector<8x128xf32>
    %155 = vector.extract_strided_slice %136 {offsets = [0, 256], sizes = [8, 128], strides = [1, 1]} : vector<8x384xf32> to vector<8x128xf32>
    %156 = vector.extract_strided_slice %138 {offsets = [0, 256], sizes = [8, 128], strides = [1, 1]} : vector<8x384xf32> to vector<8x128xf32>
    %157 = vector.broadcast %6 : vector<1x128xf32> to vector<8x128xf32>
    %158 = arith.addf %156, %157 : vector<8x128xf32>
    %159 = arith.mulf %146, %158 : vector<8x128xf32>
    %160 = arith.addf %155, %159 : vector<8x128xf32>
    %161 = math.tanh %160 : vector<8x128xf32>
    %cst_43 = arith.constant 1.000000e+00 : f32
    %162 = vector.broadcast %cst_43 : f32 to vector<8x128xf32>
    %163 = arith.subf %162, %154 : vector<8x128xf32>
    %164 = arith.mulf %163, %161 : vector<8x128xf32>
    %165 = arith.mulf %154, %125 : vector<8x128xf32>
    %166 = arith.addf %164, %165 : vector<8x128xf32>
    %167 = arith.truncf %166 : vector<8x128xf32> to vector<8x128xbf16>
    %168 = arith.index_cast %c3_i32 : i32 to index
    %c0_44 = arith.constant 0 : index
    %c0_45 = arith.constant 0 : index
    %169 = vector.load %arg7[%168, %c0_44, %c0_45] : memref<8x8x128xbf16, #tpu.memory_space<vmem>>, vector<1x8x128xbf16>
    %170 = vector.shape_cast %169 : vector<1x8x128xbf16> to vector<8x128xbf16>
    %171 = vector.shape_cast %167 : vector<8x128xbf16> to vector<1x8x128xbf16>
    tpu.vector_store %arg7[%168, %c0_44, %c0_45], %171 {strides = array<i32>} : memref<8x8x128xbf16, #tpu.memory_space<vmem>>, vector<1x8x128xbf16>,
    %c4_i32 = arith.constant 4 : i32
    %172 = arith.index_cast %c4_i32 : i32 to index
    %c0_46 = arith.constant 0 : index
    %c0_47 = arith.constant 0 : index
    %173 = vector.load %arg2[%172, %c0_46, %c0_47] : memref<8x8x16xbf16, #tpu.memory_space<vmem>>, vector<1x8x16xbf16>
    %174 = vector.shape_cast %173 : vector<1x8x16xbf16> to vector<8x16xbf16>
    %cst_48 = arith.constant dense<0.000000e+00> : vector<8x384xf32>
    %175 = tpu.matmul %174, %3, %cst_48 {dimension_numbers = #tpu.dot_dimension_numbers<[1], [0], [0], [1], [0, 0, 1, 1], [], []>} : vector<8x16xbf16>, vector<16x384xbf16>, vector<8x384xf32> -> vector<8x384xf32>
    %176 = vector.broadcast %4 : vector<1x384xf32> to vector<8x384xf32>
    %177 = arith.addf %175, %176 : vector<8x384xf32>
    %178 = arith.truncf %166 : vector<8x128xf32> to vector<8x128xbf16>
    %cst_49 = arith.constant dense<0.000000e+00> : vector<8x384xf32>
    %179 = tpu.matmul %178, %5, %cst_49 {dimension_numbers = #tpu.dot_dimension_numbers<[1], [0], [0], [1], [0, 0, 1, 1], [], []>} : vector<8x128xbf16>, vector<128x384xbf16>, vector<8x384xf32> -> vector<8x384xf32>
    %180 = vector.extract_strided_slice %177 {offsets = [0, 0], sizes = [8, 128], strides = [1, 1]} : vector<8x384xf32> to vector<8x128xf32>
    %181 = vector.extract_strided_slice %179 {offsets = [0, 0], sizes = [8, 128], strides = [1, 1]} : vector<8x384xf32> to vector<8x128xf32>
    %182 = arith.addf %180, %181 : vector<8x128xf32>
    %183 = arith.negf %182 : vector<8x128xf32>
    %184 = math.exp %183 : vector<8x128xf32>
    %cst_50 = arith.constant 1.000000e+00 : f32
    %185 = vector.broadcast %cst_50 : f32 to vector<8x128xf32>
    %186 = arith.addf %185, %184 : vector<8x128xf32>
    %187 = arith.divf %185, %186 : vector<8x128xf32>
    %188 = vector.extract_strided_slice %177 {offsets = [0, 128], sizes = [8, 128], strides = [1, 1]} : vector<8x384xf32> to vector<8x128xf32>
    %189 = vector.extract_strided_slice %179 {offsets = [0, 128], sizes = [8, 128], strides = [1, 1]} : vector<8x384xf32> to vector<8x128xf32>
    %190 = arith.addf %188, %189 : vector<8x128xf32>
    %191 = arith.negf %190 : vector<8x128xf32>
    %192 = math.exp %191 : vector<8x128xf32>
    %cst_51 = arith.constant 1.000000e+00 : f32
    %193 = vector.broadcast %cst_51 : f32 to vector<8x128xf32>
    %194 = arith.addf %193, %192 : vector<8x128xf32>
    %195 = arith.divf %193, %194 : vector<8x128xf32>
    %196 = vector.extract_strided_slice %177 {offsets = [0, 256], sizes = [8, 128], strides = [1, 1]} : vector<8x384xf32> to vector<8x128xf32>
    %197 = vector.extract_strided_slice %179 {offsets = [0, 256], sizes = [8, 128], strides = [1, 1]} : vector<8x384xf32> to vector<8x128xf32>
    %198 = vector.broadcast %6 : vector<1x128xf32> to vector<8x128xf32>
    %199 = arith.addf %197, %198 : vector<8x128xf32>
    %200 = arith.mulf %187, %199 : vector<8x128xf32>
    %201 = arith.addf %196, %200 : vector<8x128xf32>
    %202 = math.tanh %201 : vector<8x128xf32>
    %cst_52 = arith.constant 1.000000e+00 : f32
    %203 = vector.broadcast %cst_52 : f32 to vector<8x128xf32>
    %204 = arith.subf %203, %195 : vector<8x128xf32>
    %205 = arith.mulf %204, %202 : vector<8x128xf32>
    %206 = arith.mulf %195, %166 : vector<8x128xf32>
    %207 = arith.addf %205, %206 : vector<8x128xf32>
    %208 = arith.truncf %207 : vector<8x128xf32> to vector<8x128xbf16>
    %209 = arith.index_cast %c4_i32 : i32 to index
    %c0_53 = arith.constant 0 : index
    %c0_54 = arith.constant 0 : index
    %210 = vector.load %arg7[%209, %c0_53, %c0_54] : memref<8x8x128xbf16, #tpu.memory_space<vmem>>, vector<1x8x128xbf16>
    %211 = vector.shape_cast %210 : vector<1x8x128xbf16> to vector<8x128xbf16>
    %212 = vector.shape_cast %208 : vector<8x128xbf16> to vector<1x8x128xbf16>
    tpu.vector_store %arg7[%209, %c0_53, %c0_54], %212 {strides = array<i32>} : memref<8x8x128xbf16, #tpu.memory_space<vmem>>, vector<1x8x128xbf16>,
    %c5_i32 = arith.constant 5 : i32
    %213 = arith.index_cast %c5_i32 : i32 to index
    %c0_55 = arith.constant 0 : index
    %c0_56 = arith.constant 0 : index
    %214 = vector.load %arg2[%213, %c0_55, %c0_56] : memref<8x8x16xbf16, #tpu.memory_space<vmem>>, vector<1x8x16xbf16>
    %215 = vector.shape_cast %214 : vector<1x8x16xbf16> to vector<8x16xbf16>
    %cst_57 = arith.constant dense<0.000000e+00> : vector<8x384xf32>
    %216 = tpu.matmul %215, %3, %cst_57 {dimension_numbers = #tpu.dot_dimension_numbers<[1], [0], [0], [1], [0, 0, 1, 1], [], []>} : vector<8x16xbf16>, vector<16x384xbf16>, vector<8x384xf32> -> vector<8x384xf32>
    %217 = vector.broadcast %4 : vector<1x384xf32> to vector<8x384xf32>
    %218 = arith.addf %216, %217 : vector<8x384xf32>
    %219 = arith.truncf %207 : vector<8x128xf32> to vector<8x128xbf16>
    %cst_58 = arith.constant dense<0.000000e+00> : vector<8x384xf32>
    %220 = tpu.matmul %219, %5, %cst_58 {dimension_numbers = #tpu.dot_dimension_numbers<[1], [0], [0], [1], [0, 0, 1, 1], [], []>} : vector<8x128xbf16>, vector<128x384xbf16>, vector<8x384xf32> -> vector<8x384xf32>
    %221 = vector.extract_strided_slice %218 {offsets = [0, 0], sizes = [8, 128], strides = [1, 1]} : vector<8x384xf32> to vector<8x128xf32>
    %222 = vector.extract_strided_slice %220 {offsets = [0, 0], sizes = [8, 128], strides = [1, 1]} : vector<8x384xf32> to vector<8x128xf32>
    %223 = arith.addf %221, %222 : vector<8x128xf32>
    %224 = arith.negf %223 : vector<8x128xf32>
    %225 = math.exp %224 : vector<8x128xf32>
    %cst_59 = arith.constant 1.000000e+00 : f32
    %226 = vector.broadcast %cst_59 : f32 to vector<8x128xf32>
    %227 = arith.addf %226, %225 : vector<8x128xf32>
    %228 = arith.divf %226, %227 : vector<8x128xf32>
    %229 = vector.extract_strided_slice %218 {offsets = [0, 128], sizes = [8, 128], strides = [1, 1]} : vector<8x384xf32> to vector<8x128xf32>
    %230 = vector.extract_strided_slice %220 {offsets = [0, 128], sizes = [8, 128], strides = [1, 1]} : vector<8x384xf32> to vector<8x128xf32>
    %231 = arith.addf %229, %230 : vector<8x128xf32>
    %232 = arith.negf %231 : vector<8x128xf32>
    %233 = math.exp %232 : vector<8x128xf32>
    %cst_60 = arith.constant 1.000000e+00 : f32
    %234 = vector.broadcast %cst_60 : f32 to vector<8x128xf32>
    %235 = arith.addf %234, %233 : vector<8x128xf32>
    %236 = arith.divf %234, %235 : vector<8x128xf32>
    %237 = vector.extract_strided_slice %218 {offsets = [0, 256], sizes = [8, 128], strides = [1, 1]} : vector<8x384xf32> to vector<8x128xf32>
    %238 = vector.extract_strided_slice %220 {offsets = [0, 256], sizes = [8, 128], strides = [1, 1]} : vector<8x384xf32> to vector<8x128xf32>
    %239 = vector.broadcast %6 : vector<1x128xf32> to vector<8x128xf32>
    %240 = arith.addf %238, %239 : vector<8x128xf32>
    %241 = arith.mulf %228, %240 : vector<8x128xf32>
    %242 = arith.addf %237, %241 : vector<8x128xf32>
    %243 = math.tanh %242 : vector<8x128xf32>
    %cst_61 = arith.constant 1.000000e+00 : f32
    %244 = vector.broadcast %cst_61 : f32 to vector<8x128xf32>
    %245 = arith.subf %244, %236 : vector<8x128xf32>
    %246 = arith.mulf %245, %243 : vector<8x128xf32>
    %247 = arith.mulf %236, %207 : vector<8x128xf32>
    %248 = arith.addf %246, %247 : vector<8x128xf32>
    %249 = arith.truncf %248 : vector<8x128xf32> to vector<8x128xbf16>
    %250 = arith.index_cast %c5_i32 : i32 to index
    %c0_62 = arith.constant 0 : index
    %c0_63 = arith.constant 0 : index
    %251 = vector.load %arg7[%250, %c0_62, %c0_63] : memref<8x8x128xbf16, #tpu.memory_space<vmem>>, vector<1x8x128xbf16>
    %252 = vector.shape_cast %251 : vector<1x8x128xbf16> to vector<8x128xbf16>
    %253 = vector.shape_cast %249 : vector<8x128xbf16> to vector<1x8x128xbf16>
    tpu.vector_store %arg7[%250, %c0_62, %c0_63], %253 {strides = array<i32>} : memref<8x8x128xbf16, #tpu.memory_space<vmem>>, vector<1x8x128xbf16>,
    %c6_i32 = arith.constant 6 : i32
    %254 = arith.index_cast %c6_i32 : i32 to index
    %c0_64 = arith.constant 0 : index
    %c0_65 = arith.constant 0 : index
    %255 = vector.load %arg2[%254, %c0_64, %c0_65] : memref<8x8x16xbf16, #tpu.memory_space<vmem>>, vector<1x8x16xbf16>
    %256 = vector.shape_cast %255 : vector<1x8x16xbf16> to vector<8x16xbf16>
    %cst_66 = arith.constant dense<0.000000e+00> : vector<8x384xf32>
    %257 = tpu.matmul %256, %3, %cst_66 {dimension_numbers = #tpu.dot_dimension_numbers<[1], [0], [0], [1], [0, 0, 1, 1], [], []>} : vector<8x16xbf16>, vector<16x384xbf16>, vector<8x384xf32> -> vector<8x384xf32>
    %258 = vector.broadcast %4 : vector<1x384xf32> to vector<8x384xf32>
    %259 = arith.addf %257, %258 : vector<8x384xf32>
    %260 = arith.truncf %248 : vector<8x128xf32> to vector<8x128xbf16>
    %cst_67 = arith.constant dense<0.000000e+00> : vector<8x384xf32>
    %261 = tpu.matmul %260, %5, %cst_67 {dimension_numbers = #tpu.dot_dimension_numbers<[1], [0], [0], [1], [0, 0, 1, 1], [], []>} : vector<8x128xbf16>, vector<128x384xbf16>, vector<8x384xf32> -> vector<8x384xf32>
    %262 = vector.extract_strided_slice %259 {offsets = [0, 0], sizes = [8, 128], strides = [1, 1]} : vector<8x384xf32> to vector<8x128xf32>
    %263 = vector.extract_strided_slice %261 {offsets = [0, 0], sizes = [8, 128], strides = [1, 1]} : vector<8x384xf32> to vector<8x128xf32>
    %264 = arith.addf %262, %263 : vector<8x128xf32>
    %265 = arith.negf %264 : vector<8x128xf32>
    %266 = math.exp %265 : vector<8x128xf32>
    %cst_68 = arith.constant 1.000000e+00 : f32
    %267 = vector.broadcast %cst_68 : f32 to vector<8x128xf32>
    %268 = arith.addf %267, %266 : vector<8x128xf32>
    %269 = arith.divf %267, %268 : vector<8x128xf32>
    %270 = vector.extract_strided_slice %259 {offsets = [0, 128], sizes = [8, 128], strides = [1, 1]} : vector<8x384xf32> to vector<8x128xf32>
    %271 = vector.extract_strided_slice %261 {offsets = [0, 128], sizes = [8, 128], strides = [1, 1]} : vector<8x384xf32> to vector<8x128xf32>
    %272 = arith.addf %270, %271 : vector<8x128xf32>
    %273 = arith.negf %272 : vector<8x128xf32>
    %274 = math.exp %273 : vector<8x128xf32>
    %cst_69 = arith.constant 1.000000e+00 : f32
    %275 = vector.broadcast %cst_69 : f32 to vector<8x128xf32>
    %276 = arith.addf %275, %274 : vector<8x128xf32>
    %277 = arith.divf %275, %276 : vector<8x128xf32>
    %278 = vector.extract_strided_slice %259 {offsets = [0, 256], sizes = [8, 128], strides = [1, 1]} : vector<8x384xf32> to vector<8x128xf32>
    %279 = vector.extract_strided_slice %261 {offsets = [0, 256], sizes = [8, 128], strides = [1, 1]} : vector<8x384xf32> to vector<8x128xf32>
    %280 = vector.broadcast %6 : vector<1x128xf32> to vector<8x128xf32>
    %281 = arith.addf %279, %280 : vector<8x128xf32>
    %282 = arith.mulf %269, %281 : vector<8x128xf32>
    %283 = arith.addf %278, %282 : vector<8x128xf32>
    %284 = math.tanh %283 : vector<8x128xf32>
    %cst_70 = arith.constant 1.000000e+00 : f32
    %285 = vector.broadcast %cst_70 : f32 to vector<8x128xf32>
    %286 = arith.subf %285, %277 : vector<8x128xf32>
    %287 = arith.mulf %286, %284 : vector<8x128xf32>
    %288 = arith.mulf %277, %248 : vector<8x128xf32>
    %289 = arith.addf %287, %288 : vector<8x128xf32>
    %290 = arith.truncf %289 : vector<8x128xf32> to vector<8x128xbf16>
    %291 = arith.index_cast %c6_i32 : i32 to index
    %c0_71 = arith.constant 0 : index
    %c0_72 = arith.constant 0 : index
    %292 = vector.load %arg7[%291, %c0_71, %c0_72] : memref<8x8x128xbf16, #tpu.memory_space<vmem>>, vector<1x8x128xbf16>
    %293 = vector.shape_cast %292 : vector<1x8x128xbf16> to vector<8x128xbf16>
    %294 = vector.shape_cast %290 : vector<8x128xbf16> to vector<1x8x128xbf16>
    tpu.vector_store %arg7[%291, %c0_71, %c0_72], %294 {strides = array<i32>} : memref<8x8x128xbf16, #tpu.memory_space<vmem>>, vector<1x8x128xbf16>,
    %c7_i32 = arith.constant 7 : i32
    %295 = arith.index_cast %c7_i32 : i32 to index
    %c0_73 = arith.constant 0 : index
    %c0_74 = arith.constant 0 : index
    %296 = vector.load %arg2[%295, %c0_73, %c0_74] : memref<8x8x16xbf16, #tpu.memory_space<vmem>>, vector<1x8x16xbf16>
    %297 = vector.shape_cast %296 : vector<1x8x16xbf16> to vector<8x16xbf16>
    %cst_75 = arith.constant dense<0.000000e+00> : vector<8x384xf32>
    %298 = tpu.matmul %297, %3, %cst_75 {dimension_numbers = #tpu.dot_dimension_numbers<[1], [0], [0], [1], [0, 0, 1, 1], [], []>} : vector<8x16xbf16>, vector<16x384xbf16>, vector<8x384xf32> -> vector<8x384xf32>
    %299 = vector.broadcast %4 : vector<1x384xf32> to vector<8x384xf32>
    %300 = arith.addf %298, %299 : vector<8x384xf32>
    %301 = arith.truncf %289 : vector<8x128xf32> to vector<8x128xbf16>
    %cst_76 = arith.constant dense<0.000000e+00> : vector<8x384xf32>
    %302 = tpu.matmul %301, %5, %cst_76 {dimension_numbers = #tpu.dot_dimension_numbers<[1], [0], [0], [1], [0, 0, 1, 1], [], []>} : vector<8x128xbf16>, vector<128x384xbf16>, vector<8x384xf32> -> vector<8x384xf32>
    %303 = vector.extract_strided_slice %300 {offsets = [0, 0], sizes = [8, 128], strides = [1, 1]} : vector<8x384xf32> to vector<8x128xf32>
    %304 = vector.extract_strided_slice %302 {offsets = [0, 0], sizes = [8, 128], strides = [1, 1]} : vector<8x384xf32> to vector<8x128xf32>
    %305 = arith.addf %303, %304 : vector<8x128xf32>
    %306 = arith.negf %305 : vector<8x128xf32>
    %307 = math.exp %306 : vector<8x128xf32>
    %cst_77 = arith.constant 1.000000e+00 : f32
    %308 = vector.broadcast %cst_77 : f32 to vector<8x128xf32>
    %309 = arith.addf %308, %307 : vector<8x128xf32>
    %310 = arith.divf %308, %309 : vector<8x128xf32>
    %311 = vector.extract_strided_slice %300 {offsets = [0, 128], sizes = [8, 128], strides = [1, 1]} : vector<8x384xf32> to vector<8x128xf32>
    %312 = vector.extract_strided_slice %302 {offsets = [0, 128], sizes = [8, 128], strides = [1, 1]} : vector<8x384xf32> to vector<8x128xf32>
    %313 = arith.addf %311, %312 : vector<8x128xf32>
    %314 = arith.negf %313 : vector<8x128xf32>
    %315 = math.exp %314 : vector<8x128xf32>
    %cst_78 = arith.constant 1.000000e+00 : f32
    %316 = vector.broadcast %cst_78 : f32 to vector<8x128xf32>
    %317 = arith.addf %316, %315 : vector<8x128xf32>
    %318 = arith.divf %316, %317 : vector<8x128xf32>
    %319 = vector.extract_strided_slice %300 {offsets = [0, 256], sizes = [8, 128], strides = [1, 1]} : vector<8x384xf32> to vector<8x128xf32>
    %320 = vector.extract_strided_slice %302 {offsets = [0, 256], sizes = [8, 128], strides = [1, 1]} : vector<8x384xf32> to vector<8x128xf32>
    %321 = vector.broadcast %6 : vector<1x128xf32> to vector<8x128xf32>
    %322 = arith.addf %320, %321 : vector<8x128xf32>
    %323 = arith.mulf %310, %322 : vector<8x128xf32>
    %324 = arith.addf %319, %323 : vector<8x128xf32>
    %325 = math.tanh %324 : vector<8x128xf32>
    %cst_79 = arith.constant 1.000000e+00 : f32
    %326 = vector.broadcast %cst_79 : f32 to vector<8x128xf32>
    %327 = arith.subf %326, %318 : vector<8x128xf32>
    %328 = arith.mulf %327, %325 : vector<8x128xf32>
    %329 = arith.mulf %318, %289 : vector<8x128xf32>
    %330 = arith.addf %328, %329 : vector<8x128xf32>
    %331 = arith.truncf %330 : vector<8x128xf32> to vector<8x128xbf16>
    %332 = arith.index_cast %c7_i32 : i32 to index
    %c0_80 = arith.constant 0 : index
    %c0_81 = arith.constant 0 : index
    %333 = vector.load %arg7[%332, %c0_80, %c0_81] : memref<8x8x128xbf16, #tpu.memory_space<vmem>>, vector<1x8x128xbf16>
    %334 = vector.shape_cast %333 : vector<1x8x128xbf16> to vector<8x128xbf16>
    %335 = vector.shape_cast %331 : vector<8x128xbf16> to vector<1x8x128xbf16>
    tpu.vector_store %arg7[%332, %c0_80, %c0_81], %335 {strides = array<i32>} : memref<8x8x128xbf16, #tpu.memory_space<vmem>>, vector<1x8x128xbf16>,
    %c8_i32 = arith.constant 8 : i32
    %c0_82 = arith.constant 0 : index
    %c0_83 = arith.constant 0 : index
    %336 = vector.load %arg8[%c0_82, %c0_83] : memref<8x128xf32, #tpu.memory_space<vmem>>, vector<8x128xf32>
    tpu.vector_store %arg8[%c0_82, %c0_83], %330 {strides = array<i32>} : memref<8x128xf32, #tpu.memory_space<vmem>>, vector<8x128xf32>,
    return
  }
  func.func @transform_0(%arg0: i32, %arg1: i32) -> (i32, i32, i32) {
    %c0_i32 = arith.constant 0 : i32
    %c0_i32_0 = arith.constant 0 : i32
    return %arg1, %arg0, %c0_i32 : i32, i32, i32
  }
  func.func @transform_1(%arg0: i32, %arg1: i32) -> (i32, i32) {
    %c0_i32 = arith.constant 0 : i32
    %c0_i32_0 = arith.constant 0 : i32
    %c0_i32_1 = arith.constant 0 : i32
    return %c0_i32, %c0_i32_0 : i32, i32
  }
  func.func @transform_2(%arg0: i32, %arg1: i32) -> (i32, i32) {
    %c0_i32 = arith.constant 0 : i32
    %c0_i32_0 = arith.constant 0 : i32
    %c0_i32_1 = arith.constant 0 : i32
    return %c0_i32, %c0_i32_0 : i32, i32
  }
  func.func @transform_3(%arg0: i32, %arg1: i32) -> (i32, i32) {
    %c0_i32 = arith.constant 0 : i32
    %c0_i32_0 = arith.constant 0 : i32
    %c0_i32_1 = arith.constant 0 : i32
    return %c0_i32, %c0_i32_0 : i32, i32
  }
  func.func @transform_4(%arg0: i32, %arg1: i32) -> (i32, i32) {
    %c0_i32 = arith.constant 0 : i32
    %c0_i32_0 = arith.constant 0 : i32
    %c0_i32_1 = arith.constant 0 : i32
    return %c0_i32, %c0_i32_0 : i32, i32
  }
  func.func @transform_5(%arg0: i32, %arg1: i32) -> (i32, i32, i32) {
    %c0_i32 = arith.constant 0 : i32
    %c0_i32_0 = arith.constant 0 : i32
    return %arg1, %arg0, %c0_i32 : i32, i32, i32
  }
}

module attributes {stable_mosaic.version = 11 : i64} {
  func.func @kernel(%arg0: i32, %arg1: i32, %arg2: memref<8x8x128xbf16, #tpu.memory_space<vmem>>, %arg3: memref<128x384xbf16, #tpu.memory_space<vmem>>, %arg4: memref<1x384xf32, #tpu.memory_space<vmem>>, %arg5: memref<128x384xbf16, #tpu.memory_space<vmem>>, %arg6: memref<1x128xf32, #tpu.memory_space<vmem>>, %arg7: memref<128x2xbf16, #tpu.memory_space<vmem>>, %arg8: memref<1x2xf32, #tpu.memory_space<vmem>>, %arg9: memref<8x2xf32, #tpu.memory_space<vmem>>, %arg10: memref<8x128xf32, #tpu.memory_space<vmem>>) attributes {dimension_semantics = [#tpu.dimension_semantics<parallel>, #tpu.dimension_semantics<arbitrary>], iteration_bounds = array<i64: 1, 1>, scalar_prefetch = 0 : i64, scratch_operands = 1 : i64, tpu.core_type = #tpu.core_type<tc>, window_params = [{transform_indices = @transform_0, window_bounds = array<i64: 8, 8, 128>}, {pipeline_mode = #tpu.pipeline_mode<synchronous>, transform_indices = @transform_1, window_bounds = array<i64: 128, 384>}, {pipeline_mode = #tpu.pipeline_mode<synchronous>, transform_indices = @transform_2, window_bounds = array<i64: 1, 384>}, {pipeline_mode = #tpu.pipeline_mode<synchronous>, transform_indices = @transform_3, window_bounds = array<i64: 128, 384>}, {pipeline_mode = #tpu.pipeline_mode<synchronous>, transform_indices = @transform_4, window_bounds = array<i64: 1, 128>}, {pipeline_mode = #tpu.pipeline_mode<synchronous>, transform_indices = @transform_5, window_bounds = array<i64: 128, 2>}, {pipeline_mode = #tpu.pipeline_mode<synchronous>, transform_indices = @transform_6, window_bounds = array<i64: 1, 2>}, {transform_indices = @transform_7, window_bounds = array<i64: 8, 2>}]} {
    %c0_i32 = arith.constant 0 : i32
    %0 = arith.cmpi eq, %arg1, %c0_i32 : i32
    %1 = arith.extui %0 : i1 to i32
    %c0_i32_0 = arith.constant 0 : i32
    %2 = arith.cmpi ne, %1, %c0_i32_0 : i32
    scf.if %2 {
      %cst_70 = arith.constant 0.000000e+00 : f32
      %300 = vector.broadcast %cst_70 : f32 to vector<8x128xf32>
      %c0_71 = arith.constant 0 : index
      %c0_72 = arith.constant 0 : index
      %301 = vector.load %arg10[%c0_71, %c0_72] : memref<8x128xf32, #tpu.memory_space<vmem>>, vector<8x128xf32>
      tpu.vector_store %arg10[%c0_71, %c0_72], %300 {strides = array<i32>} : memref<8x128xf32, #tpu.memory_space<vmem>>, vector<8x128xf32>,
    } else {
    }
    %c0 = arith.constant 0 : index
    %c0_1 = arith.constant 0 : index
    %3 = vector.load %arg3[%c0, %c0_1] : memref<128x384xbf16, #tpu.memory_space<vmem>>, vector<128x384xbf16>
    %c0_2 = arith.constant 0 : index
    %c0_3 = arith.constant 0 : index
    %4 = vector.load %arg4[%c0_2, %c0_3] : memref<1x384xf32, #tpu.memory_space<vmem>>, vector<1x384xf32>
    %c0_4 = arith.constant 0 : index
    %c0_5 = arith.constant 0 : index
    %5 = vector.load %arg5[%c0_4, %c0_5] : memref<128x384xbf16, #tpu.memory_space<vmem>>, vector<128x384xbf16>
    %c0_6 = arith.constant 0 : index
    %c0_7 = arith.constant 0 : index
    %6 = vector.load %arg6[%c0_6, %c0_7] : memref<1x128xf32, #tpu.memory_space<vmem>>, vector<1x128xf32>
    %c0_8 = arith.constant 0 : index
    %c0_9 = arith.constant 0 : index
    %7 = vector.load %arg10[%c0_8, %c0_9] : memref<8x128xf32, #tpu.memory_space<vmem>>, vector<8x128xf32>
    %c0_i32_10 = arith.constant 0 : i32
    %8 = arith.index_cast %c0_i32_10 : i32 to index
    %c0_11 = arith.constant 0 : index
    %c0_12 = arith.constant 0 : index
    %9 = vector.load %arg2[%8, %c0_11, %c0_12] : memref<8x8x128xbf16, #tpu.memory_space<vmem>>, vector<1x8x128xbf16>
    %10 = vector.shape_cast %9 : vector<1x8x128xbf16> to vector<8x128xbf16>
    %cst = arith.constant dense<0.000000e+00> : vector<8x384xf32>
    %11 = tpu.matmul %10, %3, %cst {dimension_numbers = #tpu.dot_dimension_numbers<[1], [0], [0], [1], [0, 0, 1, 1], [], []>} : vector<8x128xbf16>, vector<128x384xbf16>, vector<8x384xf32> -> vector<8x384xf32>
    %12 = vector.broadcast %4 : vector<1x384xf32> to vector<8x384xf32>
    %13 = arith.addf %11, %12 : vector<8x384xf32>
    %14 = arith.truncf %7 : vector<8x128xf32> to vector<8x128xbf16>
    %cst_13 = arith.constant dense<0.000000e+00> : vector<8x384xf32>
    %15 = tpu.matmul %14, %5, %cst_13 {dimension_numbers = #tpu.dot_dimension_numbers<[1], [0], [0], [1], [0, 0, 1, 1], [], []>} : vector<8x128xbf16>, vector<128x384xbf16>, vector<8x384xf32> -> vector<8x384xf32>
    %16 = vector.extract_strided_slice %13 {offsets = [0, 0], sizes = [8, 128], strides = [1, 1]} : vector<8x384xf32> to vector<8x128xf32>
    %17 = vector.extract_strided_slice %15 {offsets = [0, 0], sizes = [8, 128], strides = [1, 1]} : vector<8x384xf32> to vector<8x128xf32>
    %18 = arith.addf %16, %17 : vector<8x128xf32>
    %19 = arith.negf %18 : vector<8x128xf32>
    %20 = math.exp %19 : vector<8x128xf32>
    %cst_14 = arith.constant 1.000000e+00 : f32
    %21 = vector.broadcast %cst_14 : f32 to vector<8x128xf32>
    %22 = arith.addf %21, %20 : vector<8x128xf32>
    %23 = arith.divf %21, %22 : vector<8x128xf32>
    %24 = vector.extract_strided_slice %13 {offsets = [0, 128], sizes = [8, 128], strides = [1, 1]} : vector<8x384xf32> to vector<8x128xf32>
    %25 = vector.extract_strided_slice %15 {offsets = [0, 128], sizes = [8, 128], strides = [1, 1]} : vector<8x384xf32> to vector<8x128xf32>
    %26 = arith.addf %24, %25 : vector<8x128xf32>
    %27 = arith.negf %26 : vector<8x128xf32>
    %28 = math.exp %27 : vector<8x128xf32>
    %cst_15 = arith.constant 1.000000e+00 : f32
    %29 = vector.broadcast %cst_15 : f32 to vector<8x128xf32>
    %30 = arith.addf %29, %28 : vector<8x128xf32>
    %31 = arith.divf %29, %30 : vector<8x128xf32>
    %32 = vector.extract_strided_slice %13 {offsets = [0, 256], sizes = [8, 128], strides = [1, 1]} : vector<8x384xf32> to vector<8x128xf32>
    %33 = vector.extract_strided_slice %15 {offsets = [0, 256], sizes = [8, 128], strides = [1, 1]} : vector<8x384xf32> to vector<8x128xf32>
    %34 = vector.broadcast %6 : vector<1x128xf32> to vector<8x128xf32>
    %35 = arith.addf %33, %34 : vector<8x128xf32>
    %36 = arith.mulf %23, %35 : vector<8x128xf32>
    %37 = arith.addf %32, %36 : vector<8x128xf32>
    %38 = math.tanh %37 : vector<8x128xf32>
    %cst_16 = arith.constant 1.000000e+00 : f32
    %39 = vector.broadcast %cst_16 : f32 to vector<8x128xf32>
    %40 = arith.subf %39, %31 : vector<8x128xf32>
    %41 = arith.mulf %40, %38 : vector<8x128xf32>
    %42 = arith.mulf %31, %7 : vector<8x128xf32>
    %43 = arith.addf %41, %42 : vector<8x128xf32>
    %c1_i32 = arith.constant 1 : i32
    %44 = arith.index_cast %c1_i32 : i32 to index
    %c0_17 = arith.constant 0 : index
    %c0_18 = arith.constant 0 : index
    %45 = vector.load %arg2[%44, %c0_17, %c0_18] : memref<8x8x128xbf16, #tpu.memory_space<vmem>>, vector<1x8x128xbf16>
    %46 = vector.shape_cast %45 : vector<1x8x128xbf16> to vector<8x128xbf16>
    %cst_19 = arith.constant dense<0.000000e+00> : vector<8x384xf32>
    %47 = tpu.matmul %46, %3, %cst_19 {dimension_numbers = #tpu.dot_dimension_numbers<[1], [0], [0], [1], [0, 0, 1, 1], [], []>} : vector<8x128xbf16>, vector<128x384xbf16>, vector<8x384xf32> -> vector<8x384xf32>
    %48 = vector.broadcast %4 : vector<1x384xf32> to vector<8x384xf32>
    %49 = arith.addf %47, %48 : vector<8x384xf32>
    %50 = arith.truncf %43 : vector<8x128xf32> to vector<8x128xbf16>
    %cst_20 = arith.constant dense<0.000000e+00> : vector<8x384xf32>
    %51 = tpu.matmul %50, %5, %cst_20 {dimension_numbers = #tpu.dot_dimension_numbers<[1], [0], [0], [1], [0, 0, 1, 1], [], []>} : vector<8x128xbf16>, vector<128x384xbf16>, vector<8x384xf32> -> vector<8x384xf32>
    %52 = vector.extract_strided_slice %49 {offsets = [0, 0], sizes = [8, 128], strides = [1, 1]} : vector<8x384xf32> to vector<8x128xf32>
    %53 = vector.extract_strided_slice %51 {offsets = [0, 0], sizes = [8, 128], strides = [1, 1]} : vector<8x384xf32> to vector<8x128xf32>
    %54 = arith.addf %52, %53 : vector<8x128xf32>
    %55 = arith.negf %54 : vector<8x128xf32>
    %56 = math.exp %55 : vector<8x128xf32>
    %cst_21 = arith.constant 1.000000e+00 : f32
    %57 = vector.broadcast %cst_21 : f32 to vector<8x128xf32>
    %58 = arith.addf %57, %56 : vector<8x128xf32>
    %59 = arith.divf %57, %58 : vector<8x128xf32>
    %60 = vector.extract_strided_slice %49 {offsets = [0, 128], sizes = [8, 128], strides = [1, 1]} : vector<8x384xf32> to vector<8x128xf32>
    %61 = vector.extract_strided_slice %51 {offsets = [0, 128], sizes = [8, 128], strides = [1, 1]} : vector<8x384xf32> to vector<8x128xf32>
    %62 = arith.addf %60, %61 : vector<8x128xf32>
    %63 = arith.negf %62 : vector<8x128xf32>
    %64 = math.exp %63 : vector<8x128xf32>
    %cst_22 = arith.constant 1.000000e+00 : f32
    %65 = vector.broadcast %cst_22 : f32 to vector<8x128xf32>
    %66 = arith.addf %65, %64 : vector<8x128xf32>
    %67 = arith.divf %65, %66 : vector<8x128xf32>
    %68 = vector.extract_strided_slice %49 {offsets = [0, 256], sizes = [8, 128], strides = [1, 1]} : vector<8x384xf32> to vector<8x128xf32>
    %69 = vector.extract_strided_slice %51 {offsets = [0, 256], sizes = [8, 128], strides = [1, 1]} : vector<8x384xf32> to vector<8x128xf32>
    %70 = vector.broadcast %6 : vector<1x128xf32> to vector<8x128xf32>
    %71 = arith.addf %69, %70 : vector<8x128xf32>
    %72 = arith.mulf %59, %71 : vector<8x128xf32>
    %73 = arith.addf %68, %72 : vector<8x128xf32>
    %74 = math.tanh %73 : vector<8x128xf32>
    %cst_23 = arith.constant 1.000000e+00 : f32
    %75 = vector.broadcast %cst_23 : f32 to vector<8x128xf32>
    %76 = arith.subf %75, %67 : vector<8x128xf32>
    %77 = arith.mulf %76, %74 : vector<8x128xf32>
    %78 = arith.mulf %67, %43 : vector<8x128xf32>
    %79 = arith.addf %77, %78 : vector<8x128xf32>
    %c2_i32 = arith.constant 2 : i32
    %80 = arith.index_cast %c2_i32 : i32 to index
    %c0_24 = arith.constant 0 : index
    %c0_25 = arith.constant 0 : index
    %81 = vector.load %arg2[%80, %c0_24, %c0_25] : memref<8x8x128xbf16, #tpu.memory_space<vmem>>, vector<1x8x128xbf16>
    %82 = vector.shape_cast %81 : vector<1x8x128xbf16> to vector<8x128xbf16>
    %cst_26 = arith.constant dense<0.000000e+00> : vector<8x384xf32>
    %83 = tpu.matmul %82, %3, %cst_26 {dimension_numbers = #tpu.dot_dimension_numbers<[1], [0], [0], [1], [0, 0, 1, 1], [], []>} : vector<8x128xbf16>, vector<128x384xbf16>, vector<8x384xf32> -> vector<8x384xf32>
    %84 = vector.broadcast %4 : vector<1x384xf32> to vector<8x384xf32>
    %85 = arith.addf %83, %84 : vector<8x384xf32>
    %86 = arith.truncf %79 : vector<8x128xf32> to vector<8x128xbf16>
    %cst_27 = arith.constant dense<0.000000e+00> : vector<8x384xf32>
    %87 = tpu.matmul %86, %5, %cst_27 {dimension_numbers = #tpu.dot_dimension_numbers<[1], [0], [0], [1], [0, 0, 1, 1], [], []>} : vector<8x128xbf16>, vector<128x384xbf16>, vector<8x384xf32> -> vector<8x384xf32>
    %88 = vector.extract_strided_slice %85 {offsets = [0, 0], sizes = [8, 128], strides = [1, 1]} : vector<8x384xf32> to vector<8x128xf32>
    %89 = vector.extract_strided_slice %87 {offsets = [0, 0], sizes = [8, 128], strides = [1, 1]} : vector<8x384xf32> to vector<8x128xf32>
    %90 = arith.addf %88, %89 : vector<8x128xf32>
    %91 = arith.negf %90 : vector<8x128xf32>
    %92 = math.exp %91 : vector<8x128xf32>
    %cst_28 = arith.constant 1.000000e+00 : f32
    %93 = vector.broadcast %cst_28 : f32 to vector<8x128xf32>
    %94 = arith.addf %93, %92 : vector<8x128xf32>
    %95 = arith.divf %93, %94 : vector<8x128xf32>
    %96 = vector.extract_strided_slice %85 {offsets = [0, 128], sizes = [8, 128], strides = [1, 1]} : vector<8x384xf32> to vector<8x128xf32>
    %97 = vector.extract_strided_slice %87 {offsets = [0, 128], sizes = [8, 128], strides = [1, 1]} : vector<8x384xf32> to vector<8x128xf32>
    %98 = arith.addf %96, %97 : vector<8x128xf32>
    %99 = arith.negf %98 : vector<8x128xf32>
    %100 = math.exp %99 : vector<8x128xf32>
    %cst_29 = arith.constant 1.000000e+00 : f32
    %101 = vector.broadcast %cst_29 : f32 to vector<8x128xf32>
    %102 = arith.addf %101, %100 : vector<8x128xf32>
    %103 = arith.divf %101, %102 : vector<8x128xf32>
    %104 = vector.extract_strided_slice %85 {offsets = [0, 256], sizes = [8, 128], strides = [1, 1]} : vector<8x384xf32> to vector<8x128xf32>
    %105 = vector.extract_strided_slice %87 {offsets = [0, 256], sizes = [8, 128], strides = [1, 1]} : vector<8x384xf32> to vector<8x128xf32>
    %106 = vector.broadcast %6 : vector<1x128xf32> to vector<8x128xf32>
    %107 = arith.addf %105, %106 : vector<8x128xf32>
    %108 = arith.mulf %95, %107 : vector<8x128xf32>
    %109 = arith.addf %104, %108 : vector<8x128xf32>
    %110 = math.tanh %109 : vector<8x128xf32>
    %cst_30 = arith.constant 1.000000e+00 : f32
    %111 = vector.broadcast %cst_30 : f32 to vector<8x128xf32>
    %112 = arith.subf %111, %103 : vector<8x128xf32>
    %113 = arith.mulf %112, %110 : vector<8x128xf32>
    %114 = arith.mulf %103, %79 : vector<8x128xf32>
    %115 = arith.addf %113, %114 : vector<8x128xf32>
    %c3_i32 = arith.constant 3 : i32
    %116 = arith.index_cast %c3_i32 : i32 to index
    %c0_31 = arith.constant 0 : index
    %c0_32 = arith.constant 0 : index
    %117 = vector.load %arg2[%116, %c0_31, %c0_32] : memref<8x8x128xbf16, #tpu.memory_space<vmem>>, vector<1x8x128xbf16>
    %118 = vector.shape_cast %117 : vector<1x8x128xbf16> to vector<8x128xbf16>
    %cst_33 = arith.constant dense<0.000000e+00> : vector<8x384xf32>
    %119 = tpu.matmul %118, %3, %cst_33 {dimension_numbers = #tpu.dot_dimension_numbers<[1], [0], [0], [1], [0, 0, 1, 1], [], []>} : vector<8x128xbf16>, vector<128x384xbf16>, vector<8x384xf32> -> vector<8x384xf32>
    %120 = vector.broadcast %4 : vector<1x384xf32> to vector<8x384xf32>
    %121 = arith.addf %119, %120 : vector<8x384xf32>
    %122 = arith.truncf %115 : vector<8x128xf32> to vector<8x128xbf16>
    %cst_34 = arith.constant dense<0.000000e+00> : vector<8x384xf32>
    %123 = tpu.matmul %122, %5, %cst_34 {dimension_numbers = #tpu.dot_dimension_numbers<[1], [0], [0], [1], [0, 0, 1, 1], [], []>} : vector<8x128xbf16>, vector<128x384xbf16>, vector<8x384xf32> -> vector<8x384xf32>
    %124 = vector.extract_strided_slice %121 {offsets = [0, 0], sizes = [8, 128], strides = [1, 1]} : vector<8x384xf32> to vector<8x128xf32>
    %125 = vector.extract_strided_slice %123 {offsets = [0, 0], sizes = [8, 128], strides = [1, 1]} : vector<8x384xf32> to vector<8x128xf32>
    %126 = arith.addf %124, %125 : vector<8x128xf32>
    %127 = arith.negf %126 : vector<8x128xf32>
    %128 = math.exp %127 : vector<8x128xf32>
    %cst_35 = arith.constant 1.000000e+00 : f32
    %129 = vector.broadcast %cst_35 : f32 to vector<8x128xf32>
    %130 = arith.addf %129, %128 : vector<8x128xf32>
    %131 = arith.divf %129, %130 : vector<8x128xf32>
    %132 = vector.extract_strided_slice %121 {offsets = [0, 128], sizes = [8, 128], strides = [1, 1]} : vector<8x384xf32> to vector<8x128xf32>
    %133 = vector.extract_strided_slice %123 {offsets = [0, 128], sizes = [8, 128], strides = [1, 1]} : vector<8x384xf32> to vector<8x128xf32>
    %134 = arith.addf %132, %133 : vector<8x128xf32>
    %135 = arith.negf %134 : vector<8x128xf32>
    %136 = math.exp %135 : vector<8x128xf32>
    %cst_36 = arith.constant 1.000000e+00 : f32
    %137 = vector.broadcast %cst_36 : f32 to vector<8x128xf32>
    %138 = arith.addf %137, %136 : vector<8x128xf32>
    %139 = arith.divf %137, %138 : vector<8x128xf32>
    %140 = vector.extract_strided_slice %121 {offsets = [0, 256], sizes = [8, 128], strides = [1, 1]} : vector<8x384xf32> to vector<8x128xf32>
    %141 = vector.extract_strided_slice %123 {offsets = [0, 256], sizes = [8, 128], strides = [1, 1]} : vector<8x384xf32> to vector<8x128xf32>
    %142 = vector.broadcast %6 : vector<1x128xf32> to vector<8x128xf32>
    %143 = arith.addf %141, %142 : vector<8x128xf32>
    %144 = arith.mulf %131, %143 : vector<8x128xf32>
    %145 = arith.addf %140, %144 : vector<8x128xf32>
    %146 = math.tanh %145 : vector<8x128xf32>
    %cst_37 = arith.constant 1.000000e+00 : f32
    %147 = vector.broadcast %cst_37 : f32 to vector<8x128xf32>
    %148 = arith.subf %147, %139 : vector<8x128xf32>
    %149 = arith.mulf %148, %146 : vector<8x128xf32>
    %150 = arith.mulf %139, %115 : vector<8x128xf32>
    %151 = arith.addf %149, %150 : vector<8x128xf32>
    %c4_i32 = arith.constant 4 : i32
    %152 = arith.index_cast %c4_i32 : i32 to index
    %c0_38 = arith.constant 0 : index
    %c0_39 = arith.constant 0 : index
    %153 = vector.load %arg2[%152, %c0_38, %c0_39] : memref<8x8x128xbf16, #tpu.memory_space<vmem>>, vector<1x8x128xbf16>
    %154 = vector.shape_cast %153 : vector<1x8x128xbf16> to vector<8x128xbf16>
    %cst_40 = arith.constant dense<0.000000e+00> : vector<8x384xf32>
    %155 = tpu.matmul %154, %3, %cst_40 {dimension_numbers = #tpu.dot_dimension_numbers<[1], [0], [0], [1], [0, 0, 1, 1], [], []>} : vector<8x128xbf16>, vector<128x384xbf16>, vector<8x384xf32> -> vector<8x384xf32>
    %156 = vector.broadcast %4 : vector<1x384xf32> to vector<8x384xf32>
    %157 = arith.addf %155, %156 : vector<8x384xf32>
    %158 = arith.truncf %151 : vector<8x128xf32> to vector<8x128xbf16>
    %cst_41 = arith.constant dense<0.000000e+00> : vector<8x384xf32>
    %159 = tpu.matmul %158, %5, %cst_41 {dimension_numbers = #tpu.dot_dimension_numbers<[1], [0], [0], [1], [0, 0, 1, 1], [], []>} : vector<8x128xbf16>, vector<128x384xbf16>, vector<8x384xf32> -> vector<8x384xf32>
    %160 = vector.extract_strided_slice %157 {offsets = [0, 0], sizes = [8, 128], strides = [1, 1]} : vector<8x384xf32> to vector<8x128xf32>
    %161 = vector.extract_strided_slice %159 {offsets = [0, 0], sizes = [8, 128], strides = [1, 1]} : vector<8x384xf32> to vector<8x128xf32>
    %162 = arith.addf %160, %161 : vector<8x128xf32>
    %163 = arith.negf %162 : vector<8x128xf32>
    %164 = math.exp %163 : vector<8x128xf32>
    %cst_42 = arith.constant 1.000000e+00 : f32
    %165 = vector.broadcast %cst_42 : f32 to vector<8x128xf32>
    %166 = arith.addf %165, %164 : vector<8x128xf32>
    %167 = arith.divf %165, %166 : vector<8x128xf32>
    %168 = vector.extract_strided_slice %157 {offsets = [0, 128], sizes = [8, 128], strides = [1, 1]} : vector<8x384xf32> to vector<8x128xf32>
    %169 = vector.extract_strided_slice %159 {offsets = [0, 128], sizes = [8, 128], strides = [1, 1]} : vector<8x384xf32> to vector<8x128xf32>
    %170 = arith.addf %168, %169 : vector<8x128xf32>
    %171 = arith.negf %170 : vector<8x128xf32>
    %172 = math.exp %171 : vector<8x128xf32>
    %cst_43 = arith.constant 1.000000e+00 : f32
    %173 = vector.broadcast %cst_43 : f32 to vector<8x128xf32>
    %174 = arith.addf %173, %172 : vector<8x128xf32>
    %175 = arith.divf %173, %174 : vector<8x128xf32>
    %176 = vector.extract_strided_slice %157 {offsets = [0, 256], sizes = [8, 128], strides = [1, 1]} : vector<8x384xf32> to vector<8x128xf32>
    %177 = vector.extract_strided_slice %159 {offsets = [0, 256], sizes = [8, 128], strides = [1, 1]} : vector<8x384xf32> to vector<8x128xf32>
    %178 = vector.broadcast %6 : vector<1x128xf32> to vector<8x128xf32>
    %179 = arith.addf %177, %178 : vector<8x128xf32>
    %180 = arith.mulf %167, %179 : vector<8x128xf32>
    %181 = arith.addf %176, %180 : vector<8x128xf32>
    %182 = math.tanh %181 : vector<8x128xf32>
    %cst_44 = arith.constant 1.000000e+00 : f32
    %183 = vector.broadcast %cst_44 : f32 to vector<8x128xf32>
    %184 = arith.subf %183, %175 : vector<8x128xf32>
    %185 = arith.mulf %184, %182 : vector<8x128xf32>
    %186 = arith.mulf %175, %151 : vector<8x128xf32>
    %187 = arith.addf %185, %186 : vector<8x128xf32>
    %c5_i32 = arith.constant 5 : i32
    %188 = arith.index_cast %c5_i32 : i32 to index
    %c0_45 = arith.constant 0 : index
    %c0_46 = arith.constant 0 : index
    %189 = vector.load %arg2[%188, %c0_45, %c0_46] : memref<8x8x128xbf16, #tpu.memory_space<vmem>>, vector<1x8x128xbf16>
    %190 = vector.shape_cast %189 : vector<1x8x128xbf16> to vector<8x128xbf16>
    %cst_47 = arith.constant dense<0.000000e+00> : vector<8x384xf32>
    %191 = tpu.matmul %190, %3, %cst_47 {dimension_numbers = #tpu.dot_dimension_numbers<[1], [0], [0], [1], [0, 0, 1, 1], [], []>} : vector<8x128xbf16>, vector<128x384xbf16>, vector<8x384xf32> -> vector<8x384xf32>
    %192 = vector.broadcast %4 : vector<1x384xf32> to vector<8x384xf32>
    %193 = arith.addf %191, %192 : vector<8x384xf32>
    %194 = arith.truncf %187 : vector<8x128xf32> to vector<8x128xbf16>
    %cst_48 = arith.constant dense<0.000000e+00> : vector<8x384xf32>
    %195 = tpu.matmul %194, %5, %cst_48 {dimension_numbers = #tpu.dot_dimension_numbers<[1], [0], [0], [1], [0, 0, 1, 1], [], []>} : vector<8x128xbf16>, vector<128x384xbf16>, vector<8x384xf32> -> vector<8x384xf32>
    %196 = vector.extract_strided_slice %193 {offsets = [0, 0], sizes = [8, 128], strides = [1, 1]} : vector<8x384xf32> to vector<8x128xf32>
    %197 = vector.extract_strided_slice %195 {offsets = [0, 0], sizes = [8, 128], strides = [1, 1]} : vector<8x384xf32> to vector<8x128xf32>
    %198 = arith.addf %196, %197 : vector<8x128xf32>
    %199 = arith.negf %198 : vector<8x128xf32>
    %200 = math.exp %199 : vector<8x128xf32>
    %cst_49 = arith.constant 1.000000e+00 : f32
    %201 = vector.broadcast %cst_49 : f32 to vector<8x128xf32>
    %202 = arith.addf %201, %200 : vector<8x128xf32>
    %203 = arith.divf %201, %202 : vector<8x128xf32>
    %204 = vector.extract_strided_slice %193 {offsets = [0, 128], sizes = [8, 128], strides = [1, 1]} : vector<8x384xf32> to vector<8x128xf32>
    %205 = vector.extract_strided_slice %195 {offsets = [0, 128], sizes = [8, 128], strides = [1, 1]} : vector<8x384xf32> to vector<8x128xf32>
    %206 = arith.addf %204, %205 : vector<8x128xf32>
    %207 = arith.negf %206 : vector<8x128xf32>
    %208 = math.exp %207 : vector<8x128xf32>
    %cst_50 = arith.constant 1.000000e+00 : f32
    %209 = vector.broadcast %cst_50 : f32 to vector<8x128xf32>
    %210 = arith.addf %209, %208 : vector<8x128xf32>
    %211 = arith.divf %209, %210 : vector<8x128xf32>
    %212 = vector.extract_strided_slice %193 {offsets = [0, 256], sizes = [8, 128], strides = [1, 1]} : vector<8x384xf32> to vector<8x128xf32>
    %213 = vector.extract_strided_slice %195 {offsets = [0, 256], sizes = [8, 128], strides = [1, 1]} : vector<8x384xf32> to vector<8x128xf32>
    %214 = vector.broadcast %6 : vector<1x128xf32> to vector<8x128xf32>
    %215 = arith.addf %213, %214 : vector<8x128xf32>
    %216 = arith.mulf %203, %215 : vector<8x128xf32>
    %217 = arith.addf %212, %216 : vector<8x128xf32>
    %218 = math.tanh %217 : vector<8x128xf32>
    %cst_51 = arith.constant 1.000000e+00 : f32
    %219 = vector.broadcast %cst_51 : f32 to vector<8x128xf32>
    %220 = arith.subf %219, %211 : vector<8x128xf32>
    %221 = arith.mulf %220, %218 : vector<8x128xf32>
    %222 = arith.mulf %211, %187 : vector<8x128xf32>
    %223 = arith.addf %221, %222 : vector<8x128xf32>
    %c6_i32 = arith.constant 6 : i32
    %224 = arith.index_cast %c6_i32 : i32 to index
    %c0_52 = arith.constant 0 : index
    %c0_53 = arith.constant 0 : index
    %225 = vector.load %arg2[%224, %c0_52, %c0_53] : memref<8x8x128xbf16, #tpu.memory_space<vmem>>, vector<1x8x128xbf16>
    %226 = vector.shape_cast %225 : vector<1x8x128xbf16> to vector<8x128xbf16>
    %cst_54 = arith.constant dense<0.000000e+00> : vector<8x384xf32>
    %227 = tpu.matmul %226, %3, %cst_54 {dimension_numbers = #tpu.dot_dimension_numbers<[1], [0], [0], [1], [0, 0, 1, 1], [], []>} : vector<8x128xbf16>, vector<128x384xbf16>, vector<8x384xf32> -> vector<8x384xf32>
    %228 = vector.broadcast %4 : vector<1x384xf32> to vector<8x384xf32>
    %229 = arith.addf %227, %228 : vector<8x384xf32>
    %230 = arith.truncf %223 : vector<8x128xf32> to vector<8x128xbf16>
    %cst_55 = arith.constant dense<0.000000e+00> : vector<8x384xf32>
    %231 = tpu.matmul %230, %5, %cst_55 {dimension_numbers = #tpu.dot_dimension_numbers<[1], [0], [0], [1], [0, 0, 1, 1], [], []>} : vector<8x128xbf16>, vector<128x384xbf16>, vector<8x384xf32> -> vector<8x384xf32>
    %232 = vector.extract_strided_slice %229 {offsets = [0, 0], sizes = [8, 128], strides = [1, 1]} : vector<8x384xf32> to vector<8x128xf32>
    %233 = vector.extract_strided_slice %231 {offsets = [0, 0], sizes = [8, 128], strides = [1, 1]} : vector<8x384xf32> to vector<8x128xf32>
    %234 = arith.addf %232, %233 : vector<8x128xf32>
    %235 = arith.negf %234 : vector<8x128xf32>
    %236 = math.exp %235 : vector<8x128xf32>
    %cst_56 = arith.constant 1.000000e+00 : f32
    %237 = vector.broadcast %cst_56 : f32 to vector<8x128xf32>
    %238 = arith.addf %237, %236 : vector<8x128xf32>
    %239 = arith.divf %237, %238 : vector<8x128xf32>
    %240 = vector.extract_strided_slice %229 {offsets = [0, 128], sizes = [8, 128], strides = [1, 1]} : vector<8x384xf32> to vector<8x128xf32>
    %241 = vector.extract_strided_slice %231 {offsets = [0, 128], sizes = [8, 128], strides = [1, 1]} : vector<8x384xf32> to vector<8x128xf32>
    %242 = arith.addf %240, %241 : vector<8x128xf32>
    %243 = arith.negf %242 : vector<8x128xf32>
    %244 = math.exp %243 : vector<8x128xf32>
    %cst_57 = arith.constant 1.000000e+00 : f32
    %245 = vector.broadcast %cst_57 : f32 to vector<8x128xf32>
    %246 = arith.addf %245, %244 : vector<8x128xf32>
    %247 = arith.divf %245, %246 : vector<8x128xf32>
    %248 = vector.extract_strided_slice %229 {offsets = [0, 256], sizes = [8, 128], strides = [1, 1]} : vector<8x384xf32> to vector<8x128xf32>
    %249 = vector.extract_strided_slice %231 {offsets = [0, 256], sizes = [8, 128], strides = [1, 1]} : vector<8x384xf32> to vector<8x128xf32>
    %250 = vector.broadcast %6 : vector<1x128xf32> to vector<8x128xf32>
    %251 = arith.addf %249, %250 : vector<8x128xf32>
    %252 = arith.mulf %239, %251 : vector<8x128xf32>
    %253 = arith.addf %248, %252 : vector<8x128xf32>
    %254 = math.tanh %253 : vector<8x128xf32>
    %cst_58 = arith.constant 1.000000e+00 : f32
    %255 = vector.broadcast %cst_58 : f32 to vector<8x128xf32>
    %256 = arith.subf %255, %247 : vector<8x128xf32>
    %257 = arith.mulf %256, %254 : vector<8x128xf32>
    %258 = arith.mulf %247, %223 : vector<8x128xf32>
    %259 = arith.addf %257, %258 : vector<8x128xf32>
    %c7_i32 = arith.constant 7 : i32
    %260 = arith.index_cast %c7_i32 : i32 to index
    %c0_59 = arith.constant 0 : index
    %c0_60 = arith.constant 0 : index
    %261 = vector.load %arg2[%260, %c0_59, %c0_60] : memref<8x8x128xbf16, #tpu.memory_space<vmem>>, vector<1x8x128xbf16>
    %262 = vector.shape_cast %261 : vector<1x8x128xbf16> to vector<8x128xbf16>
    %cst_61 = arith.constant dense<0.000000e+00> : vector<8x384xf32>
    %263 = tpu.matmul %262, %3, %cst_61 {dimension_numbers = #tpu.dot_dimension_numbers<[1], [0], [0], [1], [0, 0, 1, 1], [], []>} : vector<8x128xbf16>, vector<128x384xbf16>, vector<8x384xf32> -> vector<8x384xf32>
    %264 = vector.broadcast %4 : vector<1x384xf32> to vector<8x384xf32>
    %265 = arith.addf %263, %264 : vector<8x384xf32>
    %266 = arith.truncf %259 : vector<8x128xf32> to vector<8x128xbf16>
    %cst_62 = arith.constant dense<0.000000e+00> : vector<8x384xf32>
    %267 = tpu.matmul %266, %5, %cst_62 {dimension_numbers = #tpu.dot_dimension_numbers<[1], [0], [0], [1], [0, 0, 1, 1], [], []>} : vector<8x128xbf16>, vector<128x384xbf16>, vector<8x384xf32> -> vector<8x384xf32>
    %268 = vector.extract_strided_slice %265 {offsets = [0, 0], sizes = [8, 128], strides = [1, 1]} : vector<8x384xf32> to vector<8x128xf32>
    %269 = vector.extract_strided_slice %267 {offsets = [0, 0], sizes = [8, 128], strides = [1, 1]} : vector<8x384xf32> to vector<8x128xf32>
    %270 = arith.addf %268, %269 : vector<8x128xf32>
    %271 = arith.negf %270 : vector<8x128xf32>
    %272 = math.exp %271 : vector<8x128xf32>
    %cst_63 = arith.constant 1.000000e+00 : f32
    %273 = vector.broadcast %cst_63 : f32 to vector<8x128xf32>
    %274 = arith.addf %273, %272 : vector<8x128xf32>
    %275 = arith.divf %273, %274 : vector<8x128xf32>
    %276 = vector.extract_strided_slice %265 {offsets = [0, 128], sizes = [8, 128], strides = [1, 1]} : vector<8x384xf32> to vector<8x128xf32>
    %277 = vector.extract_strided_slice %267 {offsets = [0, 128], sizes = [8, 128], strides = [1, 1]} : vector<8x384xf32> to vector<8x128xf32>
    %278 = arith.addf %276, %277 : vector<8x128xf32>
    %279 = arith.negf %278 : vector<8x128xf32>
    %280 = math.exp %279 : vector<8x128xf32>
    %cst_64 = arith.constant 1.000000e+00 : f32
    %281 = vector.broadcast %cst_64 : f32 to vector<8x128xf32>
    %282 = arith.addf %281, %280 : vector<8x128xf32>
    %283 = arith.divf %281, %282 : vector<8x128xf32>
    %284 = vector.extract_strided_slice %265 {offsets = [0, 256], sizes = [8, 128], strides = [1, 1]} : vector<8x384xf32> to vector<8x128xf32>
    %285 = vector.extract_strided_slice %267 {offsets = [0, 256], sizes = [8, 128], strides = [1, 1]} : vector<8x384xf32> to vector<8x128xf32>
    %286 = vector.broadcast %6 : vector<1x128xf32> to vector<8x128xf32>
    %287 = arith.addf %285, %286 : vector<8x128xf32>
    %288 = arith.mulf %275, %287 : vector<8x128xf32>
    %289 = arith.addf %284, %288 : vector<8x128xf32>
    %290 = math.tanh %289 : vector<8x128xf32>
    %cst_65 = arith.constant 1.000000e+00 : f32
    %291 = vector.broadcast %cst_65 : f32 to vector<8x128xf32>
    %292 = arith.subf %291, %283 : vector<8x128xf32>
    %293 = arith.mulf %292, %290 : vector<8x128xf32>
    %294 = arith.mulf %283, %259 : vector<8x128xf32>
    %295 = arith.addf %293, %294 : vector<8x128xf32>
    %c8_i32 = arith.constant 8 : i32
    %c0_66 = arith.constant 0 : index
    %c0_67 = arith.constant 0 : index
    %296 = vector.load %arg10[%c0_66, %c0_67] : memref<8x128xf32, #tpu.memory_space<vmem>>, vector<8x128xf32>
    tpu.vector_store %arg10[%c0_66, %c0_67], %295 {strides = array<i32>} : memref<8x128xf32, #tpu.memory_space<vmem>>, vector<8x128xf32>,
    %c0_i32_68 = arith.constant 0 : i32
    %297 = arith.cmpi eq, %arg1, %c0_i32_68 : i32
    %298 = arith.extui %297 : i1 to i32
    %c0_i32_69 = arith.constant 0 : i32
    %299 = arith.cmpi ne, %298, %c0_i32_69 : i32
    scf.if %299 {
      %300 = arith.truncf %295 : vector<8x128xf32> to vector<8x128xbf16>
      %c0_70 = arith.constant 0 : index
      %c0_71 = arith.constant 0 : index
      %301 = vector.load %arg7[%c0_70, %c0_71] : memref<128x2xbf16, #tpu.memory_space<vmem>>, vector<128x2xbf16>
      %cst_72 = arith.constant dense<0.000000e+00> : vector<8x2xf32>
      %302 = tpu.matmul %300, %301, %cst_72 {dimension_numbers = #tpu.dot_dimension_numbers<[1], [0], [0], [1], [0, 0, 1, 1], [], []>} : vector<8x128xbf16>, vector<128x2xbf16>, vector<8x2xf32> -> vector<8x2xf32>
      %c0_73 = arith.constant 0 : index
      %c0_74 = arith.constant 0 : index
      %303 = vector.load %arg8[%c0_73, %c0_74] : memref<1x2xf32, #tpu.memory_space<vmem>>, vector<1x2xf32>
      %304 = vector.broadcast %303 : vector<1x2xf32> to vector<8x2xf32>
      %305 = arith.addf %302, %304 : vector<8x2xf32>
      %c0_75 = arith.constant 0 : index
      %c0_76 = arith.constant 0 : index
      %306 = vector.load %arg9[%c0_75, %c0_76] : memref<8x2xf32, #tpu.memory_space<vmem>>, vector<8x2xf32>
      tpu.vector_store %arg9[%c0_75, %c0_76], %305 {strides = array<i32>} : memref<8x2xf32, #tpu.memory_space<vmem>>, vector<8x2xf32>,
    } else {
    }
    return
  }
  func.func @transform_0(%arg0: i32, %arg1: i32) -> (i32, i32, i32) {
    %c0_i32 = arith.constant 0 : i32
    %c0_i32_0 = arith.constant 0 : i32
    return %arg1, %arg0, %c0_i32 : i32, i32, i32
  }
  func.func @transform_1(%arg0: i32, %arg1: i32) -> (i32, i32) {
    %c0_i32 = arith.constant 0 : i32
    %c0_i32_0 = arith.constant 0 : i32
    %c0_i32_1 = arith.constant 0 : i32
    return %c0_i32, %c0_i32_0 : i32, i32
  }
  func.func @transform_2(%arg0: i32, %arg1: i32) -> (i32, i32) {
    %c0_i32 = arith.constant 0 : i32
    %c0_i32_0 = arith.constant 0 : i32
    %c0_i32_1 = arith.constant 0 : i32
    return %c0_i32, %c0_i32_0 : i32, i32
  }
  func.func @transform_3(%arg0: i32, %arg1: i32) -> (i32, i32) {
    %c0_i32 = arith.constant 0 : i32
    %c0_i32_0 = arith.constant 0 : i32
    %c0_i32_1 = arith.constant 0 : i32
    return %c0_i32, %c0_i32_0 : i32, i32
  }
  func.func @transform_4(%arg0: i32, %arg1: i32) -> (i32, i32) {
    %c0_i32 = arith.constant 0 : i32
    %c0_i32_0 = arith.constant 0 : i32
    %c0_i32_1 = arith.constant 0 : i32
    return %c0_i32, %c0_i32_0 : i32, i32
  }
  func.func @transform_5(%arg0: i32, %arg1: i32) -> (i32, i32) {
    %c0_i32 = arith.constant 0 : i32
    %c0_i32_0 = arith.constant 0 : i32
    %c0_i32_1 = arith.constant 0 : i32
    return %c0_i32, %c0_i32_0 : i32, i32
  }
  func.func @transform_6(%arg0: i32, %arg1: i32) -> (i32, i32) {
    %c0_i32 = arith.constant 0 : i32
    %c0_i32_0 = arith.constant 0 : i32
    %c0_i32_1 = arith.constant 0 : i32
    return %c0_i32, %c0_i32_0 : i32, i32
  }
  func.func @transform_7(%arg0: i32, %arg1: i32) -> (i32, i32) {
    %c0_i32 = arith.constant 0 : i32
    %c0_i32_0 = arith.constant 0 : i32
    return %arg0, %c0_i32 : i32, i32
  }
}

</mosaic_0001>

<llo_original>
// kernel: gru_imdb_forward.2
$region0: #{gru_imdb_forward.2}
  #allocation0 [shape = 'u32[]', space=smem, size = 0x4, offset = 0x4, fixed_abs, tag = 'smem constant byte address 0x4 - core index']
  #allocation1 [shape = 'u32[144,128]{1,0:T(1,128)}', space=vmem, size = 0x12000, scoped, tag = 'internal scratch']
  #allocation2 [shape = 'f32[8,128]{1,0:T(8,128)}', space=vmem, size = 0x1000, scoped, tag = 'scratch operand']
  %s0 = inlined_call_operand.vmem [shape: bf16[8,8,16], index: 0, kind: input, shape index: {}]
  %s1 = inlined_call_operand.vmem [shape: bf16[16,384], index: 1, kind: input, shape index: {}]
  %s2 = inlined_call_operand.vmem [shape: f32[1,384], index: 2, kind: input, shape index: {}]
  %s3 = inlined_call_operand.hbm [shape: bf16[128,384], index: 3, kind: input, shape index: {}]
  %s4 = inlined_call_operand.vmem [shape: f32[1,128], index: 4, kind: input, shape index: {}]
  %s5 = inlined_call_operand.vmem [shape: bf16[8,8,128], index: 5, kind: output, shape index: {}]
  %s6 = sld [smem:[#allocation0]]
  $region38: #{gru_imdb_forward.2} parent=0
    _
  %s8 = ssub.s32 1, %s6
  %s9 = scalar_select 0, %s8, %s6
  $region1: #{gru_imdb_forward.2} parent=0
    #allocation3 [shape = 'u8[98304]{0}', space=vmem, size = 0x18000, scoped, tag = 'input window, operand 3, single buffered']
    #allocation4 [shape = 's32[1]{0}', space=sflag, size = 0x4, scoped, tag = 'scoped memory for gru_imdb_forward.2']
    %10 = vsyncpa [#allocation4], 0
    // Predicated region
    $region2: #{gru_imdb_forward.2} parent=1 // pred_check
      _
    $region3: #{gru_imdb_forward.2} parent=1 // pred_check_branch
      %12 = sbr.rel (0) target = $region5
    $region4: #{gru_imdb_forward.2} parent=1 // pred_region
      _
    $region5: #{gru_imdb_forward.2} parent=1 // pred_fallthru
      _
    // Predicated region
    $region6: #{gru_imdb_forward.2} parent=1 // pred_check
      _
    $region7: #{gru_imdb_forward.2} parent=1 // pred_check_branch
      %14 = sbr.rel (0) target = $region9
    $region8: #{gru_imdb_forward.2} parent=1 // pred_region
      _
    $region9: #{gru_imdb_forward.2} parent=1 // pred_fallthru
      _
    // Predicated region
    $region10: #{gru_imdb_forward.2} parent=1 // pred_check
      _
    $region11: #{gru_imdb_forward.2} parent=1 // pred_check_branch
      %16 = sbr.rel (0) target = $region13
    $region12: #{gru_imdb_forward.2} parent=1 // pred_region
      _
    $region13: #{gru_imdb_forward.2} parent=1 // pred_fallthru
      _
    // Predicated region
    $region14: #{gru_imdb_forward.2} parent=1 // pred_check
      _
    $region15: #{gru_imdb_forward.2} parent=1 // pred_check_branch
      %18 = sbr.rel (0) target = $region17
    $region16: #{gru_imdb_forward.2} parent=1 // pred_region
      %s20 = ssub.s32 3072, 3072
      %21 = vsyncadd [#allocation4], %s20
      %s22 = sshll.u32 [#allocation3], 4
      %s23 = int_to_ptr.vmem [resolvable:$true] %s22
      %28 = dma.hbm_to_vmem [thread:$0]  %s3, 3072, %s23, [#allocation4], 192, 192, 12
    $region17: #{gru_imdb_forward.2} parent=1 // pred_fallthru
      _
    // Predicated region
    $region18: #{gru_imdb_forward.2} parent=1 // pred_check
      _
    $region19: #{gru_imdb_forward.2} parent=1 // pred_check_branch
      %30 = sbr.rel (0) target = $region21
    $region20: #{gru_imdb_forward.2} parent=1 // pred_region
      _
    $region21: #{gru_imdb_forward.2} parent=1 // pred_fallthru
      _
    // Predicated region
    $region22: #{gru_imdb_forward.2} parent=1 // pred_check
      _
    $region23: #{gru_imdb_forward.2} parent=1 // pred_check_branch
      %32 = sbr.rel (0) target = $region25
    $region24: #{gru_imdb_forward.2} parent=1 // pred_region
      %33 = dma.done [#allocation4], 3072
    $region25: #{gru_imdb_forward.2} parent=1 // pred_fallthru
      _
    %p35 = scmp.eq.s32.totalorder 0, 0
    // Predicated region
    $region26: #{gru_imdb_forward.2} parent=1 // pred_check
      %p36 = pneg %p35
    $region27: #{gru_imdb_forward.2} parent=1 // pred_check_branch
      %38 = sbr.rel (%p36) target = $region29
    $region28: #{gru_imdb_forward.2} parent=1 // pred_region
      %39 = vst [vmem:[#allocation2] sm:$0xff] 0.0
    $region29: #{gru_imdb_forward.2} parent=1 // pred_fallthru
      _
    %v40 = vld [vmem:[%s1] sm:$0xff]
    %v41 = vld [vmem:[%s1 + $0x8] sm:$0xf]
    %v42 = vld [vmem:[%s1 + $0xc] sm:$0xff]
    %v43 = vld [vmem:[%s1 + $0x14] sm:$0xf]
    %v44 = vld [vmem:[%s2] sm:$0x7]
    %v45 = vld [vmem:[#allocation3] sm:$0xff]
    %v46 = vld [vmem:[#allocation3 + $0x8] sm:$0xf]
    %v47 = vld [vmem:[#allocation3 + $0xc] sm:$0xff]
    %v48 = vld [vmem:[#allocation3 + $0x14] sm:$0xf]
    %v49 = vld [vmem:[#allocation3 + $0x18] sm:$0xff]
    %v50 = vld [vmem:[#allocation3 + $0x20] sm:$0xf]
    %v51 = vld [vmem:[#allocation3 + $0x24] sm:$0xff]
    %v52 = vld [vmem:[#allocation3 + $0x2c] sm:$0xf]
    %v53 = vld [vmem:[#allocation3 + $0x30] sm:$0xff]
    %v54 = vld [vmem:[#allocation3 + $0x38] sm:$0xf]
    %v55 = vld [vmem:[#allocation3 + $0x3c] sm:$0xff]
    %v56 = vld [vmem:[#allocation3 + $0x44] sm:$0xf]
    %v57 = vld [vmem:[#allocation3 + $0x48] sm:$0xff]
    %v58 = vld [vmem:[#allocation3 + $0x50] sm:$0xf]
    %v59 = vld [vmem:[#allocation3 + $0x54] sm:$0xff]
    %v60 = vld [vmem:[#allocation3 + $0x5c] sm:$0xf]
    %v61 = vld [vmem:[#allocation3 + $0x60] sm:$0xff]
    %v62 = vld [vmem:[#allocation3 + $0x68] sm:$0xf]
    %v63 = vld [vmem:[#allocation3 + $0x6c] sm:$0xff]
    %v64 = vld [vmem:[#allocation3 + $0x74] sm:$0xf]
    %v65 = vld [vmem:[#allocation3 + $0x78] sm:$0xff]
    %v66 = vld [vmem:[#allocation3 + $0x80] sm:$0xf]
    %v67 = vld [vmem:[#allocation3 + $0x84] sm:$0xff]
    %v68 = vld [vmem:[#allocation3 + $0x8c] sm:$0xf]
    %v69 = vld [vmem:[#allocation3 + $0x90] sm:$0xff]
    %v70 = vld [vmem:[#allocation3 + $0x98] sm:$0xf]
    %v71 = vld [vmem:[#allocation3 + $0x9c] sm:$0xff]
    %v72 = vld [vmem:[#allocation3 + $0xa4] sm:$0xf]
    %v73 = vld [vmem:[#allocation3 + $0xa8] sm:$0xff]
    %v74 = vld [vmem:[#allocation3 + $0xb0] sm:$0xf]
    %v75 = vld [vmem:[#allocation3 + $0xb4] sm:$0xff]
    %v76 = vld [vmem:[#allocation3 + $0xbc] sm:$0xf]
    %v77 = vld [vmem:[%s4] sm:$0x1]
    %v78 = vld [vmem:[#allocation2] sm:$0xff]
    %v79 = vld [vmem:[%s0] sm:$0xf]
    %v81 = vlaneseq
    %v82 = vshrl.u32 %v81, 7
    %v83 = vsub.s32 0, %v82
    %v84 = vrot.slane %v44, %v83
    %v85 = vlaneseq
    %v86 = vshrl.u32 %v85, 7
    %v87 = vsub.s32 1, %v86
    %v88 = vrot.slane %v44, %v87
    %v89 = vlaneseq
    %v90 = vshrl.u32 %v89, 7
    %v91 = vsub.s32 2, %v90
    %v92 = vrot.slane %v44, %v91
    %v100 = vunpack.c.l.b16 %v40
    %v101 = vunpack.c.h.b16 %v40
    %v102 = vunpack.c.l.b16 %v41
    %v103 = vunpack.c.l.b16 %v42
    %v104 = vunpack.c.h.b16 %v42
    %v105 = vunpack.c.l.b16 %v43
    %v106 = vpack.c.b16 %v103, %v100
    %v107 = vpack.c.b16 %v104, %v101
    %v108 = vpack.c.b16 %v105, %v102
    %vm112 = vcmask 130048
    %v114 = vsel %vm112, %v79, 0
    %116 = vmatprep.subr.bf16.mxu0 %v107
    %117 = vmatpush1.bf16.msra.mxu0 %v106
    %118 = vmatprep.subr.bf16.mxu0 0
    %119 = vmatpush1.bf16.msra.mxu0 0
    %120 = vmatprep.subr.bf16.mxu0 0
    %121 = vmatpush1.bf16.msra.mxu0 0
    %122 = vmatprep.subr.bf16.mxu0 0
    %123 = vmatpush1.bf16.msra.mxu0 0
    %124 = vmatprep.subr.bf16.mxu0 0
    %125 = vmatpush1.bf16.msra.mxu0 0
    %126 = vmatprep.subr.bf16.mxu0 0
    %127 = vmatpush1.bf16.msra.mxu0 0
    %128 = vmatprep.subr.bf16.mxu0 0
    %129 = vmatpush1.bf16.msra.mxu0 0
    %130 = vmatprep.subr.bf16.mxu0 0
    %131 = vmatpush1.bf16.msra.mxu0 0
    %132 = vmatprep.subr.bf16.mxu0 0
    %133 = vmatpush1.bf16.msra.mxu0 0
    %134 = vmatprep.subr.bf16.mxu0 0
    %135 = vmatpush1.bf16.msra.mxu0 0
    %136 = vmatprep.subr.bf16.mxu0 0
    %137 = vmatpush1.bf16.msra.mxu0 0
    %138 = vmatprep.subr.bf16.mxu0 0
    %139 = vmatpush1.bf16.msra.mxu0 0
    %140 = vmatprep.subr.bf16.mxu0 0
    %141 = vmatpush1.bf16.msra.mxu0 0
    %142 = vmatprep.subr.bf16.mxu0 0
    %143 = vmatpush1.bf16.msra.mxu0 0
    %144 = vmatprep.subr.bf16.mxu0 0
    %145 = vmatpush1.bf16.msra.mxu0 0
    %146 = vmatprep.subr.bf16.mxu0 0
    %147 = vmatpush1.bf16.msra.mxu0 0
    %148 = vmatprep.mubr.bf16.mxu0 0
    %149 = vmatmul.mubr.bf16.gmra.mrb[0].mxu0 %v114
    %v150 = vpop.f32.mrb[0].mxu0
    %v151 = vadd.f32 %v84, %v150
    %v152 = vpop.f32.mrb[0].mxu0
    %v153 = vadd.f32 %v88, %v152
    %v154 = vpop.f32.mrb[0].mxu0
    %v155 = vpop.f32.mrb[0].mxu0
    %156 = vdwg.mxu0
    %157 = vmatprep.subr.bf16.mxu0 0
    %158 = vmatpush1.bf16.msra.mxu0 %v108
    %159 = vmatprep.subr.bf16.mxu0 0
    %160 = vmatpush1.bf16.msra.mxu0 0
    %161 = vmatprep.subr.bf16.mxu0 0
    %162 = vmatpush1.bf16.msra.mxu0 0
    %163 = vmatprep.subr.bf16.mxu0 0
    %164 = vmatpush1.bf16.msra.mxu0 0
    %165 = vmatprep.subr.bf16.mxu0 0
    %166 = vmatpush1.bf16.msra.mxu0 0
    %167 = vmatprep.subr.bf16.mxu0 0
    %168 = vmatpush1.bf16.msra.mxu0 0
    %169 = vmatprep.subr.bf16.mxu0 0
    %170 = vmatpush1.bf16.msra.mxu0 0
    %171 = vmatprep.subr.bf16.mxu0 0
    %172 = vmatpush1.bf16.msra.mxu0 0
    %173 = vmatprep.subr.bf16.mxu0 0
    %174 = vmatpush1.bf16.msra.mxu0 0
    %175 = vmatprep.subr.bf16.mxu0 0
    %176 = vmatpush1.bf16.msra.mxu0 0
    %177 = vmatprep.subr.bf16.mxu0 0
    %178 = vmatpush1.bf16.msra.mxu0 0
    %179 = vmatprep.subr.bf16.mxu0 0
    %180 = vmatpush1.bf16.msra.mxu0 0
    %181 = vmatprep.subr.bf16.mxu0 0
    %182 = vmatpush1.bf16.msra.mxu0 0
    %183 = vmatprep.subr.bf16.mxu0 0
    %184 = vmatpush1.bf16.msra.mxu0 0
    %185 = vmatprep.subr.bf16.mxu0 0
    %186 = vmatpush1.bf16.msra.mxu0 0
    %187 = vmatprep.subr.bf16.mxu0 0
    %188 = vmatpush1.bf16.msra.mxu0 0
    %189 = vmatprep.mubr.bf16.mxu0 0
    %190 = vmatmul.mubr.bf16.gmra.mrb[0].mxu0 %v114
    %v191 = vpop.f32.mrb[0].mxu0
    %v192 = vadd.f32 %v92, %v191
    %v193 = vpop.f32.mrb[0].mxu0
    %v194 = vpop.f32.mrb[0].mxu0
    %v195 = vpop.f32.mrb[0].mxu0
    %196 = vdwg.mxu0
    %v197 = vpack.c.bf16 %v78, %v78
    %v230 = vunpack.c.l.b16 %v45
    %v231 = vunpack.c.h.b16 %v45
    %v232 = vunpack.c.l.b16 %v46
    %v233 = vunpack.c.l.b16 %v47
    %v234 = vunpack.c.h.b16 %v47
    %v235 = vunpack.c.l.b16 %v48
    %v236 = vunpack.c.l.b16 %v49
    %v237 = vunpack.c.h.b16 %v49
    %v238 = vunpack.c.l.b16 %v50
    %v239 = vunpack.c.l.b16 %v51
    %v240 = vunpack.c.h.b16 %v51
    %v241 = vunpack.c.l.b16 %v52
    %v242 = vunpack.c.l.b16 %v53
    %v243 = vunpack.c.h.b16 %v53
    %v244 = vunpack.c.l.b16 %v54
    %v245 = vunpack.c.l.b16 %v55
    %v246 = vunpack.c.h.b16 %v55
    %v247 = vunpack.c.l.b16 %v56
    %v248 = vunpack.c.l.b16 %v57
    %v249 = vunpack.c.h.b16 %v57
    %v250 = vunpack.c.l.b16 %v58
    %v251 = vunpack.c.l.b16 %v59
    %v252 = vunpack.c.h.b16 %v59
    %v253 = vunpack.c.l.b16 %v60
    %v254 = vunpack.c.l.b16 %v61
    %v255 = vunpack.c.h.b16 %v61
    %v256 = vunpack.c.l.b16 %v62
    %v257 = vunpack.c.l.b16 %v63
    %v258 = vunpack.c.h.b16 %v63
    %v259 = vunpack.c.l.b16 %v64
    %v260 = vunpack.c.l.b16 %v65
    %v261 = vunpack.c.h.b16 %v65
    %v262 = vunpack.c.l.b16 %v66
    %v263 = vunpack.c.l.b16 %v67
    %v264 = vunpack.c.h.b16 %v67
    %v265 = vunpack.c.l.b16 %v68
    %v266 = vunpack.c.l.b16 %v69
    %v267 = vunpack.c.h.b16 %v69
    %v268 = vunpack.c.l.b16 %v70
    %v269 = vunpack.c.l.b16 %v71
    %v270 = vunpack.c.h.b16 %v71
    %v271 = vunpack.c.l.b16 %v72
    %v272 = vunpack.c.l.b16 %v73
    %v273 = vunpack.c.h.b16 %v73
    %v274 = vunpack.c.l.b16 %v74
    %v275 = vunpack.c.l.b16 %v75
    %v276 = vunpack.c.h.b16 %v75
    %v277 = vunpack.c.l.b16 %v76
    %v278 = vpack.c.b16 %v233, %v230
    %v279 = vpack.c.b16 %v234, %v231
    %v280 = vpack.c.b16 %v235, %v232
    %v281 = vpack.c.b16 %v239, %v236
    %v282 = vpack.c.b16 %v240, %v237
    %v283 = vpack.c.b16 %v241, %v238
    %v284 = vpack.c.b16 %v245, %v242
    %v285 = vpack.c.b16 %v246, %v243
    %v286 = vpack.c.b16 %v247, %v244
    %v287 = vpack.c.b16 %v251, %v248
    %v288 = vpack.c.b16 %v252, %v249
    %v289 = vpack.c.b16 %v253, %v250
    %v290 = vpack.c.b16 %v257, %v254
    %v291 = vpack.c.b16 %v258, %v255
    %v292 = vpack.c.b16 %v259, %v256
    %v293 = vpack.c.b16 %v263, %v260
    %v294 = vpack.c.b16 %v264, %v261
    %v295 = vpack.c.b16 %v265, %v262
    %v296 = vpack.c.b16 %v269, %v266
    %v297 = vpack.c.b16 %v270, %v267
    %v298 = vpack.c.b16 %v271, %v268
    %v299 = vpack.c.b16 %v275, %v272
    %v300 = vpack.c.b16 %v276, %v273
    %v301 = vpack.c.b16 %v277, %v274
    %326 = vmatprep.subr.bf16.mxu0 %v279
    %327 = vmatpush1.bf16.msra.mxu0 %v278
    %328 = vmatprep.subr.bf16.mxu0 %v282
    %329 = vmatpush1.bf16.msra.mxu0 %v281
    %330 = vmatprep.subr.bf16.mxu0 %v285
    %331 = vmatpush1.bf16.msra.mxu0 %v284
    %332 = vmatprep.subr.bf16.mxu0 %v288
    %333 = vmatpush1.bf16.msra.mxu0 %v287
    %334 = vmatprep.subr.bf16.mxu0 %v291
    %335 = vmatpush1.bf16.msra.mxu0 %v290
    %336 = vmatprep.subr.bf16.mxu0 %v294
    %337 = vmatpush1.bf16.msra.mxu0 %v293
    %338 = vmatprep.subr.bf16.mxu0 %v297
    %339 = vmatpush1.bf16.msra.mxu0 %v296
    %340 = vmatprep.subr.bf16.mxu0 %v300
    %341 = vmatpush1.bf16.msra.mxu0 %v299
    %342 = vmatprep.subr.bf16.mxu0 0
    %343 = vmatpush1.bf16.msra.mxu0 0
    %344 = vmatprep.subr.bf16.mxu0 0
    %345 = vmatpush1.bf16.msra.mxu0 0
    %346 = vmatprep.subr.bf16.mxu0 0
    %347 = vmatpush1.bf16.msra.mxu0 0
    %348 = vmatprep.subr.bf16.mxu0 0
    %349 = vmatpush1.bf16.msra.mxu0 0
    %350 = vmatprep.subr.bf16.mxu0 0
    %351 = vmatpush1.bf16.msra.mxu0 0
    %352 = vmatprep.subr.bf16.mxu0 0
    %353 = vmatpush1.bf16.msra.mxu0 0
    %354 = vmatprep.subr.bf16.mxu0 0
    %355 = vmatpush1.bf16.msra.mxu0 0
    %356 = vmatprep.subr.bf16.mxu0 0
    %357 = vmatpush1.bf16.msra.mxu0 0
    %358 = vmatprep.mubr.bf16.mxu0 0
    %359 = vmatmul.mubr.bf16.gmra.mrb[0].mxu0 %v197
    %v360 = vpop.f32.mrb[0].mxu0
    %v361 = vadd.f32 0.0, %v360
    %v362 = vpop.f32.mrb[0].mxu0
    %v363 = vadd.f32 0.0, %v362
    %v364 = vpop.f32.mrb[0].mxu0
    %v365 = vpop.f32.mrb[0].mxu0
    %366 = vdwg.mxu0
    %367 = vmatprep.subr.bf16.mxu0 0
    %368 = vmatpush1.bf16.msra.mxu0 %v280
    %369 = vmatprep.subr.bf16.mxu0 0
    %370 = vmatpush1.bf16.msra.mxu0 %v283
    %371 = vmatprep.subr.bf16.mxu0 0
    %372 = vmatpush1.bf16.msra.mxu0 %v286
    %373 = vmatprep.subr.bf16.mxu0 0
    %374 = vmatpush1.bf16.msra.mxu0 %v289
    %375 = vmatprep.subr.bf16.mxu0 0
    %376 = vmatpush1.bf16.msra.mxu0 %v292
    %377 = vmatprep.subr.bf16.mxu0 0
    %378 = vmatpush1.bf16.msra.mxu0 %v295
    %379 = vmatprep.subr.bf16.mxu0 0
    %380 = vmatpush1.bf16.msra.mxu0 %v298
    %381 = vmatprep.subr.bf16.mxu0 0
    %382 = vmatpush1.bf16.msra.mxu0 %v301
    %383 = vmatprep.subr.bf16.mxu0 0
    %384 = vmatpush1.bf16.msra.mxu0 0
    %385 = vmatprep.subr.bf16.mxu0 0
    %386 = vmatpush1.bf16.msra.mxu0 0
    %387 = vmatprep.subr.bf16.mxu0 0
    %388 = vmatpush1.bf16.msra.mxu0 0
    %389 = vmatprep.subr.bf16.mxu0 0
    %390 = vmatpush1.bf16.msra.mxu0 0
    %391 = vmatprep.subr.bf16.mxu0 0
    %392 = vmatpush1.bf16.msra.mxu0 0
    %393 = vmatprep.subr.bf16.mxu0 0
    %394 = vmatpush1.bf16.msra.mxu0 0
    %395 = vmatprep.subr.bf16.mxu0 0
    %396 = vmatpush1.bf16.msra.mxu0 0
    %397 = vmatprep.subr.bf16.mxu0 0
    %398 = vmatpush1.bf16.msra.mxu0 0
    %399 = vmatprep.mubr.bf16.mxu0 0
    %400 = vmatmul.mubr.bf16.gmra.mrb[0].mxu0 %v197
    %v401 = vpop.f32.mrb[0].mxu0
    %v402 = vadd.f32 0.0, %v401
    %v403 = vpop.f32.mrb[0].mxu0
    %v404 = vpop.f32.mrb[0].mxu0
    %v405 = vpop.f32.mrb[0].mxu0
    %406 = vdwg.mxu0
    %v407 = vadd.f32 %v151, %v361
    %v408 = vxor.u32 %v407, 2147483648
    %v409 = vmul.f32 %v408, 1.442695
    %v410 = vpow.pop %v409
    %v411 = vadd.f32 %v410, 1.0
    %v412 = vrcp.pop %v411
    %v413 = vmul.f32 1.0, %v412
    %v414 = vadd.f32 %v153, %v363
    %v415 = vxor.u32 %v414, 2147483648
    %v416 = vmul.f32 %v415, 1.442695
    %v417 = vpow.pop %v416
    %v418 = vadd.f32 %v417, 1.0
    %v419 = vrcp.pop %v418
    %v420 = vmul.f32 1.0, %v419
    %v422 = vlaneseq
    %v423 = vshrl.u32 %v422, 7
    %v424 = vsub.s32 0, %v423
    %v425 = vrot.slane %v77, %v424
    %v427 = vadd.f32 %v402, %v425
    %v428 = vmul.f32 %v413, %v427
    %v429 = vadd.f32 %v192, %v428
    %v430 = vtanh.pop %v429
    %v431 = vsub.f32 1.0, %v420
    %v432 = vmul.f32 %v431, %v430
    %v433 = vmul.f32 %v420, %v78
    %v434 = vadd.f32 %v432, %v433
    %v435 = vpack.c.bf16 %v434, %v434
    %436 = vst [vmem:[%s5] sm:$0xf] %v435
    %s437 = scalar_lea.vmem %s0, 4
    %v438 = vld [vmem:[%s437] sm:$0xf]
    %v440 = vsel %vm112, %v438, 0
    %442 = vmatprep.subr.bf16.mxu0 %v107
    %443 = vmatpush1.bf16.msra.mxu0 %v106
    %444 = vmatprep.subr.bf16.mxu0 0
    %445 = vmatpush1.bf16.msra.mxu0 0
    %446 = vmatprep.subr.bf16.mxu0 0
    %447 = vmatpush1.bf16.msra.mxu0 0
    %448 = vmatprep.subr.bf16.mxu0 0
    %449 = vmatpush1.bf16.msra.mxu0 0
    %450 = vmatprep.subr.bf16.mxu0 0
    %451 = vmatpush1.bf16.msra.mxu0 0
    %452 = vmatprep.subr.bf16.mxu0 0
    %453 = vmatpush1.bf16.msra.mxu0 0
    %454 = vmatprep.subr.bf16.mxu0 0
    %455 = vmatpush1.bf16.msra.mxu0 0
    %456 = vmatprep.subr.bf16.mxu0 0
    %457 = vmatpush1.bf16.msra.mxu0 0
    %458 = vmatprep.subr.bf16.mxu0 0
    %459 = vmatpush1.bf16.msra.mxu0 0
    %460 = vmatprep.subr.bf16.mxu0 0
    %461 = vmatpush1.bf16.msra.mxu0 0
    %462 = vmatprep.subr.bf16.mxu0 0
    %463 = vmatpush1.bf16.msra.mxu0 0
    %464 = vmatprep.subr.bf16.mxu0 0
    %465 = vmatpush1.bf16.msra.mxu0 0
    %466 = vmatprep.subr.bf16.mxu0 0
    %467 = vmatpush1.bf16.msra.mxu0 0
    %468 = vmatprep.subr.bf16.mxu0 0
    %469 = vmatpush1.bf16.msra.mxu0 0
    %470 = vmatprep.subr.bf16.mxu0 0
    %471 = vmatpush1.bf16.msra.mxu0 0
    %472 = vmatprep.subr.bf16.mxu0 0
    %473 = vmatpush1.bf16.msra.mxu0 0
    %474 = vmatprep.mubr.bf16.mxu0 0
    %475 = vmatmul.mubr.bf16.gmra.mrb[0].mxu0 %v440
    %v476 = vpop.f32.mrb[0].mxu0
    %v477 = vadd.f32 %v84, %v476
    %v478 = vpop.f32.mrb[0].mxu0
    %v479 = vadd.f32 %v88, %v478
    %v480 = vpop.f32.mrb[0].mxu0
    %v481 = vpop.f32.mrb[0].mxu0
    %482 = vdwg.mxu0
    %483 = vmatprep.subr.bf16.mxu0 0
    %484 = vmatpush1.bf16.msra.mxu0 %v108
    %485 = vmatprep.subr.bf16.mxu0 0
    %486 = vmatpush1.bf16.msra.mxu0 0
    %487 = vmatprep.subr.bf16.mxu0 0
    %488 = vmatpush1.bf16.msra.mxu0 0
    %489 = vmatprep.subr.bf16.mxu0 0
    %490 = vmatpush1.bf16.msra.mxu0 0
    %491 = vmatprep.subr.bf16.mxu0 0
    %492 = vmatpush1.bf16.msra.mxu0 0
    %493 = vmatprep.subr.bf16.mxu0 0
    %494 = vmatpush1.bf16.msra.mxu0 0
    %495 = vmatprep.subr.bf16.mxu0 0
    %496 = vmatpush1.bf16.msra.mxu0 0
    %497 = vmatprep.subr.bf16.mxu0 0
    %498 = vmatpush1.bf16.msra.mxu0 0
    %499 = vmatprep.subr.bf16.mxu0 0
    %500 = vmatpush1.bf16.msra.mxu0 0
    %501 = vmatprep.subr.bf16.mxu0 0
    %502 = vmatpush1.bf16.msra.mxu0 0
    %503 = vmatprep.subr.bf16.mxu0 0
    %504 = vmatpush1.bf16.msra.mxu0 0
    %505 = vmatprep.subr.bf16.mxu0 0
    %506 = vmatpush1.bf16.msra.mxu0 0
    %507 = vmatprep.subr.bf16.mxu0 0
    %508 = vmatpush1.bf16.msra.mxu0 0
    %509 = vmatprep.subr.bf16.mxu0 0
    %510 = vmatpush1.bf16.msra.mxu0 0
    %511 = vmatprep.subr.bf16.mxu0 0
    %512 = vmatpush1.bf16.msra.mxu0 0
    %513 = vmatprep.subr.bf16.mxu0 0
    %514 = vmatpush1.bf16.msra.mxu0 0
    %515 = vmatprep.mubr.bf16.mxu0 0
    %516 = vmatmul.mubr.bf16.gmra.mrb[0].mxu0 %v440
    %v517 = vpop.f32.mrb[0].mxu0
    %v518 = vadd.f32 %v92, %v517
    %v519 = vpop.f32.mrb[0].mxu0
    %v520 = vpop.f32.mrb[0].mxu0
    %v521 = vpop.f32.mrb[0].mxu0
    %522 = vdwg.mxu0
    %523 = vmatprep.subr.bf16.mxu0 %v279
    %524 = vmatpush1.bf16.msra.mxu0 %v278
    %525 = vmatprep.subr.bf16.mxu0 %v282
    %526 = vmatpush1.bf16.msra.mxu0 %v281
    %527 = vmatprep.subr.bf16.mxu0 %v285
    %528 = vmatpush1.bf16.msra.mxu0 %v284
    %529 = vmatprep.subr.bf16.mxu0 %v288
    %530 = vmatpush1.bf16.msra.mxu0 %v287
    %531 = vmatprep.subr.bf16.mxu0 %v291
    %532 = vmatpush1.bf16.msra.mxu0 %v290
    %533 = vmatprep.subr.bf16.mxu0 %v294
    %534 = vmatpush1.bf16.msra.mxu0 %v293
    %535 = vmatprep.subr.bf16.mxu0 %v297
    %536 = vmatpush1.bf16.msra.mxu0 %v296
    %537 = vmatprep.subr.bf16.mxu0 %v300
    %538 = vmatpush1.bf16.msra.mxu0 %v299
    %539 = vmatprep.subr.bf16.mxu0 0
    %540 = vmatpush1.bf16.msra.mxu0 0
    %541 = vmatprep.subr.bf16.mxu0 0
    %542 = vmatpush1.bf16.msra.mxu0 0
    %543 = vmatprep.subr.bf16.mxu0 0
    %544 = vmatpush1.bf16.msra.mxu0 0
    %545 = vmatprep.subr.bf16.mxu0 0
    %546 = vmatpush1.bf16.msra.mxu0 0
    %547 = vmatprep.subr.bf16.mxu0 0
    %548 = vmatpush1.bf16.msra.mxu0 0
    %549 = vmatprep.subr.bf16.mxu0 0
    %550 = vmatpush1.bf16.msra.mxu0 0
    %551 = vmatprep.subr.bf16.mxu0 0
    %552 = vmatpush1.bf16.msra.mxu0 0
    %553 = vmatprep.subr.bf16.mxu0 0
    %554 = vmatpush1.bf16.msra.mxu0 0
    %555 = vmatprep.mubr.bf16.mxu0 0
    %556 = vmatmul.mubr.bf16.gmra.mrb[0].mxu0 %v435
    %v557 = vpop.f32.mrb[0].mxu0
    %v558 = vadd.f32 0.0, %v557
    %v559 = vpop.f32.mrb[0].mxu0
    %v560 = vadd.f32 0.0, %v559
    %v561 = vpop.f32.mrb[0].mxu0
    %v562 = vpop.f32.mrb[0].mxu0
    %563 = vdwg.mxu0
    %564 = vmatprep.subr.bf16.mxu0 0
    %565 = vmatpush1.bf16.msra.mxu0 %v280
    %566 = vmatprep.subr.bf16.mxu0 0
    %567 = vmatpush1.bf16.msra.mxu0 %v283
    %568 = vmatprep.subr.bf16.mxu0 0
    %569 = vmatpush1.bf16.msra.mxu0 %v286
    %570 = vmatprep.subr.bf16.mxu0 0
    %571 = vmatpush1.bf16.msra.mxu0 %v289
    %572 = vmatprep.subr.bf16.mxu0 0
    %573 = vmatpush1.bf16.msra.mxu0 %v292
    %574 = vmatprep.subr.bf16.mxu0 0
    %575 = vmatpush1.bf16.msra.mxu0 %v295
    %576 = vmatprep.subr.bf16.mxu0 0
    %577 = vmatpush1.bf16.msra.mxu0 %v298
    %578 = vmatprep.subr.bf16.mxu0 0
    %579 = vmatpush1.bf16.msra.mxu0 %v301
    %580 = vmatprep.subr.bf16.mxu0 0
    %581 = vmatpush1.bf16.msra.mxu0 0
    %582 = vmatprep.subr.bf16.mxu0 0
    %583 = vmatpush1.bf16.msra.mxu0 0
    %584 = vmatprep.subr.bf16.mxu0 0
    %585 = vmatpush1.bf16.msra.mxu0 0
    %586 = vmatprep.subr.bf16.mxu0 0
    %587 = vmatpush1.bf16.msra.mxu0 0
    %588 = vmatprep.subr.bf16.mxu0 0
    %589 = vmatpush1.bf16.msra.mxu0 0
    %590 = vmatprep.subr.bf16.mxu0 0
    %591 = vmatpush1.bf16.msra.mxu0 0
    %592 = vmatprep.subr.bf16.mxu0 0
    %593 = vmatpush1.bf16.msra.mxu0 0
    %594 = vmatprep.subr.bf16.mxu0 0
    %595 = vmatpush1.bf16.msra.mxu0 0
    %596 = vmatprep.mubr.bf16.mxu0 0
    %597 = vmatmul.mubr.bf16.gmra.mrb[0].mxu0 %v435
    %v598 = vpop.f32.mrb[0].mxu0
    %v599 = vadd.f32 0.0, %v598
    %v600 = vpop.f32.mrb[0].mxu0
    %v601 = vpop.f32.mrb[0].mxu0
    %v602 = vpop.f32.mrb[0].mxu0
    %603 = vdwg.mxu0
    %v604 = vadd.f32 %v477, %v558
    %v605 = vxor.u32 %v604, 2147483648
    %v606 = vmul.f32 %v605, 1.442695
    %v607 = vpow.pop %v606
    %v608 = vadd.f32 %v607, 1.0
    %v609 = vrcp.pop %v608
    %v610 = vmul.f32 1.0, %v609
    %v611 = vadd.f32 %v479, %v560
    %v612 = vxor.u32 %v611, 2147483648
    %v613 = vmul.f32 %v612, 1.442695
    %v614 = vpow.pop %v613
    %v615 = vadd.f32 %v614, 1.0
    %v616 = vrcp.pop %v615
    %v617 = vmul.f32 1.0, %v616
    %v618 = vadd.f32 %v599, %v425
    %v619 = vmul.f32 %v610, %v618
    %v620 = vadd.f32 %v518, %v619
    %v621 = vtanh.pop %v620
    %v622 = vsub.f32 1.0, %v617
    %v623 = vmul.f32 %v622, %v621
    %v624 = vmul.f32 %v617, %v434
    %v625 = vadd.f32 %v623, %v624
    %v626 = vpack.c.bf16 %v625, %v625
    %s627 = scalar_lea.vmem %s5, 4
    %628 = vst [vmem:[%s627] sm:$0xf] %v626
    %s629 = scalar_lea.vmem %s0, 8
    %v630 = vld [vmem:[%s629] sm:$0xf]
    %v632 = vsel %vm112, %v630, 0
    %634 = vmatprep.subr.bf16.mxu0 %v107
    %635 = vmatpush1.bf16.msra.mxu0 %v106
    %636 = vmatprep.subr.bf16.mxu0 0
    %637 = vmatpush1.bf16.msra.mxu0 0
    %638 = vmatprep.subr.bf16.mxu0 0
    %639 = vmatpush1.bf16.msra.mxu0 0
    %640 = vmatprep.subr.bf16.mxu0 0
    %641 = vmatpush1.bf16.msra.mxu0 0
    %642 = vmatprep.subr.bf16.mxu0 0
    %643 = vmatpush1.bf16.msra.mxu0 0
    %644 = vmatprep.subr.bf16.mxu0 0
    %645 = vmatpush1.bf16.msra.mxu0 0
    %646 = vmatprep.subr.bf16.mxu0 0
    %647 = vmatpush1.bf16.msra.mxu0 0
    %648 = vmatprep.subr.bf16.mxu0 0
    %649 = vmatpush1.bf16.msra.mxu0 0
    %650 = vmatprep.subr.bf16.mxu0 0
    %651 = vmatpush1.bf16.msra.mxu0 0
    %652 = vmatprep.subr.bf16.mxu0 0
    %653 = vmatpush1.bf16.msra.mxu0 0
    %654 = vmatprep.subr.bf16.mxu0 0
    %655 = vmatpush1.bf16.msra.mxu0 0
    %656 = vmatprep.subr.bf16.mxu0 0
    %657 = vmatpush1.bf16.msra.mxu0 0
    %658 = vmatprep.subr.bf16.mxu0 0
    %659 = vmatpush1.bf16.msra.mxu0 0
    %660 = vmatprep.subr.bf16.mxu0 0
    %661 = vmatpush1.bf16.msra.mxu0 0
    %662 = vmatprep.subr.bf16.mxu0 0
    %663 = vmatpush1.bf16.msra.mxu0 0
    %664 = vmatprep.subr.bf16.mxu0 0
    %665 = vmatpush1.bf16.msra.mxu0 0
    %666 = vmatprep.mubr.bf16.mxu0 0
    %667 = vmatmul.mubr.bf16.gmra.mrb[0].mxu0 %v632
    %v668 = vpop.f32.mrb[0].mxu0
    %v669 = vadd.f32 %v84, %v668
    %v670 = vpop.f32.mrb[0].mxu0
    %v671 = vadd.f32 %v88, %v670
    %v672 = vpop.f32.mrb[0].mxu0
    %v673 = vpop.f32.mrb[0].mxu0
    %674 = vdwg.mxu0
    %675 = vmatprep.subr.bf16.mxu0 0
    %676 = vmatpush1.bf16.msra.mxu0 %v108
    %677 = vmatprep.subr.bf16.mxu0 0
    %678 = vmatpush1.bf16.msra.mxu0 0
    %679 = vmatprep.subr.bf16.mxu0 0
    %680 = vmatpush1.bf16.msra.mxu0 0
    %681 = vmatprep.subr.bf16.mxu0 0
    %682 = vmatpush1.bf16.msra.mxu0 0
    %683 = vmatprep.subr.bf16.mxu0 0
    %684 = vmatpush1.bf16.msra.mxu0 0
    %685 = vmatprep.subr.bf16.mxu0 0
    %686 = vmatpush1.bf16.msra.mxu0 0
    %687 = vmatprep.subr.bf16.mxu0 0
    %688 = vmatpush1.bf16.msra.mxu0 0
    %689 = vmatprep.subr.bf16.mxu0 0
    %690 = vmatpush1.bf16.msra.mxu0 0
    %691 = vmatprep.subr.bf16.mxu0 0
    %692 = vmatpush1.bf16.msra.mxu0 0
    %693 = vmatprep.subr.bf16.mxu0 0
    %694 = vmatpush1.bf16.msra.mxu0 0
    %695 = vmatprep.subr.bf16.mxu0 0
    %696 = vmatpush1.bf16.msra.mxu0 0
    %697 = vmatprep.subr.bf16.mxu0 0
    %698 = vmatpush1.bf16.msra.mxu0 0
    %699 = vmatprep.subr.bf16.mxu0 0
    %700 = vmatpush1.bf16.msra.mxu0 0
    %701 = vmatprep.subr.bf16.mxu0 0
    %702 = vmatpush1.bf16.msra.mxu0 0
    %703 = vmatprep.subr.bf16.mxu0 0
    %704 = vmatpush1.bf16.msra.mxu0 0
    %705 = vmatprep.subr.bf16.mxu0 0
    %706 = vmatpush1.bf16.msra.mxu0 0
    %707 = vmatprep.mubr.bf16.mxu0 0
    %708 = vmatmul.mubr.bf16.gmra.mrb[0].mxu0 %v632
    %v709 = vpop.f32.mrb[0].mxu0
    %v710 = vadd.f32 %v92, %v709
    %v711 = vpop.f32.mrb[0].mxu0
    %v712 = vpop.f32.mrb[0].mxu0
    %v713 = vpop.f32.mrb[0].mxu0
    %714 = vdwg.mxu0
    %715 = vmatprep.subr.bf16.mxu0 %v279
    %716 = vmatpush1.bf16.msra.mxu0 %v278
    %717 = vmatprep.subr.bf16.mxu0 %v282
    %718 = vmatpush1.bf16.msra.mxu0 %v281
    %719 = vmatprep.subr.bf16.mxu0 %v285
    %720 = vmatpush1.bf16.msra.mxu0 %v284
    %721 = vmatprep.subr.bf16.mxu0 %v288
    %722 = vmatpush1.bf16.msra.mxu0 %v287
    %723 = vmatprep.subr.bf16.mxu0 %v291
    %724 = vmatpush1.bf16.msra.mxu0 %v290
    %725 = vmatprep.subr.bf16.mxu0 %v294
    %726 = vmatpush1.bf16.msra.mxu0 %v293
    %727 = vmatprep.subr.bf16.mxu0 %v297
    %728 = vmatpush1.bf16.msra.mxu0 %v296
    %729 = vmatprep.subr.bf16.mxu0 %v300
    %730 = vmatpush1.bf16.msra.mxu0 %v299
    %731 = vmatprep.subr.bf16.mxu0 0
    %732 = vmatpush1.bf16.msra.mxu0 0
    %733 = vmatprep.subr.bf16.mxu0 0
    %734 = vmatpush1.bf16.msra.mxu0 0
    %735 = vmatprep.subr.bf16.mxu0 0
    %736 = vmatpush1.bf16.msra.mxu0 0
    %737 = vmatprep.subr.bf16.mxu0 0
    %738 = vmatpush1.bf16.msra.mxu0 0
    %739 = vmatprep.subr.bf16.mxu0 0
    %740 = vmatpush1.bf16.msra.mxu0 0
    %741 = vmatprep.subr.bf16.mxu0 0
    %742 = vmatpush1.bf16.msra.mxu0 0
    %743 = vmatprep.subr.bf16.mxu0 0
    %744 = vmatpush1.bf16.msra.mxu0 0
    %745 = vmatprep.subr.bf16.mxu0 0
    %746 = vmatpush1.bf16.msra.mxu0 0
    %747 = vmatprep.mubr.bf16.mxu0 0
    %748 = vmatmul.mubr.bf16.gmra.mrb[0].mxu0 %v626
    %v749 = vpop.f32.mrb[0].mxu0
    %v750 = vadd.f32 0.0, %v749
    %v751 = vpop.f32.mrb[0].mxu0
    %v752 = vadd.f32 0.0, %v751
    %v753 = vpop.f32.mrb[0].mxu0
    %v754 = vpop.f32.mrb[0].mxu0
    %755 = vdwg.mxu0
    %756 = vmatprep.subr.bf16.mxu0 0
    %757 = vmatpush1.bf16.msra.mxu0 %v280
    %758 = vmatprep.subr.bf16.mxu0 0
    %759 = vmatpush1.bf16.msra.mxu0 %v283
    %760 = vmatprep.subr.bf16.mxu0 0
    %761 = vmatpush1.bf16.msra.mxu0 %v286
    %762 = vmatprep.subr.bf16.mxu0 0
    %763 = vmatpush1.bf16.msra.mxu0 %v289
    %764 = vmatprep.subr.bf16.mxu0 0
    %765 = vmatpush1.bf16.msra.mxu0 %v292
    %766 = vmatprep.subr.bf16.mxu0 0
    %767 = vmatpush1.bf16.msra.mxu0 %v295
    %768 = vmatprep.subr.bf16.mxu0 0
    %769 = vmatpush1.bf16.msra.mxu0 %v298
    %770 = vmatprep.subr.bf16.mxu0 0
    %771 = vmatpush1.bf16.msra.mxu0 %v301
    %772 = vmatprep.subr.bf16.mxu0 0
    %773 = vmatpush1.bf16.msra.mxu0 0
    %774 = vmatprep.subr.bf16.mxu0 0
    %775 = vmatpush1.bf16.msra.mxu0 0
    %776 = vmatprep.subr.bf16.mxu0 0
    %777 = vmatpush1.bf16.msra.mxu0 0
    %778 = vmatprep.subr.bf16.mxu0 0
    %779 = vmatpush1.bf16.msra.mxu0 0
    %780 = vmatprep.subr.bf16.mxu0 0
    %781 = vmatpush1.bf16.msra.mxu0 0
    %782 = vmatprep.subr.bf16.mxu0 0
    %783 = vmatpush1.bf16.msra.mxu0 0
    %784 = vmatprep.subr.bf16.mxu0 0
    %785 = vmatpush1.bf16.msra.mxu0 0
    %786 = vmatprep.subr.bf16.mxu0 0
    %787 = vmatpush1.bf16.msra.mxu0 0
    %788 = vmatprep.mubr.bf16.mxu0 0
    %789 = vmatmul.mubr.bf16.gmra.mrb[0].mxu0 %v626
    %v790 = vpop.f32.mrb[0].mxu0
    %v791 = vadd.f32 0.0, %v790
    %v792 = vpop.f32.mrb[0].mxu0
    %v793 = vpop.f32.mrb[0].mxu0
    %v794 = vpop.f32.mrb[0].mxu0
    %795 = vdwg.mxu0
    %v796 = vadd.f32 %v669, %v750
    %v797 = vxor.u32 %v796, 2147483648
    %v798 = vmul.f32 %v797, 1.442695
    %v799 = vpow.pop %v798
    %v800 = vadd.f32 %v799, 1.0
    %v801 = vrcp.pop %v800
    %v802 = vmul.f32 1.0, %v801
    %v803 = vadd.f32 %v671, %v752
    %v804 = vxor.u32 %v803, 2147483648
    %v805 = vmul.f32 %v804, 1.442695
    %v806 = vpow.pop %v805
    %v807 = vadd.f32 %v806, 1.0
    %v808 = vrcp.pop %v807
    %v809 = vmul.f32 1.0, %v808
    %v810 = vadd.f32 %v791, %v425
    %v811 = vmul.f32 %v802, %v810
    %v812 = vadd.f32 %v710, %v811
    %v813 = vtanh.pop %v812
    %v814 = vsub.f32 1.0, %v809
    %v815 = vmul.f32 %v814, %v813
    %v816 = vmul.f32 %v809, %v625
    %v817 = vadd.f32 %v815, %v816
    %v818 = vpack.c.bf16 %v817, %v817
    %s819 = scalar_lea.vmem %s5, 8
    %820 = vst [vmem:[%s819] sm:$0xf] %v818
    %s821 = scalar_lea.vmem %s0, 12
    %v822 = vld [vmem:[%s821] sm:$0xf]
    %v824 = vsel %vm112, %v822, 0
    %826 = vmatprep.subr.bf16.mxu0 %v107
    %827 = vmatpush1.bf16.msra.mxu0 %v106
    %828 = vmatprep.subr.bf16.mxu0 0
    %829 = vmatpush1.bf16.msra.mxu0 0
    %830 = vmatprep.subr.bf16.mxu0 0
    %831 = vmatpush1.bf16.msra.mxu0 0
    %832 = vmatprep.subr.bf16.mxu0 0
    %833 = vmatpush1.bf16.msra.mxu0 0
    %834 = vmatprep.subr.bf16.mxu0 0
    %835 = vmatpush1.bf16.msra.mxu0 0
    %836 = vmatprep.subr.bf16.mxu0 0
    %837 = vmatpush1.bf16.msra.mxu0 0
    %838 = vmatprep.subr.bf16.mxu0 0
    %839 = vmatpush1.bf16.msra.mxu0 0
    %840 = vmatprep.subr.bf16.mxu0 0
    %841 = vmatpush1.bf16.msra.mxu0 0
    %842 = vmatprep.subr.bf16.mxu0 0
    %843 = vmatpush1.bf16.msra.mxu0 0
    %844 = vmatprep.subr.bf16.mxu0 0
    %845 = vmatpush1.bf16.msra.mxu0 0
    %846 = vmatprep.subr.bf16.mxu0 0
    %847 = vmatpush1.bf16.msra.mxu0 0
    %848 = vmatprep.subr.bf16.mxu0 0
    %849 = vmatpush1.bf16.msra.mxu0 0
    %850 = vmatprep.subr.bf16.mxu0 0
    %851 = vmatpush1.bf16.msra.mxu0 0
    %852 = vmatprep.subr.bf16.mxu0 0
    %853 = vmatpush1.bf16.msra.mxu0 0
    %854 = vmatprep.subr.bf16.mxu0 0
    %855 = vmatpush1.bf16.msra.mxu0 0
    %856 = vmatprep.subr.bf16.mxu0 0
    %857 = vmatpush1.bf16.msra.mxu0 0
    %858 = vmatprep.mubr.bf16.mxu0 0
    %859 = vmatmul.mubr.bf16.gmra.mrb[0].mxu0 %v824
    %v860 = vpop.f32.mrb[0].mxu0
    %v861 = vadd.f32 %v84, %v860
    %v862 = vpop.f32.mrb[0].mxu0
    %v863 = vadd.f32 %v88, %v862
    %v864 = vpop.f32.mrb[0].mxu0
    %v865 = vpop.f32.mrb[0].mxu0
    %866 = vdwg.mxu0
    %867 = vmatprep.subr.bf16.mxu0 0
    %868 = vmatpush1.bf16.msra.mxu0 %v108
    %869 = vmatprep.subr.bf16.mxu0 0
    %870 = vmatpush1.bf16.msra.mxu0 0
    %871 = vmatprep.subr.bf16.mxu0 0
    %872 = vmatpush1.bf16.msra.mxu0 0
    %873 = vmatprep.subr.bf16.mxu0 0
    %874 = vmatpush1.bf16.msra.mxu0 0
    %875 = vmatprep.subr.bf16.mxu0 0
    %876 = vmatpush1.bf16.msra.mxu0 0
    %877 = vmatprep.subr.bf16.mxu0 0
    %878 = vmatpush1.bf16.msra.mxu0 0
    %879 = vmatprep.subr.bf16.mxu0 0
    %880 = vmatpush1.bf16.msra.mxu0 0
    %881 = vmatprep.subr.bf16.mxu0 0
    %882 = vmatpush1.bf16.msra.mxu0 0
    %883 = vmatprep.subr.bf16.mxu0 0
    %884 = vmatpush1.bf16.msra.mxu0 0
    %885 = vmatprep.subr.bf16.mxu0 0
    %886 = vmatpush1.bf16.msra.mxu0 0
    %887 = vmatprep.subr.bf16.mxu0 0
    %888 = vmatpush1.bf16.msra.mxu0 0
    %889 = vmatprep.subr.bf16.mxu0 0
    %890 = vmatpush1.bf16.msra.mxu0 0
    %891 = vmatprep.subr.bf16.mxu0 0
    %892 = vmatpush1.bf16.msra.mxu0 0
    %893 = vmatprep.subr.bf16.mxu0 0
    %894 = vmatpush1.bf16.msra.mxu0 0
    %895 = vmatprep.subr.bf16.mxu0 0
    %896 = vmatpush1.bf16.msra.mxu0 0
    %897 = vmatprep.subr.bf16.mxu0 0
    %898 = vmatpush1.bf16.msra.mxu0 0
    %899 = vmatprep.mubr.bf16.mxu0 0
    %900 = vmatmul.mubr.bf16.gmra.mrb[0].mxu0 %v824
    %v901 = vpop.f32.mrb[0].mxu0
    %v902 = vadd.f32 %v92, %v901
    %v903 = vpop.f32.mrb[0].mxu0
    %v904 = vpop.f32.mrb[0].mxu0
    %v905 = vpop.f32.mrb[0].mxu0
    %906 = vdwg.mxu0
    %907 = vmatprep.subr.bf16.mxu0 %v279
    %908 = vmatpush1.bf16.msra.mxu0 %v278
    %909 = vmatprep.subr.bf16.mxu0 %v282
    %910 = vmatpush1.bf16.msra.mxu0 %v281
    %911 = vmatprep.subr.bf16.mxu0 %v285
    %912 = vmatpush1.bf16.msra.mxu0 %v284
    %913 = vmatprep.subr.bf16.mxu0 %v288
    %914 = vmatpush1.bf16.msra.mxu0 %v287
    %915 = vmatprep.subr.bf16.mxu0 %v291
    %916 = vmatpush1.bf16.msra.mxu0 %v290
    %917 = vmatprep.subr.bf16.mxu0 %v294
    %918 = vmatpush1.bf16.msra.mxu0 %v293
    %919 = vmatprep.subr.bf16.mxu0 %v297
    %920 = vmatpush1.bf16.msra.mxu0 %v296
    %921 = vmatprep.subr.bf16.mxu0 %v300
    %922 = vmatpush1.bf16.msra.mxu0 %v299
    %923 = vmatprep.subr.bf16.mxu0 0
    %924 = vmatpush1.bf16.msra.mxu0 0
    %925 = vmatprep.subr.bf16.mxu0 0
    %926 = vmatpush1.bf16.msra.mxu0 0
    %927 = vmatprep.subr.bf16.mxu0 0
    %928 = vmatpush1.bf16.msra.mxu0 0
    %929 = vmatprep.subr.bf16.mxu0 0
    %930 = vmatpush1.bf16.msra.mxu0 0
    %931 = vmatprep.subr.bf16.mxu0 0
    %932 = vmatpush1.bf16.msra.mxu0 0
    %933 = vmatprep.subr.bf16.mxu0 0
    %934 = vmatpush1.bf16.msra.mxu0 0
    %935 = vmatprep.subr.bf16.mxu0 0
    %936 = vmatpush1.bf16.msra.mxu0 0
    %937 = vmatprep.subr.bf16.mxu0 0
    %938 = vmatpush1.bf16.msra.mxu0 0
    %939 = vmatprep.mubr.bf16.mxu0 0
    %940 = vmatmul.mubr.bf16.gmra.mrb[0].mxu0 %v818
    %v941 = vpop.f32.mrb[0].mxu0
    %v942 = vadd.f32 0.0, %v941
    %v943 = vpop.f32.mrb[0].mxu0
    %v944 = vadd.f32 0.0, %v943
    %v945 = vpop.f32.mrb[0].mxu0
    %v946 = vpop.f32.mrb[0].mxu0
    %947 = vdwg.mxu0
    %948 = vmatprep.subr.bf16.mxu0 0
    %949 = vmatpush1.bf16.msra.mxu0 %v280
    %950 = vmatprep.subr.bf16.mxu0 0
    %951 = vmatpush1.bf16.msra.mxu0 %v283
    %952 = vmatprep.subr.bf16.mxu0 0
    %953 = vmatpush1.bf16.msra.mxu0 %v286
    %954 = vmatprep.subr.bf16.mxu0 0
    %955 = vmatpush1.bf16.msra.mxu0 %v289
    %956 = vmatprep.subr.bf16.mxu0 0
    %957 = vmatpush1.bf16.msra.mxu0 %v292
    %958 = vmatprep.subr.bf16.mxu0 0
    %959 = vmatpush1.bf16.msra.mxu0 %v295
    %960 = vmatprep.subr.bf16.mxu0 0
    %961 = vmatpush1.bf16.msra.mxu0 %v298
    %962 = vmatprep.subr.bf16.mxu0 0
    %963 = vmatpush1.bf16.msra.mxu0 %v301
    %964 = vmatprep.subr.bf16.mxu0 0
    %965 = vmatpush1.bf16.msra.mxu0 0
    %966 = vmatprep.subr.bf16.mxu0 0
    %967 = vmatpush1.bf16.msra.mxu0 0
    %968 = vmatprep.subr.bf16.mxu0 0
    %969 = vmatpush1.bf16.msra.mxu0 0
    %970 = vmatprep.subr.bf16.mxu0 0
    %971 = vmatpush1.bf16.msra.mxu0 0
    %972 = vmatprep.subr.bf16.mxu0 0
    %973 = vmatpush1.bf16.msra.mxu0 0
    %974 = vmatprep.subr.bf16.mxu0 0
    %975 = vmatpush1.bf16.msra.mxu0 0
    %976 = vmatprep.subr.bf16.mxu0 0
    %977 = vmatpush1.bf16.msra.mxu0 0
    %978 = vmatprep.subr.bf16.mxu0 0
    %979 = vmatpush1.bf16.msra.mxu0 0
    %980 = vmatprep.mubr.bf16.mxu0 0
    %981 = vmatmul.mubr.bf16.gmra.mrb[0].mxu0 %v818
    %v982 = vpop.f32.mrb[0].mxu0
    %v983 = vadd.f32 0.0, %v982
    %v984 = vpop.f32.mrb[0].mxu0
    %v985 = vpop.f32.mrb[0].mxu0
    %v986 = vpop.f32.mrb[0].mxu0
    %987 = vdwg.mxu0
    %v988 = vadd.f32 %v861, %v942
    %v989 = vxor.u32 %v988, 2147483648
    %v990 = vmul.f32 %v989, 1.442695
    %v991 = vpow.pop %v990
    %v992 = vadd.f32 %v991, 1.0
    %v993 = vrcp.pop %v992
    %v994 = vmul.f32 1.0, %v993
    %v995 = vadd.f32 %v863, %v944
    %v996 = vxor.u32 %v995, 2147483648
    %v997 = vmul.f32 %v996, 1.442695
    %v998 = vpow.pop %v997
    %v999 = vadd.f32 %v998, 1.0
    %v1000 = vrcp.pop %v999
    %v1001 = vmul.f32 1.0, %v1000
    %v1002 = vadd.f32 %v983, %v425
    %v1003 = vmul.f32 %v994, %v1002
    %v1004 = vadd.f32 %v902, %v1003
    %v1005 = vtanh.pop %v1004
    %v1006 = vsub.f32 1.0, %v1001
    %v1007 = vmul.f32 %v1006, %v1005
    %v1008 = vmul.f32 %v1001, %v817
    %v1009 = vadd.f32 %v1007, %v1008
    %v1010 = vpack.c.bf16 %v1009, %v1009
    %s1011 = scalar_lea.vmem %s5, 12
    %1012 = vst [vmem:[%s1011] sm:$0xf] %v1010
    %s1013 = scalar_lea.vmem %s0, 16
    %v1014 = vld [vmem:[%s1013] sm:$0xf]
    %v1016 = vsel %vm112, %v1014, 0
    %1018 = vmatprep.subr.bf16.mxu0 %v107
    %1019 = vmatpush1.bf16.msra.mxu0 %v106
    %1020 = vmatprep.subr.bf16.mxu0 0
    %1021 = vmatpush1.bf16.msra.mxu0 0
    %1022 = vmatprep.subr.bf16.mxu0 0
    %1023 = vmatpush1.bf16.msra.mxu0 0
    %1024 = vmatprep.subr.bf16.mxu0 0
    %1025 = vmatpush1.bf16.msra.mxu0 0
    %1026 = vmatprep.subr.bf16.mxu0 0
    %1027 = vmatpush1.bf16.msra.mxu0 0
    %1028 = vmatprep.subr.bf16.mxu0 0
    %1029 = vmatpush1.bf16.msra.mxu0 0
    %1030 = vmatprep.subr.bf16.mxu0 0
    %1031 = vmatpush1.bf16.msra.mxu0 0
    %1032 = vmatprep.subr.bf16.mxu0 0
    %1033 = vmatpush1.bf16.msra.mxu0 0
    %1034 = vmatprep.subr.bf16.mxu0 0
    %1035 = vmatpush1.bf16.msra.mxu0 0
    %1036 = vmatprep.subr.bf16.mxu0 0
    %1037 = vmatpush1.bf16.msra.mxu0 0
    %1038 = vmatprep.subr.bf16.mxu0 0
    %1039 = vmatpush1.bf16.msra.mxu0 0
    %1040 = vmatprep.subr.bf16.mxu0 0
    %1041 = vmatpush1.bf16.msra.mxu0 0
    %1042 = vmatprep.subr.bf16.mxu0 0
    %1043 = vmatpush1.bf16.msra.mxu0 0
    %1044 = vmatprep.subr.bf16.mxu0 0
    %1045 = vmatpush1.bf16.msra.mxu0 0
    %1046 = vmatprep.subr.bf16.mxu0 0
    %1047 = vmatpush1.bf16.msra.mxu0 0
    %1048 = vmatprep.subr.bf16.mxu0 0
    %1049 = vmatpush1.bf16.msra.mxu0 0
    %1050 = vmatprep.mubr.bf16.mxu0 0
    %1051 = vmatmul.mubr.bf16.gmra.mrb[0].mxu0 %v1016
    %v1052 = vpop.f32.mrb[0].mxu0
    %v1053 = vadd.f32 %v84, %v1052
    %v1054 = vpop.f32.mrb[0].mxu0
    %v1055 = vadd.f32 %v88, %v1054
    %v1056 = vpop.f32.mrb[0].mxu0
    %v1057 = vpop.f32.mrb[0].mxu0
    %1058 = vdwg.mxu0
    %1059 = vmatprep.subr.bf16.mxu0 0
    %1060 = vmatpush1.bf16.msra.mxu0 %v108
    %1061 = vmatprep.subr.bf16.mxu0 0
    %1062 = vmatpush1.bf16.msra.mxu0 0
    %1063 = vmatprep.subr.bf16.mxu0 0
    %1064 = vmatpush1.bf16.msra.mxu0 0
    %1065 = vmatprep.subr.bf16.mxu0 0
    %1066 = vmatpush1.bf16.msra.mxu0 0
    %1067 = vmatprep.subr.bf16.mxu0 0
    %1068 = vmatpush1.bf16.msra.mxu0 0
    %1069 = vmatprep.subr.bf16.mxu0 0
    %1070 = vmatpush1.bf16.msra.mxu0 0
    %1071 = vmatprep.subr.bf16.mxu0 0
    %1072 = vmatpush1.bf16.msra.mxu0 0
    %1073 = vmatprep.subr.bf16.mxu0 0
    %1074 = vmatpush1.bf16.msra.mxu0 0
    %1075 = vmatprep.subr.bf16.mxu0 0
    %1076 = vmatpush1.bf16.msra.mxu0 0
    %1077 = vmatprep.subr.bf16.mxu0 0
    %1078 = vmatpush1.bf16.msra.mxu0 0
    %1079 = vmatprep.subr.bf16.mxu0 0
    %1080 = vmatpush1.bf16.msra.mxu0 0
    %1081 = vmatprep.subr.bf16.mxu0 0
    %1082 = vmatpush1.bf16.msra.mxu0 0
    %1083 = vmatprep.subr.bf16.mxu0 0
    %1084 = vmatpush1.bf16.msra.mxu0 0
    %1085 = vmatprep.subr.bf16.mxu0 0
    %1086 = vmatpush1.bf16.msra.mxu0 0
    %1087 = vmatprep.subr.bf16.mxu0 0
    %1088 = vmatpush1.bf16.msra.mxu0 0
    %1089 = vmatprep.subr.bf16.mxu0 0
    %1090 = vmatpush1.bf16.msra.mxu0 0
    %1091 = vmatprep.mubr.bf16.mxu0 0
    %1092 = vmatmul.mubr.bf16.gmra.mrb[0].mxu0 %v1016
    %v1093 = vpop.f32.mrb[0].mxu0
    %v1094 = vadd.f32 %v92, %v1093
    %v1095 = vpop.f32.mrb[0].mxu0
    %v1096 = vpop.f32.mrb[0].mxu0
    %v1097 = vpop.f32.mrb[0].mxu0
    %1098 = vdwg.mxu0
    %1099 = vmatprep.subr.bf16.mxu0 %v279
    %1100 = vmatpush1.bf16.msra.mxu0 %v278
    %1101 = vmatprep.subr.bf16.mxu0 %v282
    %1102 = vmatpush1.bf16.msra.mxu0 %v281
    %1103 = vmatprep.subr.bf16.mxu0 %v285
    %1104 = vmatpush1.bf16.msra.mxu0 %v284
    %1105 = vmatprep.subr.bf16.mxu0 %v288
    %1106 = vmatpush1.bf16.msra.mxu0 %v287
    %1107 = vmatprep.subr.bf16.mxu0 %v291
    %1108 = vmatpush1.bf16.msra.mxu0 %v290
    %1109 = vmatprep.subr.bf16.mxu0 %v294
    %1110 = vmatpush1.bf16.msra.mxu0 %v293
    %1111 = vmatprep.subr.bf16.mxu0 %v297
    %1112 = vmatpush1.bf16.msra.mxu0 %v296
    %1113 = vmatprep.subr.bf16.mxu0 %v300
    %1114 = vmatpush1.bf16.msra.mxu0 %v299
    %1115 = vmatprep.subr.bf16.mxu0 0
    %1116 = vmatpush1.bf16.msra.mxu0 0
    %1117 = vmatprep.subr.bf16.mxu0 0
    %1118 = vmatpush1.bf16.msra.mxu0 0
    %1119 = vmatprep.subr.bf16.mxu0 0
    %1120 = vmatpush1.bf16.msra.mxu0 0
    %1121 = vmatprep.subr.bf16.mxu0 0
    %1122 = vmatpush1.bf16.msra.mxu0 0
    %1123 = vmatprep.subr.bf16.mxu0 0
    %1124 = vmatpush1.bf16.msra.mxu0 0
    %1125 = vmatprep.subr.bf16.mxu0 0
    %1126 = vmatpush1.bf16.msra.mxu0 0
    %1127 = vmatprep.subr.bf16.mxu0 0
    %1128 = vmatpush1.bf16.msra.mxu0 0
    %1129 = vmatprep.subr.bf16.mxu0 0
    %1130 = vmatpush1.bf16.msra.mxu0 0
    %1131 = vmatprep.mubr.bf16.mxu0 0
    %1132 = vmatmul.mubr.bf16.gmra.mrb[0].mxu0 %v1010
    %v1133 = vpop.f32.mrb[0].mxu0
    %v1134 = vadd.f32 0.0, %v1133
    %v1135 = vpop.f32.mrb[0].mxu0
    %v1136 = vadd.f32 0.0, %v1135
    %v1137 = vpop.f32.mrb[0].mxu0
    %v1138 = vpop.f32.mrb[0].mxu0
    %1139 = vdwg.mxu0
    %1140 = vmatprep.subr.bf16.mxu0 0
    %1141 = vmatpush1.bf16.msra.mxu0 %v280
    %1142 = vmatprep.subr.bf16.mxu0 0
    %1143 = vmatpush1.bf16.msra.mxu0 %v283
    %1144 = vmatprep.subr.bf16.mxu0 0
    %1145 = vmatpush1.bf16.msra.mxu0 %v286
    %1146 = vmatprep.subr.bf16.mxu0 0
    %1147 = vmatpush1.bf16.msra.mxu0 %v289
    %1148 = vmatprep.subr.bf16.mxu0 0
    %1149 = vmatpush1.bf16.msra.mxu0 %v292
    %1150 = vmatprep.subr.bf16.mxu0 0
    %1151 = vmatpush1.bf16.msra.mxu0 %v295
    %1152 = vmatprep.subr.bf16.mxu0 0
    %1153 = vmatpush1.bf16.msra.mxu0 %v298
    %1154 = vmatprep.subr.bf16.mxu0 0
    %1155 = vmatpush1.bf16.msra.mxu0 %v301
    %1156 = vmatprep.subr.bf16.mxu0 0
    %1157 = vmatpush1.bf16.msra.mxu0 0
    %1158 = vmatprep.subr.bf16.mxu0 0
    %1159 = vmatpush1.bf16.msra.mxu0 0
    %1160 = vmatprep.subr.bf16.mxu0 0
    %1161 = vmatpush1.bf16.msra.mxu0 0
    %1162 = vmatprep.subr.bf16.mxu0 0
    %1163 = vmatpush1.bf16.msra.mxu0 0
    %1164 = vmatprep.subr.bf16.mxu0 0
    %1165 = vmatpush1.bf16.msra.mxu0 0
    %1166 = vmatprep.subr.bf16.mxu0 0
    %1167 = vmatpush1.bf16.msra.mxu0 0
    %1168 = vmatprep.subr.bf16.mxu0 0
    %1169 = vmatpush1.bf16.msra.mxu0 0
    %1170 = vmatprep.subr.bf16.mxu0 0
    %1171 = vmatpush1.bf16.msra.mxu0 0
    %1172 = vmatprep.mubr.bf16.mxu0 0
    %1173 = vmatmul.mubr.bf16.gmra.mrb[0].mxu0 %v1010
    %v1174 = vpop.f32.mrb[0].mxu0
    %v1175 = vadd.f32 0.0, %v1174
    %v1176 = vpop.f32.mrb[0].mxu0
    %v1177 = vpop.f32.mrb[0].mxu0
    %v1178 = vpop.f32.mrb[0].mxu0
    %1179 = vdwg.mxu0
    %v1180 = vadd.f32 %v1053, %v1134
    %v1181 = vxor.u32 %v1180, 2147483648
    %v1182 = vmul.f32 %v1181, 1.442695
    %v1183 = vpow.pop %v1182
    %v1184 = vadd.f32 %v1183, 1.0
    %v1185 = vrcp.pop %v1184
    %v1186 = vmul.f32 1.0, %v1185
    %v1187 = vadd.f32 %v1055, %v1136
    %v1188 = vxor.u32 %v1187, 2147483648
    %v1189 = vmul.f32 %v1188, 1.442695
    %v1190 = vpow.pop %v1189
    %v1191 = vadd.f32 %v1190, 1.0
    %v1192 = vrcp.pop %v1191
    %v1193 = vmul.f32 1.0, %v1192
    %v1194 = vadd.f32 %v1175, %v425
    %v1195 = vmul.f32 %v1186, %v1194
    %v1196 = vadd.f32 %v1094, %v1195
    %v1197 = vtanh.pop %v1196
    %v1198 = vsub.f32 1.0, %v1193
    %v1199 = vmul.f32 %v1198, %v1197
    %v1200 = vmul.f32 %v1193, %v1009
    %v1201 = vadd.f32 %v1199, %v1200
    %v1202 = vpack.c.bf16 %v1201, %v1201
    %s1203 = scalar_lea.vmem %s5, 16
    %1204 = vst [vmem:[%s1203] sm:$0xf] %v1202
    %s1205 = scalar_lea.vmem %s0, 20
    %v1206 = vld [vmem:[%s1205] sm:$0xf]
    %v1208 = vsel %vm112, %v1206, 0
    %1210 = vmatprep.subr.bf16.mxu0 %v107
    %1211 = vmatpush1.bf16.msra.mxu0 %v106
    %1212 = vmatprep.subr.bf16.mxu0 0
    %1213 = vmatpush1.bf16.msra.mxu0 0
    %1214 = vmatprep.subr.bf16.mxu0 0
    %1215 = vmatpush1.bf16.msra.mxu0 0
    %1216 = vmatprep.subr.bf16.mxu0 0
    %1217 = vmatpush1.bf16.msra.mxu0 0
    %1218 = vmatprep.subr.bf16.mxu0 0
    %1219 = vmatpush1.bf16.msra.mxu0 0
    %1220 = vmatprep.subr.bf16.mxu0 0
    %1221 = vmatpush1.bf16.msra.mxu0 0
    %1222 = vmatprep.subr.bf16.mxu0 0
    %1223 = vmatpush1.bf16.msra.mxu0 0
    %1224 = vmatprep.subr.bf16.mxu0 0
    %1225 = vmatpush1.bf16.msra.mxu0 0
    %1226 = vmatprep.subr.bf16.mxu0 0
    %1227 = vmatpush1.bf16.msra.mxu0 0
    %1228 = vmatprep.subr.bf16.mxu0 0
    %1229 = vmatpush1.bf16.msra.mxu0 0
    %1230 = vmatprep.subr.bf16.mxu0 0
    %1231 = vmatpush1.bf16.msra.mxu0 0
    %1232 = vmatprep.subr.bf16.mxu0 0
    %1233 = vmatpush1.bf16.msra.mxu0 0
    %1234 = vmatprep.subr.bf16.mxu0 0
    %1235 = vmatpush1.bf16.msra.mxu0 0
    %1236 = vmatprep.subr.bf16.mxu0 0
    %1237 = vmatpush1.bf16.msra.mxu0 0
    %1238 = vmatprep.subr.bf16.mxu0 0
    %1239 = vmatpush1.bf16.msra.mxu0 0
    %1240 = vmatprep.subr.bf16.mxu0 0
    %1241 = vmatpush1.bf16.msra.mxu0 0
    %1242 = vmatprep.mubr.bf16.mxu0 0
    %1243 = vmatmul.mubr.bf16.gmra.mrb[0].mxu0 %v1208
    %v1244 = vpop.f32.mrb[0].mxu0
    %v1245 = vadd.f32 %v84, %v1244
    %v1246 = vpop.f32.mrb[0].mxu0
    %v1247 = vadd.f32 %v88, %v1246
    %v1248 = vpop.f32.mrb[0].mxu0
    %v1249 = vpop.f32.mrb[0].mxu0
    %1250 = vdwg.mxu0
    %1251 = vmatprep.subr.bf16.mxu0 0
    %1252 = vmatpush1.bf16.msra.mxu0 %v108
    %1253 = vmatprep.subr.bf16.mxu0 0
    %1254 = vmatpush1.bf16.msra.mxu0 0
    %1255 = vmatprep.subr.bf16.mxu0 0
    %1256 = vmatpush1.bf16.msra.mxu0 0
    %1257 = vmatprep.subr.bf16.mxu0 0
    %1258 = vmatpush1.bf16.msra.mxu0 0
    %1259 = vmatprep.subr.bf16.mxu0 0
    %1260 = vmatpush1.bf16.msra.mxu0 0
    %1261 = vmatprep.subr.bf16.mxu0 0
    %1262 = vmatpush1.bf16.msra.mxu0 0
    %1263 = vmatprep.subr.bf16.mxu0 0
    %1264 = vmatpush1.bf16.msra.mxu0 0
    %1265 = vmatprep.subr.bf16.mxu0 0
    %1266 = vmatpush1.bf16.msra.mxu0 0
    %1267 = vmatprep.subr.bf16.mxu0 0
    %1268 = vmatpush1.bf16.msra.mxu0 0
    %1269 = vmatprep.subr.bf16.mxu0 0
    %1270 = vmatpush1.bf16.msra.mxu0 0
    %1271 = vmatprep.subr.bf16.mxu0 0
    %1272 = vmatpush1.bf16.msra.mxu0 0
    %1273 = vmatprep.subr.bf16.mxu0 0
    %1274 = vmatpush1.bf16.msra.mxu0 0
    %1275 = vmatprep.subr.bf16.mxu0 0
    %1276 = vmatpush1.bf16.msra.mxu0 0
    %1277 = vmatprep.subr.bf16.mxu0 0
    %1278 = vmatpush1.bf16.msra.mxu0 0
    %1279 = vmatprep.subr.bf16.mxu0 0
    %1280 = vmatpush1.bf16.msra.mxu0 0
    %1281 = vmatprep.subr.bf16.mxu0 0
    %1282 = vmatpush1.bf16.msra.mxu0 0
    %1283 = vmatprep.mubr.bf16.mxu0 0
    %1284 = vmatmul.mubr.bf16.gmra.mrb[0].mxu0 %v1208
    %v1285 = vpop.f32.mrb[0].mxu0
    %v1286 = vadd.f32 %v92, %v1285
    %v1287 = vpop.f32.mrb[0].mxu0
    %v1288 = vpop.f32.mrb[0].mxu0
    %v1289 = vpop.f32.mrb[0].mxu0
    %1290 = vdwg.mxu0
    %1291 = vmatprep.subr.bf16.mxu0 %v279
    %1292 = vmatpush1.bf16.msra.mxu0 %v278
    %1293 = vmatprep.subr.bf16.mxu0 %v282
    %1294 = vmatpush1.bf16.msra.mxu0 %v281
    %1295 = vmatprep.subr.bf16.mxu0 %v285
    %1296 = vmatpush1.bf16.msra.mxu0 %v284
    %1297 = vmatprep.subr.bf16.mxu0 %v288
    %1298 = vmatpush1.bf16.msra.mxu0 %v287
    %1299 = vmatprep.subr.bf16.mxu0 %v291
    %1300 = vmatpush1.bf16.msra.mxu0 %v290
    %1301 = vmatprep.subr.bf16.mxu0 %v294
    %1302 = vmatpush1.bf16.msra.mxu0 %v293
    %1303 = vmatprep.subr.bf16.mxu0 %v297
    %1304 = vmatpush1.bf16.msra.mxu0 %v296
    %1305 = vmatprep.subr.bf16.mxu0 %v300
    %1306 = vmatpush1.bf16.msra.mxu0 %v299
    %1307 = vmatprep.subr.bf16.mxu0 0
    %1308 = vmatpush1.bf16.msra.mxu0 0
    %1309 = vmatprep.subr.bf16.mxu0 0
    %1310 = vmatpush1.bf16.msra.mxu0 0
    %1311 = vmatprep.subr.bf16.mxu0 0
    %1312 = vmatpush1.bf16.msra.mxu0 0
    %1313 = vmatprep.subr.bf16.mxu0 0
    %1314 = vmatpush1.bf16.msra.mxu0 0
    %1315 = vmatprep.subr.bf16.mxu0 0
    %1316 = vmatpush1.bf16.msra.mxu0 0
    %1317 = vmatprep.subr.bf16.mxu0 0
    %1318 = vmatpush1.bf16.msra.mxu0 0
    %1319 = vmatprep.subr.bf16.mxu0 0
    %1320 = vmatpush1.bf16.msra.mxu0 0
    %1321 = vmatprep.subr.bf16.mxu0 0
    %1322 = vmatpush1.bf16.msra.mxu0 0
    %1323 = vmatprep.mubr.bf16.mxu0 0
    %1324 = vmatmul.mubr.bf16.gmra.mrb[0].mxu0 %v1202
    %v1325 = vpop.f32.mrb[0].mxu0
    %v1326 = vadd.f32 0.0, %v1325
    %v1327 = vpop.f32.mrb[0].mxu0
    %v1328 = vadd.f32 0.0, %v1327
    %v1329 = vpop.f32.mrb[0].mxu0
    %v1330 = vpop.f32.mrb[0].mxu0
    %1331 = vdwg.mxu0
    %1332 = vmatprep.subr.bf16.mxu0 0
    %1333 = vmatpush1.bf16.msra.mxu0 %v280
    %1334 = vmatprep.subr.bf16.mxu0 0
    %1335 = vmatpush1.bf16.msra.mxu0 %v283
    %1336 = vmatprep.subr.bf16.mxu0 0
    %1337 = vmatpush1.bf16.msra.mxu0 %v286
    %1338 = vmatprep.subr.bf16.mxu0 0
    %1339 = vmatpush1.bf16.msra.mxu0 %v289
    %1340 = vmatprep.subr.bf16.mxu0 0
    %1341 = vmatpush1.bf16.msra.mxu0 %v292
    %1342 = vmatprep.subr.bf16.mxu0 0
    %1343 = vmatpush1.bf16.msra.mxu0 %v295
    %1344 = vmatprep.subr.bf16.mxu0 0
    %1345 = vmatpush1.bf16.msra.mxu0 %v298
    %1346 = vmatprep.subr.bf16.mxu0 0
    %1347 = vmatpush1.bf16.msra.mxu0 %v301
    %1348 = vmatprep.subr.bf16.mxu0 0
    %1349 = vmatpush1.bf16.msra.mxu0 0
    %1350 = vmatprep.subr.bf16.mxu0 0
    %1351 = vmatpush1.bf16.msra.mxu0 0
    %1352 = vmatprep.subr.bf16.mxu0 0
    %1353 = vmatpush1.bf16.msra.mxu0 0
    %1354 = vmatprep.subr.bf16.mxu0 0
    %1355 = vmatpush1.bf16.msra.mxu0 0
    %1356 = vmatprep.subr.bf16.mxu0 0
    %1357 = vmatpush1.bf16.msra.mxu0 0
    %1358 = vmatprep.subr.bf16.mxu0 0
    %1359 = vmatpush1.bf16.msra.mxu0 0
    %1360 = vmatprep.subr.bf16.mxu0 0
    %1361 = vmatpush1.bf16.msra.mxu0 0
    %1362 = vmatprep.subr.bf16.mxu0 0
    %1363 = vmatpush1.bf16.msra.mxu0 0
    %1364 = vmatprep.mubr.bf16.mxu0 0
    %1365 = vmatmul.mubr.bf16.gmra.mrb[0].mxu0 %v1202
    %v1366 = vpop.f32.mrb[0].mxu0
    %v1367 = vadd.f32 0.0, %v1366
    %v1368 = vpop.f32.mrb[0].mxu0
    %v1369 = vpop.f32.mrb[0].mxu0
    %v1370 = vpop.f32.mrb[0].mxu0
    %1371 = vdwg.mxu0
    %v1372 = vadd.f32 %v1245, %v1326
    %v1373 = vxor.u32 %v1372, 2147483648
    %v1374 = vmul.f32 %v1373, 1.442695
    %v1375 = vpow.pop %v1374
    %v1376 = vadd.f32 %v1375, 1.0
    %v1377 = vrcp.pop %v1376
    %v1378 = vmul.f32 1.0, %v1377
    %v1379 = vadd.f32 %v1247, %v1328
    %v1380 = vxor.u32 %v1379, 2147483648
    %v1381 = vmul.f32 %v1380, 1.442695
    %v1382 = vpow.pop %v1381
    %v1383 = vadd.f32 %v1382, 1.0
    %v1384 = vrcp.pop %v1383
    %v1385 = vmul.f32 1.0, %v1384
    %v1386 = vadd.f32 %v1367, %v425
    %v1387 = vmul.f32 %v1378, %v1386
    %v1388 = vadd.f32 %v1286, %v1387
    %v1389 = vtanh.pop %v1388
    %v1390 = vsub.f32 1.0, %v1385
    %v1391 = vmul.f32 %v1390, %v1389
    %v1392 = vmul.f32 %v1385, %v1201
    %v1393 = vadd.f32 %v1391, %v1392
    %v1394 = vpack.c.bf16 %v1393, %v1393
    %s1395 = scalar_lea.vmem %s5, 20
    %1396 = vst [vmem:[%s1395] sm:$0xf] %v1394
    %s1397 = scalar_lea.vmem %s0, 24
    %v1398 = vld [vmem:[%s1397] sm:$0xf]
    %v1400 = vsel %vm112, %v1398, 0
    %1402 = vmatprep.subr.bf16.mxu0 %v107
    %1403 = vmatpush1.bf16.msra.mxu0 %v106
    %1404 = vmatprep.subr.bf16.mxu0 0
    %1405 = vmatpush1.bf16.msra.mxu0 0
    %1406 = vmatprep.subr.bf16.mxu0 0
    %1407 = vmatpush1.bf16.msra.mxu0 0
    %1408 = vmatprep.subr.bf16.mxu0 0
    %1409 = vmatpush1.bf16.msra.mxu0 0
    %1410 = vmatprep.subr.bf16.mxu0 0
    %1411 = vmatpush1.bf16.msra.mxu0 0
    %1412 = vmatprep.subr.bf16.mxu0 0
    %1413 = vmatpush1.bf16.msra.mxu0 0
    %1414 = vmatprep.subr.bf16.mxu0 0
    %1415 = vmatpush1.bf16.msra.mxu0 0
    %1416 = vmatprep.subr.bf16.mxu0 0
    %1417 = vmatpush1.bf16.msra.mxu0 0
    %1418 = vmatprep.subr.bf16.mxu0 0
    %1419 = vmatpush1.bf16.msra.mxu0 0
    %1420 = vmatprep.subr.bf16.mxu0 0
    %1421 = vmatpush1.bf16.msra.mxu0 0
    %1422 = vmatprep.subr.bf16.mxu0 0
    %1423 = vmatpush1.bf16.msra.mxu0 0
    %1424 = vmatprep.subr.bf16.mxu0 0
    %1425 = vmatpush1.bf16.msra.mxu0 0
    %1426 = vmatprep.subr.bf16.mxu0 0
    %1427 = vmatpush1.bf16.msra.mxu0 0
    %1428 = vmatprep.subr.bf16.mxu0 0
    %1429 = vmatpush1.bf16.msra.mxu0 0
    %1430 = vmatprep.subr.bf16.mxu0 0
    %1431 = vmatpush1.bf16.msra.mxu0 0
    %1432 = vmatprep.subr.bf16.mxu0 0
    %1433 = vmatpush1.bf16.msra.mxu0 0
    %1434 = vmatprep.mubr.bf16.mxu0 0
    %1435 = vmatmul.mubr.bf16.gmra.mrb[0].mxu0 %v1400
    %v1436 = vpop.f32.mrb[0].mxu0
    %v1437 = vadd.f32 %v84, %v1436
    %v1438 = vpop.f32.mrb[0].mxu0
    %v1439 = vadd.f32 %v88, %v1438
    %v1440 = vpop.f32.mrb[0].mxu0
    %v1441 = vpop.f32.mrb[0].mxu0
    %1442 = vdwg.mxu0
    %1443 = vmatprep.subr.bf16.mxu0 0
    %1444 = vmatpush1.bf16.msra.mxu0 %v108
    %1445 = vmatprep.subr.bf16.mxu0 0
    %1446 = vmatpush1.bf16.msra.mxu0 0
    %1447 = vmatprep.subr.bf16.mxu0 0
    %1448 = vmatpush1.bf16.msra.mxu0 0
    %1449 = vmatprep.subr.bf16.mxu0 0
    %1450 = vmatpush1.bf16.msra.mxu0 0
    %1451 = vmatprep.subr.bf16.mxu0 0
    %1452 = vmatpush1.bf16.msra.mxu0 0
    %1453 = vmatprep.subr.bf16.mxu0 0
    %1454 = vmatpush1.bf16.msra.mxu0 0
    %1455 = vmatprep.subr.bf16.mxu0 0
    %1456 = vmatpush1.bf16.msra.mxu0 0
    %1457 = vmatprep.subr.bf16.mxu0 0
    %1458 = vmatpush1.bf16.msra.mxu0 0
    %1459 = vmatprep.subr.bf16.mxu0 0
    %1460 = vmatpush1.bf16.msra.mxu0 0
    %1461 = vmatprep.subr.bf16.mxu0 0
    %1462 = vmatpush1.bf16.msra.mxu0 0
    %1463 = vmatprep.subr.bf16.mxu0 0
    %1464 = vmatpush1.bf16.msra.mxu0 0
    %1465 = vmatprep.subr.bf16.mxu0 0
    %1466 = vmatpush1.bf16.msra.mxu0 0
    %1467 = vmatprep.subr.bf16.mxu0 0
    %1468 = vmatpush1.bf16.msra.mxu0 0
    %1469 = vmatprep.subr.bf16.mxu0 0
    %1470 = vmatpush1.bf16.msra.mxu0 0
    %1471 = vmatprep.subr.bf16.mxu0 0
    %1472 = vmatpush1.bf16.msra.mxu0 0
    %1473 = vmatprep.subr.bf16.mxu0 0
    %1474 = vmatpush1.bf16.msra.mxu0 0
    %1475 = vmatprep.mubr.bf16.mxu0 0
    %1476 = vmatmul.mubr.bf16.gmra.mrb[0].mxu0 %v1400
    %v1477 = vpop.f32.mrb[0].mxu0
    %v1478 = vadd.f32 %v92, %v1477
    %v1479 = vpop.f32.mrb[0].mxu0
    %v1480 = vpop.f32.mrb[0].mxu0
    %v1481 = vpop.f32.mrb[0].mxu0
    %1482 = vdwg.mxu0
    %1483 = vmatprep.subr.bf16.mxu0 %v279
    %1484 = vmatpush1.bf16.msra.mxu0 %v278
    %1485 = vmatprep.subr.bf16.mxu0 %v282
    %1486 = vmatpush1.bf16.msra.mxu0 %v281
    %1487 = vmatprep.subr.bf16.mxu0 %v285
    %1488 = vmatpush1.bf16.msra.mxu0 %v284
    %1489 = vmatprep.subr.bf16.mxu0 %v288
    %1490 = vmatpush1.bf16.msra.mxu0 %v287
    %1491 = vmatprep.subr.bf16.mxu0 %v291
    %1492 = vmatpush1.bf16.msra.mxu0 %v290
    %1493 = vmatprep.subr.bf16.mxu0 %v294
    %1494 = vmatpush1.bf16.msra.mxu0 %v293
    %1495 = vmatprep.subr.bf16.mxu0 %v297
    %1496 = vmatpush1.bf16.msra.mxu0 %v296
    %1497 = vmatprep.subr.bf16.mxu0 %v300
    %1498 = vmatpush1.bf16.msra.mxu0 %v299
    %1499 = vmatprep.subr.bf16.mxu0 0
    %1500 = vmatpush1.bf16.msra.mxu0 0
    %1501 = vmatprep.subr.bf16.mxu0 0
    %1502 = vmatpush1.bf16.msra.mxu0 0
    %1503 = vmatprep.subr.bf16.mxu0 0
    %1504 = vmatpush1.bf16.msra.mxu0 0
    %1505 = vmatprep.subr.bf16.mxu0 0
    %1506 = vmatpush1.bf16.msra.mxu0 0
    %1507 = vmatprep.subr.bf16.mxu0 0
    %1508 = vmatpush1.bf16.msra.mxu0 0
    %1509 = vmatprep.subr.bf16.mxu0 0
    %1510 = vmatpush1.bf16.msra.mxu0 0
    %1511 = vmatprep.subr.bf16.mxu0 0
    %1512 = vmatpush1.bf16.msra.mxu0 0
    %1513 = vmatprep.subr.bf16.mxu0 0
    %1514 = vmatpush1.bf16.msra.mxu0 0
    %1515 = vmatprep.mubr.bf16.mxu0 0
    %1516 = vmatmul.mubr.bf16.gmra.mrb[0].mxu0 %v1394
    %v1517 = vpop.f32.mrb[0].mxu0
    %v1518 = vadd.f32 0.0, %v1517
    %v1519 = vpop.f32.mrb[0].mxu0
    %v1520 = vadd.f32 0.0, %v1519
    %v1521 = vpop.f32.mrb[0].mxu0
    %v1522 = vpop.f32.mrb[0].mxu0
    %1523 = vdwg.mxu0
    %1524 = vmatprep.subr.bf16.mxu0 0
    %1525 = vmatpush1.bf16.msra.mxu0 %v280
    %1526 = vmatprep.subr.bf16.mxu0 0
    %1527 = vmatpush1.bf16.msra.mxu0 %v283
    %1528 = vmatprep.subr.bf16.mxu0 0
    %1529 = vmatpush1.bf16.msra.mxu0 %v286
    %1530 = vmatprep.subr.bf16.mxu0 0
    %1531 = vmatpush1.bf16.msra.mxu0 %v289
    %1532 = vmatprep.subr.bf16.mxu0 0
    %1533 = vmatpush1.bf16.msra.mxu0 %v292
    %1534 = vmatprep.subr.bf16.mxu0 0
    %1535 = vmatpush1.bf16.msra.mxu0 %v295
    %1536 = vmatprep.subr.bf16.mxu0 0
    %1537 = vmatpush1.bf16.msra.mxu0 %v298
    %1538 = vmatprep.subr.bf16.mxu0 0
    %1539 = vmatpush1.bf16.msra.mxu0 %v301
    %1540 = vmatprep.subr.bf16.mxu0 0
    %1541 = vmatpush1.bf16.msra.mxu0 0
    %1542 = vmatprep.subr.bf16.mxu0 0
    %1543 = vmatpush1.bf16.msra.mxu0 0
    %1544 = vmatprep.subr.bf16.mxu0 0
    %1545 = vmatpush1.bf16.msra.mxu0 0
    %1546 = vmatprep.subr.bf16.mxu0 0
    %1547 = vmatpush1.bf16.msra.mxu0 0
    %1548 = vmatprep.subr.bf16.mxu0 0
    %1549 = vmatpush1.bf16.msra.mxu0 0
    %1550 = vmatprep.subr.bf16.mxu0 0
    %1551 = vmatpush1.bf16.msra.mxu0 0
    %1552 = vmatprep.subr.bf16.mxu0 0
    %1553 = vmatpush1.bf16.msra.mxu0 0
    %1554 = vmatprep.subr.bf16.mxu0 0
    %1555 = vmatpush1.bf16.msra.mxu0 0
    %1556 = vmatprep.mubr.bf16.mxu0 0
    %1557 = vmatmul.mubr.bf16.gmra.mrb[0].mxu0 %v1394
    %v1558 = vpop.f32.mrb[0].mxu0
    %v1559 = vadd.f32 0.0, %v1558
    %v1560 = vpop.f32.mrb[0].mxu0
    %v1561 = vpop.f32.mrb[0].mxu0
    %v1562 = vpop.f32.mrb[0].mxu0
    %1563 = vdwg.mxu0
    %v1564 = vadd.f32 %v1437, %v1518
    %v1565 = vxor.u32 %v1564, 2147483648
    %v1566 = vmul.f32 %v1565, 1.442695
    %v1567 = vpow.pop %v1566
    %v1568 = vadd.f32 %v1567, 1.0
    %v1569 = vrcp.pop %v1568
    %v1570 = vmul.f32 1.0, %v1569
    %v1571 = vadd.f32 %v1439, %v1520
    %v1572 = vxor.u32 %v1571, 2147483648
    %v1573 = vmul.f32 %v1572, 1.442695
    %v1574 = vpow.pop %v1573
    %v1575 = vadd.f32 %v1574, 1.0
    %v1576 = vrcp.pop %v1575
    %v1577 = vmul.f32 1.0, %v1576
    %v1578 = vadd.f32 %v1559, %v425
    %v1579 = vmul.f32 %v1570, %v1578
    %v1580 = vadd.f32 %v1478, %v1579
    %v1581 = vtanh.pop %v1580
    %v1582 = vsub.f32 1.0, %v1577
    %v1583 = vmul.f32 %v1582, %v1581
    %v1584 = vmul.f32 %v1577, %v1393
    %v1585 = vadd.f32 %v1583, %v1584
    %v1586 = vpack.c.bf16 %v1585, %v1585
    %s1587 = scalar_lea.vmem %s5, 24
    %1588 = vst [vmem:[%s1587] sm:$0xf] %v1586
    %s1589 = scalar_lea.vmem %s0, 28
    %v1590 = vld [vmem:[%s1589] sm:$0xf]
    %v1592 = vsel %vm112, %v1590, 0
    %1594 = vmatprep.subr.bf16.mxu0 %v107
    %1595 = vmatpush1.bf16.msra.mxu0 %v106
    %1596 = vmatprep.subr.bf16.mxu0 0
    %1597 = vmatpush1.bf16.msra.mxu0 0
    %1598 = vmatprep.subr.bf16.mxu0 0
    %1599 = vmatpush1.bf16.msra.mxu0 0
    %1600 = vmatprep.subr.bf16.mxu0 0
    %1601 = vmatpush1.bf16.msra.mxu0 0
    %1602 = vmatprep.subr.bf16.mxu0 0
    %1603 = vmatpush1.bf16.msra.mxu0 0
    %1604 = vmatprep.subr.bf16.mxu0 0
    %1605 = vmatpush1.bf16.msra.mxu0 0
    %1606 = vmatprep.subr.bf16.mxu0 0
    %1607 = vmatpush1.bf16.msra.mxu0 0
    %1608 = vmatprep.subr.bf16.mxu0 0
    %1609 = vmatpush1.bf16.msra.mxu0 0
    %1610 = vmatprep.subr.bf16.mxu0 0
    %1611 = vmatpush1.bf16.msra.mxu0 0
    %1612 = vmatprep.subr.bf16.mxu0 0
    %1613 = vmatpush1.bf16.msra.mxu0 0
    %1614 = vmatprep.subr.bf16.mxu0 0
    %1615 = vmatpush1.bf16.msra.mxu0 0
    %1616 = vmatprep.subr.bf16.mxu0 0
    %1617 = vmatpush1.bf16.msra.mxu0 0
    %1618 = vmatprep.subr.bf16.mxu0 0
    %1619 = vmatpush1.bf16.msra.mxu0 0
    %1620 = vmatprep.subr.bf16.mxu0 0
    %1621 = vmatpush1.bf16.msra.mxu0 0
    %1622 = vmatprep.subr.bf16.mxu0 0
    %1623 = vmatpush1.bf16.msra.mxu0 0
    %1624 = vmatprep.subr.bf16.mxu0 0
    %1625 = vmatpush1.bf16.msra.mxu0 0
    %1626 = vmatprep.mubr.bf16.mxu0 0
    %1627 = vmatmul.mubr.bf16.gmra.mrb[0].mxu0 %v1592
    %v1628 = vpop.f32.mrb[0].mxu0
    %v1629 = vadd.f32 %v84, %v1628
    %v1630 = vpop.f32.mrb[0].mxu0
    %v1631 = vadd.f32 %v88, %v1630
    %v1632 = vpop.f32.mrb[0].mxu0
    %v1633 = vpop.f32.mrb[0].mxu0
    %1634 = vdwg.mxu0
    %1635 = vmatprep.subr.bf16.mxu0 0
    %1636 = vmatpush1.bf16.msra.mxu0 %v108
    %1637 = vmatprep.subr.bf16.mxu0 0
    %1638 = vmatpush1.bf16.msra.mxu0 0
    %1639 = vmatprep.subr.bf16.mxu0 0
    %1640 = vmatpush1.bf16.msra.mxu0 0
    %1641 = vmatprep.subr.bf16.mxu0 0
    %1642 = vmatpush1.bf16.msra.mxu0 0
    %1643 = vmatprep.subr.bf16.mxu0 0
    %1644 = vmatpush1.bf16.msra.mxu0 0
    %1645 = vmatprep.subr.bf16.mxu0 0
    %1646 = vmatpush1.bf16.msra.mxu0 0
    %1647 = vmatprep.subr.bf16.mxu0 0
    %1648 = vmatpush1.bf16.msra.mxu0 0
    %1649 = vmatprep.subr.bf16.mxu0 0
    %1650 = vmatpush1.bf16.msra.mxu0 0
    %1651 = vmatprep.subr.bf16.mxu0 0
    %1652 = vmatpush1.bf16.msra.mxu0 0
    %1653 = vmatprep.subr.bf16.mxu0 0
    %1654 = vmatpush1.bf16.msra.mxu0 0
    %1655 = vmatprep.subr.bf16.mxu0 0
    %1656 = vmatpush1.bf16.msra.mxu0 0
    %1657 = vmatprep.subr.bf16.mxu0 0
    %1658 = vmatpush1.bf16.msra.mxu0 0
    %1659 = vmatprep.subr.bf16.mxu0 0
    %1660 = vmatpush1.bf16.msra.mxu0 0
    %1661 = vmatprep.subr.bf16.mxu0 0
    %1662 = vmatpush1.bf16.msra.mxu0 0
    %1663 = vmatprep.subr.bf16.mxu0 0
    %1664 = vmatpush1.bf16.msra.mxu0 0
    %1665 = vmatprep.subr.bf16.mxu0 0
    %1666 = vmatpush1.bf16.msra.mxu0 0
    %1667 = vmatprep.mubr.bf16.mxu0 0
    %1668 = vmatmul.mubr.bf16.gmra.mrb[0].mxu0 %v1592
    %v1669 = vpop.f32.mrb[0].mxu0
    %v1670 = vadd.f32 %v92, %v1669
    %v1671 = vpop.f32.mrb[0].mxu0
    %v1672 = vpop.f32.mrb[0].mxu0
    %v1673 = vpop.f32.mrb[0].mxu0
    %1674 = vdwg.mxu0
    %1675 = vmatprep.subr.bf16.mxu0 %v279
    %1676 = vmatpush1.bf16.msra.mxu0 %v278
    %1677 = vmatprep.subr.bf16.mxu0 %v282
    %1678 = vmatpush1.bf16.msra.mxu0 %v281
    %1679 = vmatprep.subr.bf16.mxu0 %v285
    %1680 = vmatpush1.bf16.msra.mxu0 %v284
    %1681 = vmatprep.subr.bf16.mxu0 %v288
    %1682 = vmatpush1.bf16.msra.mxu0 %v287
    %1683 = vmatprep.subr.bf16.mxu0 %v291
    %1684 = vmatpush1.bf16.msra.mxu0 %v290
    %1685 = vmatprep.subr.bf16.mxu0 %v294
    %1686 = vmatpush1.bf16.msra.mxu0 %v293
    %1687 = vmatprep.subr.bf16.mxu0 %v297
    %1688 = vmatpush1.bf16.msra.mxu0 %v296
    %1689 = vmatprep.subr.bf16.mxu0 %v300
    %1690 = vmatpush1.bf16.msra.mxu0 %v299
    %1691 = vmatprep.subr.bf16.mxu0 0
    %1692 = vmatpush1.bf16.msra.mxu0 0
    %1693 = vmatprep.subr.bf16.mxu0 0
    %1694 = vmatpush1.bf16.msra.mxu0 0
    %1695 = vmatprep.subr.bf16.mxu0 0
    %1696 = vmatpush1.bf16.msra.mxu0 0
    %1697 = vmatprep.subr.bf16.mxu0 0
    %1698 = vmatpush1.bf16.msra.mxu0 0
    %1699 = vmatprep.subr.bf16.mxu0 0
    %1700 = vmatpush1.bf16.msra.mxu0 0
    %1701 = vmatprep.subr.bf16.mxu0 0
    %1702 = vmatpush1.bf16.msra.mxu0 0
    %1703 = vmatprep.subr.bf16.mxu0 0
    %1704 = vmatpush1.bf16.msra.mxu0 0
    %1705 = vmatprep.subr.bf16.mxu0 0
    %1706 = vmatpush1.bf16.msra.mxu0 0
    %1707 = vmatprep.mubr.bf16.mxu0 0
    %1708 = vmatmul.mubr.bf16.gmra.mrb[0].mxu0 %v1586
    %v1709 = vpop.f32.mrb[0].mxu0
    %v1710 = vadd.f32 0.0, %v1709
    %v1711 = vpop.f32.mrb[0].mxu0
    %v1712 = vadd.f32 0.0, %v1711
    %v1713 = vpop.f32.mrb[0].mxu0
    %v1714 = vpop.f32.mrb[0].mxu0
    %1715 = vdwg.mxu0
    %1716 = vmatprep.subr.bf16.mxu0 0
    %1717 = vmatpush1.bf16.msra.mxu0 %v280
    %1718 = vmatprep.subr.bf16.mxu0 0
    %1719 = vmatpush1.bf16.msra.mxu0 %v283
    %1720 = vmatprep.subr.bf16.mxu0 0
    %1721 = vmatpush1.bf16.msra.mxu0 %v286
    %1722 = vmatprep.subr.bf16.mxu0 0
    %1723 = vmatpush1.bf16.msra.mxu0 %v289
    %1724 = vmatprep.subr.bf16.mxu0 0
    %1725 = vmatpush1.bf16.msra.mxu0 %v292
    %1726 = vmatprep.subr.bf16.mxu0 0
    %1727 = vmatpush1.bf16.msra.mxu0 %v295
    %1728 = vmatprep.subr.bf16.mxu0 0
    %1729 = vmatpush1.bf16.msra.mxu0 %v298
    %1730 = vmatprep.subr.bf16.mxu0 0
    %1731 = vmatpush1.bf16.msra.mxu0 %v301
    %1732 = vmatprep.subr.bf16.mxu0 0
    %1733 = vmatpush1.bf16.msra.mxu0 0
    %1734 = vmatprep.subr.bf16.mxu0 0
    %1735 = vmatpush1.bf16.msra.mxu0 0
    %1736 = vmatprep.subr.bf16.mxu0 0
    %1737 = vmatpush1.bf16.msra.mxu0 0
    %1738 = vmatprep.subr.bf16.mxu0 0
    %1739 = vmatpush1.bf16.msra.mxu0 0
    %1740 = vmatprep.subr.bf16.mxu0 0
    %1741 = vmatpush1.bf16.msra.mxu0 0
    %1742 = vmatprep.subr.bf16.mxu0 0
    %1743 = vmatpush1.bf16.msra.mxu0 0
    %1744 = vmatprep.subr.bf16.mxu0 0
    %1745 = vmatpush1.bf16.msra.mxu0 0
    %1746 = vmatprep.subr.bf16.mxu0 0
    %1747 = vmatpush1.bf16.msra.mxu0 0
    %1748 = vmatprep.mubr.bf16.mxu0 0
    %1749 = vmatmul.mubr.bf16.gmra.mrb[0].mxu0 %v1586
    %v1750 = vpop.f32.mrb[0].mxu0
    %v1751 = vadd.f32 0.0, %v1750
    %v1752 = vpop.f32.mrb[0].mxu0
    %v1753 = vpop.f32.mrb[0].mxu0
    %v1754 = vpop.f32.mrb[0].mxu0
    %1755 = vdwg.mxu0
    %v1756 = vadd.f32 %v1629, %v1710
    %v1757 = vxor.u32 %v1756, 2147483648
    %v1758 = vmul.f32 %v1757, 1.442695
    %v1759 = vpow.pop %v1758
    %v1760 = vadd.f32 %v1759, 1.0
    %v1761 = vrcp.pop %v1760
    %v1762 = vmul.f32 1.0, %v1761
    %v1763 = vadd.f32 %v1631, %v1712
    %v1764 = vxor.u32 %v1763, 2147483648
    %v1765 = vmul.f32 %v1764, 1.442695
    %v1766 = vpow.pop %v1765
    %v1767 = vadd.f32 %v1766, 1.0
    %v1768 = vrcp.pop %v1767
    %v1769 = vmul.f32 1.0, %v1768
    %v1770 = vadd.f32 %v1751, %v425
    %v1771 = vmul.f32 %v1762, %v1770
    %v1772 = vadd.f32 %v1670, %v1771
    %v1773 = vtanh.pop %v1772
    %v1774 = vsub.f32 1.0, %v1769
    %v1775 = vmul.f32 %v1774, %v1773
    %v1776 = vmul.f32 %v1769, %v1585
    %v1777 = vadd.f32 %v1775, %v1776
    %v1778 = vpack.c.bf16 %v1777, %v1777
    %s1779 = scalar_lea.vmem %s5, 28
    %1780 = vst [vmem:[%s1779] sm:$0xf] %v1778
    %1781 = vst [vmem:[#allocation2] sm:$0xff] %v1777
    // Predicated region
    $region30: #{gru_imdb_forward.2} parent=1 // pred_check
      _
    $region31: #{gru_imdb_forward.2} parent=1 // pred_check_branch
      %1783 = sbr.rel (0) target = $region33
    $region32: #{gru_imdb_forward.2} parent=1 // pred_region
      _
    $region33: #{gru_imdb_forward.2} parent=1 // pred_fallthru
      _
    // Predicated region
    $region34: #{gru_imdb_forward.2} parent=1 // pred_check
      _
    $region35: #{gru_imdb_forward.2} parent=1 // pred_check_branch
      %1785 = sbr.rel (0) target = $region37
    $region36: #{gru_imdb_forward.2} parent=1 // pred_region
      _
    $region37: #{gru_imdb_forward.2} parent=1 // pred_fallthru
      _
    %1786 = vsyncpa [#allocation4], 1

// kernel: gru_imdb_forward.3
$region0: #{gru_imdb_forward.3}
  #allocation0 [shape = 'u32[]', space=smem, size = 0x4, offset = 0x4, fixed_abs, tag = 'smem constant byte address 0x4 - core index']
  #allocation1 [shape = 'u32[144,128]{1,0:T(1,128)}', space=vmem, size = 0x12000, scoped, tag = 'internal scratch']
  #allocation2 [shape = 'f32[8,128]{1,0:T(8,128)}', space=vmem, size = 0x1000, scoped, tag = 'scratch operand']
  %s0 = inlined_call_operand.vmem [shape: bf16[8,8,128], index: 0, kind: input, shape index: {}]
  %s1 = inlined_call_operand.vmem [shape: bf16[128,384], index: 1, kind: input, shape index: {}]
  %s2 = inlined_call_operand.vmem [shape: f32[1,384], index: 2, kind: input, shape index: {}]
  %s3 = inlined_call_operand.vmem [shape: bf16[128,384], index: 3, kind: input, shape index: {}]
  %s4 = inlined_call_operand.vmem [shape: f32[1,128], index: 4, kind: input, shape index: {}]
  %s5 = inlined_call_operand.vmem [shape: bf16[128,2], index: 5, kind: input, shape index: {}]
  %s6 = inlined_call_operand.vmem [shape: f32[1,2], index: 6, kind: input, shape index: {}]
  %s7 = inlined_call_operand.vmem [shape: f32[8,2], index: 7, kind: output, shape index: {}]
  %s8 = sld [smem:[#allocation0]]
  $region46: #{gru_imdb_forward.3} parent=0
    _
  %s10 = ssub.s32 1, %s8
  %s11 = scalar_select 0, %s10, %s8
  // Predicated region
  $region2: #{gru_imdb_forward.3} parent=0 // pred_check
    _
  $region3: #{gru_imdb_forward.3} parent=0 // pred_check_branch
    %13 = sbr.rel (0) target = $region5
  $region4: #{gru_imdb_forward.3} parent=0 // pred_region
    _
  $region5: #{gru_imdb_forward.3} parent=0 // pred_fallthru
    _
  // Predicated region
  $region6: #{gru_imdb_forward.3} parent=0 // pred_check
    _
  $region7: #{gru_imdb_forward.3} parent=0 // pred_check_branch
    %15 = sbr.rel (0) target = $region9
  $region8: #{gru_imdb_forward.3} parent=0 // pred_region
    _
  $region9: #{gru_imdb_forward.3} parent=0 // pred_fallthru
    _
  // Predicated region
  $region10: #{gru_imdb_forward.3} parent=0 // pred_check
    _
  $region11: #{gru_imdb_forward.3} parent=0 // pred_check_branch
    %17 = sbr.rel (0) target = $region13
  $region12: #{gru_imdb_forward.3} parent=0 // pred_region
    _
  $region13: #{gru_imdb_forward.3} parent=0 // pred_fallthru
    _
  // Predicated region
  $region14: #{gru_imdb_forward.3} parent=0 // pred_check
    _
  $region15: #{gru_imdb_forward.3} parent=0 // pred_check_branch
    %19 = sbr.rel (0) target = $region17
  $region16: #{gru_imdb_forward.3} parent=0 // pred_region
    _
  $region17: #{gru_imdb_forward.3} parent=0 // pred_fallthru
    _
  // Predicated region
  $region18: #{gru_imdb_forward.3} parent=0 // pred_check
    _
  $region19: #{gru_imdb_forward.3} parent=0 // pred_check_branch
    %21 = sbr.rel (0) target = $region21
  $region20: #{gru_imdb_forward.3} parent=0 // pred_region
    _
  $region21: #{gru_imdb_forward.3} parent=0 // pred_fallthru
    _
  // Predicated region
  $region22: #{gru_imdb_forward.3} parent=0 // pred_check
    _
  $region23: #{gru_imdb_forward.3} parent=0 // pred_check_branch
    %23 = sbr.rel (0) target = $region25
  $region24: #{gru_imdb_forward.3} parent=0 // pred_region
    _
  $region25: #{gru_imdb_forward.3} parent=0 // pred_fallthru
    _
  // Predicated region
  $region26: #{gru_imdb_forward.3} parent=0 // pred_check
    _
  $region27: #{gru_imdb_forward.3} parent=0 // pred_check_branch
    %25 = sbr.rel (0) target = $region29
  $region28: #{gru_imdb_forward.3} parent=0 // pred_region
    _
  $region29: #{gru_imdb_forward.3} parent=0 // pred_fallthru
    _
  %p27 = scmp.eq.s32.totalorder 0, 0
  // Predicated region
  $region30: #{gru_imdb_forward.3} parent=0 // pred_check
    %p28 = pneg %p27
  $region31: #{gru_imdb_forward.3} parent=0 // pred_check_branch
    %30 = sbr.rel (%p28) target = $region33
  $region32: #{gru_imdb_forward.3} parent=0 // pred_region
    %31 = vst [vmem:[#allocation2] sm:$0xff] 0.0
  $region33: #{gru_imdb_forward.3} parent=0 // pred_fallthru
    _
  %v32 = vld [vmem:[%s1] sm:$0xff]
  %v33 = vld [vmem:[%s1 + $0x8] sm:$0xf]
  %v34 = vld [vmem:[%s1 + $0xc] sm:$0xff]
  %v35 = vld [vmem:[%s1 + $0x14] sm:$0xf]
  %v36 = vld [vmem:[%s1 + $0x18] sm:$0xff]
  %v37 = vld [vmem:[%s1 + $0x20] sm:$0xf]
  %v38 = vld [vmem:[%s1 + $0x24] sm:$0xff]
  %v39 = vld [vmem:[%s1 + $0x2c] sm:$0xf]
  %v40 = vld [vmem:[%s1 + $0x30] sm:$0xff]
  %v41 = vld [vmem:[%s1 + $0x38] sm:$0xf]
  %v42 = vld [vmem:[%s1 + $0x3c] sm:$0xff]
  %v43 = vld [vmem:[%s1 + $0x44] sm:$0xf]
  %v44 = vld [vmem:[%s1 + $0x48] sm:$0xff]
  %v45 = vld [vmem:[%s1 + $0x50] sm:$0xf]
  %v46 = vld [vmem:[%s1 + $0x54] sm:$0xff]
  %v47 = vld [vmem:[%s1 + $0x5c] sm:$0xf]
  %v48 = vld [vmem:[%s1 + $0x60] sm:$0xff]
  %v49 = vld [vmem:[%s1 + $0x68] sm:$0xf]
  %v50 = vld [vmem:[%s1 + $0x6c] sm:$0xff]
  %v51 = vld [vmem:[%s1 + $0x74] sm:$0xf]
  %v52 = vld [vmem:[%s1 + $0x78] sm:$0xff]
  %v53 = vld [vmem:[%s1 + $0x80] sm:$0xf]
  %v54 = vld [vmem:[%s1 + $0x84] sm:$0xff]
  %v55 = vld [vmem:[%s1 + $0x8c] sm:$0xf]
  %v56 = vld [vmem:[%s1 + $0x90] sm:$0xff]
  %v57 = vld [vmem:[%s1 + $0x98] sm:$0xf]
  %v58 = vld [vmem:[%s1 + $0x9c] sm:$0xff]
  %v59 = vld [vmem:[%s1 + $0xa4] sm:$0xf]
  %v60 = vld [vmem:[%s1 + $0xa8] sm:$0xff]
  %v61 = vld [vmem:[%s1 + $0xb0] sm:$0xf]
  %v62 = vld [vmem:[%s1 + $0xb4] sm:$0xff]
  %v63 = vld [vmem:[%s1 + $0xbc] sm:$0xf]
  %v64 = vld [vmem:[%s2] sm:$0x7]
  %v65 = vld [vmem:[%s3] sm:$0xff]
  %v66 = vld [vmem:[%s3 + $0x8] sm:$0xf]
  %v67 = vld [vmem:[%s3 + $0xc] sm:$0xff]
  %v68 = vld [vmem:[%s3 + $0x14] sm:$0xf]
  %v69 = vld [vmem:[%s3 + $0x18] sm:$0xff]
  %v70 = vld [vmem:[%s3 + $0x20] sm:$0xf]
  %v71 = vld [vmem:[%s3 + $0x24] sm:$0xff]
  %v72 = vld [vmem:[%s3 + $0x2c] sm:$0xf]
  %v73 = vld [vmem:[%s3 + $0x30] sm:$0xff]
  %v74 = vld [vmem:[%s3 + $0x38] sm:$0xf]
  %v75 = vld [vmem:[%s3 + $0x3c] sm:$0xff]
  %v76 = vld [vmem:[%s3 + $0x44] sm:$0xf]
  %v77 = vld [vmem:[%s3 + $0x48] sm:$0xff]
  %v78 = vld [vmem:[%s3 + $0x50] sm:$0xf]
  %v79 = vld [vmem:[%s3 + $0x54] sm:$0xff]
  %v80 = vld [vmem:[%s3 + $0x5c] sm:$0xf]
  %v81 = vld [vmem:[%s3 + $0x60] sm:$0xff]
  %v82 = vld [vmem:[%s3 + $0x68] sm:$0xf]
  %v83 = vld [vmem:[%s3 + $0x6c] sm:$0xff]
  %v84 = vld [vmem:[%s3 + $0x74] sm:$0xf]
  %v85 = vld [vmem:[%s3 + $0x78] sm:$0xff]
  %v86 = vld [vmem:[%s3 + $0x80] sm:$0xf]
  %v87 = vld [vmem:[%s3 + $0x84] sm:$0xff]
  %v88 = vld [vmem:[%s3 + $0x8c] sm:$0xf]
  %v89 = vld [vmem:[%s3 + $0x90] sm:$0xff]
  %v90 = vld [vmem:[%s3 + $0x98] sm:$0xf]
  %v91 = vld [vmem:[%s3 + $0x9c] sm:$0xff]
  %v92 = vld [vmem:[%s3 + $0xa4] sm:$0xf]
  %v93 = vld [vmem:[%s3 + $0xa8] sm:$0xff]
  %v94 = vld [vmem:[%s3 + $0xb0] sm:$0xf]
  %v95 = vld [vmem:[%s3 + $0xb4] sm:$0xff]
  %v96 = vld [vmem:[%s3 + $0xbc] sm:$0xf]
  %v97 = vld [vmem:[%s4] sm:$0x1]
  %v98 = vld [vmem:[#allocation2] sm:$0xff]
  %v99 = vld [vmem:[%s0] sm:$0xf]
  %v101 = vlaneseq
  %v102 = vshrl.u32 %v101, 7
  %v103 = vsub.s32 0, %v102
  %v104 = vrot.slane %v64, %v103
  %v105 = vlaneseq
  %v106 = vshrl.u32 %v105, 7
  %v107 = vsub.s32 1, %v106
  %v108 = vrot.slane %v64, %v107
  %v109 = vlaneseq
  %v110 = vshrl.u32 %v109, 7
  %v111 = vsub.s32 2, %v110
  %v112 = vrot.slane %v64, %v111
  %v148 = vunpack.c.l.b16 %v32
  %v149 = vunpack.c.h.b16 %v32
  %v150 = vunpack.c.l.b16 %v33
  %v151 = vunpack.c.l.b16 %v34
  %v152 = vunpack.c.h.b16 %v34
  %v153 = vunpack.c.l.b16 %v35
  %v154 = vunpack.c.l.b16 %v36
  %v155 = vunpack.c.h.b16 %v36
  %v156 = vunpack.c.l.b16 %v37
  %v157 = vunpack.c.l.b16 %v38
  %v158 = vunpack.c.h.b16 %v38
  %v159 = vunpack.c.l.b16 %v39
  %v160 = vunpack.c.l.b16 %v40
  %v161 = vunpack.c.h.b16 %v40
  %v162 = vunpack.c.l.b16 %v41
  %v163 = vunpack.c.l.b16 %v42
  %v164 = vunpack.c.h.b16 %v42
  %v165 = vunpack.c.l.b16 %v43
  %v166 = vunpack.c.l.b16 %v44
  %v167 = vunpack.c.h.b16 %v44
  %v168 = vunpack.c.l.b16 %v45
  %v169 = vunpack.c.l.b16 %v46
  %v170 = vunpack.c.h.b16 %v46
  %v171 = vunpack.c.l.b16 %v47
  %v172 = vunpack.c.l.b16 %v48
  %v173 = vunpack.c.h.b16 %v48
  %v174 = vunpack.c.l.b16 %v49
  %v175 = vunpack.c.l.b16 %v50
  %v176 = vunpack.c.h.b16 %v50
  %v177 = vunpack.c.l.b16 %v51
  %v178 = vunpack.c.l.b16 %v52
  %v179 = vunpack.c.h.b16 %v52
  %v180 = vunpack.c.l.b16 %v53
  %v181 = vunpack.c.l.b16 %v54
  %v182 = vunpack.c.h.b16 %v54
  %v183 = vunpack.c.l.b16 %v55
  %v184 = vunpack.c.l.b16 %v56
  %v185 = vunpack.c.h.b16 %v56
  %v186 = vunpack.c.l.b16 %v57
  %v187 = vunpack.c.l.b16 %v58
  %v188 = vunpack.c.h.b16 %v58
  %v189 = vunpack.c.l.b16 %v59
  %v190 = vunpack.c.l.b16 %v60
  %v191 = vunpack.c.h.b16 %v60
  %v192 = vunpack.c.l.b16 %v61
  %v193 = vunpack.c.l.b16 %v62
  %v194 = vunpack.c.h.b16 %v62
  %v195 = vunpack.c.l.b16 %v63
  %v196 = vpack.c.b16 %v151, %v148
  %v197 = vpack.c.b16 %v152, %v149
  %v198 = vpack.c.b16 %v153, %v150
  %v199 = vpack.c.b16 %v157, %v154
  %v200 = vpack.c.b16 %v158, %v155
  %v201 = vpack.c.b16 %v159, %v156
  %v202 = vpack.c.b16 %v163, %v160
  %v203 = vpack.c.b16 %v164, %v161
  %v204 = vpack.c.b16 %v165, %v162
  %v205 = vpack.c.b16 %v169, %v166
  %v206 = vpack.c.b16 %v170, %v167
  %v207 = vpack.c.b16 %v171, %v168
  %v208 = vpack.c.b16 %v175, %v172
  %v209 = vpack.c.b16 %v176, %v173
  %v210 = vpack.c.b16 %v177, %v174
  %v211 = vpack.c.b16 %v181, %v178
  %v212 = vpack.c.b16 %v182, %v179
  %v213 = vpack.c.b16 %v183, %v180
  %v214 = vpack.c.b16 %v187, %v184
  %v215 = vpack.c.b16 %v188, %v185
  %v216 = vpack.c.b16 %v189, %v186
  %v217 = vpack.c.b16 %v193, %v190
  %v218 = vpack.c.b16 %v194, %v191
  %v219 = vpack.c.b16 %v195, %v192
  %244 = vmatprep.subr.bf16.mxu0 %v197
  %245 = vmatpush1.bf16.msra.mxu0 %v196
  %246 = vmatprep.subr.bf16.mxu0 %v200
  %247 = vmatpush1.bf16.msra.mxu0 %v199
  %248 = vmatprep.subr.bf16.mxu0 %v203
  %249 = vmatpush1.bf16.msra.mxu0 %v202
  %250 = vmatprep.subr.bf16.mxu0 %v206
  %251 = vmatpush1.bf16.msra.mxu0 %v205
  %252 = vmatprep.subr.bf16.mxu0 %v209
  %253 = vmatpush1.bf16.msra.mxu0 %v208
  %254 = vmatprep.subr.bf16.mxu0 %v212
  %255 = vmatpush1.bf16.msra.mxu0 %v211
  %256 = vmatprep.subr.bf16.mxu0 %v215
  %257 = vmatpush1.bf16.msra.mxu0 %v214
  %258 = vmatprep.subr.bf16.mxu0 %v218
  %259 = vmatpush1.bf16.msra.mxu0 %v217
  %260 = vmatprep.subr.bf16.mxu0 0
  %261 = vmatpush1.bf16.msra.mxu0 0
  %262 = vmatprep.subr.bf16.mxu0 0
  %263 = vmatpush1.bf16.msra.mxu0 0
  %264 = vmatprep.subr.bf16.mxu0 0
  %265 = vmatpush1.bf16.msra.mxu0 0
  %266 = vmatprep.subr.bf16.mxu0 0
  %267 = vmatpush1.bf16.msra.mxu0 0
  %268 = vmatprep.subr.bf16.mxu0 0
  %269 = vmatpush1.bf16.msra.mxu0 0
  %270 = vmatprep.subr.bf16.mxu0 0
  %271 = vmatpush1.bf16.msra.mxu0 0
  %272 = vmatprep.subr.bf16.mxu0 0
  %273 = vmatpush1.bf16.msra.mxu0 0
  %274 = vmatprep.subr.bf16.mxu0 0
  %275 = vmatpush1.bf16.msra.mxu0 0
  %276 = vmatprep.mubr.bf16.mxu0 0
  %277 = vmatmul.mubr.bf16.gmra.mrb[0].mxu0 %v99
  %v278 = vpop.f32.mrb[0].mxu0
  %v279 = vadd.f32 %v104, %v278
  %v280 = vpop.f32.mrb[0].mxu0
  %v281 = vadd.f32 %v108, %v280
  %v282 = vpop.f32.mrb[0].mxu0
  %v283 = vpop.f32.mrb[0].mxu0
  %284 = vdwg.mxu0
  %285 = vmatprep.subr.bf16.mxu0 0
  %286 = vmatpush1.bf16.msra.mxu0 %v198
  %287 = vmatprep.subr.bf16.mxu0 0
  %288 = vmatpush1.bf16.msra.mxu0 %v201
  %289 = vmatprep.subr.bf16.mxu0 0
  %290 = vmatpush1.bf16.msra.mxu0 %v204
  %291 = vmatprep.subr.bf16.mxu0 0
  %292 = vmatpush1.bf16.msra.mxu0 %v207
  %293 = vmatprep.subr.bf16.mxu0 0
  %294 = vmatpush1.bf16.msra.mxu0 %v210
  %295 = vmatprep.subr.bf16.mxu0 0
  %296 = vmatpush1.bf16.msra.mxu0 %v213
  %297 = vmatprep.subr.bf16.mxu0 0
  %298 = vmatpush1.bf16.msra.mxu0 %v216
  %299 = vmatprep.subr.bf16.mxu0 0
  %300 = vmatpush1.bf16.msra.mxu0 %v219
  %301 = vmatprep.subr.bf16.mxu0 0
  %302 = vmatpush1.bf16.msra.mxu0 0
  %303 = vmatprep.subr.bf16.mxu0 0
  %304 = vmatpush1.bf16.msra.mxu0 0
  %305 = vmatprep.subr.bf16.mxu0 0
  %306 = vmatpush1.bf16.msra.mxu0 0
  %307 = vmatprep.subr.bf16.mxu0 0
  %308 = vmatpush1.bf16.msra.mxu0 0
  %309 = vmatprep.subr.bf16.mxu0 0
  %310 = vmatpush1.bf16.msra.mxu0 0
  %311 = vmatprep.subr.bf16.mxu0 0
  %312 = vmatpush1.bf16.msra.mxu0 0
  %313 = vmatprep.subr.bf16.mxu0 0
  %314 = vmatpush1.bf16.msra.mxu0 0
  %315 = vmatprep.subr.bf16.mxu0 0
  %316 = vmatpush1.bf16.msra.mxu0 0
  %317 = vmatprep.mubr.bf16.mxu0 0
  %318 = vmatmul.mubr.bf16.gmra.mrb[0].mxu0 %v99
  %v319 = vpop.f32.mrb[0].mxu0
  %v320 = vadd.f32 %v112, %v319
  %v321 = vpop.f32.mrb[0].mxu0
  %v322 = vpop.f32.mrb[0].mxu0
  %v323 = vpop.f32.mrb[0].mxu0
  %324 = vdwg.mxu0
  %v325 = vpack.c.bf16 %v98, %v98
  %v358 = vunpack.c.l.b16 %v65
  %v359 = vunpack.c.h.b16 %v65
  %v360 = vunpack.c.l.b16 %v66
  %v361 = vunpack.c.l.b16 %v67
  %v362 = vunpack.c.h.b16 %v67
  %v363 = vunpack.c.l.b16 %v68
  %v364 = vunpack.c.l.b16 %v69
  %v365 = vunpack.c.h.b16 %v69
  %v366 = vunpack.c.l.b16 %v70
  %v367 = vunpack.c.l.b16 %v71
  %v368 = vunpack.c.h.b16 %v71
  %v369 = vunpack.c.l.b16 %v72
  %v370 = vunpack.c.l.b16 %v73
  %v371 = vunpack.c.h.b16 %v73
  %v372 = vunpack.c.l.b16 %v74
  %v373 = vunpack.c.l.b16 %v75
  %v374 = vunpack.c.h.b16 %v75
  %v375 = vunpack.c.l.b16 %v76
  %v376 = vunpack.c.l.b16 %v77
  %v377 = vunpack.c.h.b16 %v77
  %v378 = vunpack.c.l.b16 %v78
  %v379 = vunpack.c.l.b16 %v79
  %v380 = vunpack.c.h.b16 %v79
  %v381 = vunpack.c.l.b16 %v80
  %v382 = vunpack.c.l.b16 %v81
  %v383 = vunpack.c.h.b16 %v81
  %v384 = vunpack.c.l.b16 %v82
  %v385 = vunpack.c.l.b16 %v83
  %v386 = vunpack.c.h.b16 %v83
  %v387 = vunpack.c.l.b16 %v84
  %v388 = vunpack.c.l.b16 %v85
  %v389 = vunpack.c.h.b16 %v85
  %v390 = vunpack.c.l.b16 %v86
  %v391 = vunpack.c.l.b16 %v87
  %v392 = vunpack.c.h.b16 %v87
  %v393 = vunpack.c.l.b16 %v88
  %v394 = vunpack.c.l.b16 %v89
  %v395 = vunpack.c.h.b16 %v89
  %v396 = vunpack.c.l.b16 %v90
  %v397 = vunpack.c.l.b16 %v91
  %v398 = vunpack.c.h.b16 %v91
  %v399 = vunpack.c.l.b16 %v92
  %v400 = vunpack.c.l.b16 %v93
  %v401 = vunpack.c.h.b16 %v93
  %v402 = vunpack.c.l.b16 %v94
  %v403 = vunpack.c.l.b16 %v95
  %v404 = vunpack.c.h.b16 %v95
  %v405 = vunpack.c.l.b16 %v96
  %v406 = vpack.c.b16 %v361, %v358
  %v407 = vpack.c.b16 %v362, %v359
  %v408 = vpack.c.b16 %v363, %v360
  %v409 = vpack.c.b16 %v367, %v364
  %v410 = vpack.c.b16 %v368, %v365
  %v411 = vpack.c.b16 %v369, %v366
  %v412 = vpack.c.b16 %v373, %v370
  %v413 = vpack.c.b16 %v374, %v371
  %v414 = vpack.c.b16 %v375, %v372
  %v415 = vpack.c.b16 %v379, %v376
  %v416 = vpack.c.b16 %v380, %v377
  %v417 = vpack.c.b16 %v381, %v378
  %v418 = vpack.c.b16 %v385, %v382
  %v419 = vpack.c.b16 %v386, %v383
  %v420 = vpack.c.b16 %v387, %v384
  %v421 = vpack.c.b16 %v391, %v388
  %v422 = vpack.c.b16 %v392, %v389
  %v423 = vpack.c.b16 %v393, %v390
  %v424 = vpack.c.b16 %v397, %v394
  %v425 = vpack.c.b16 %v398, %v395
  %v426 = vpack.c.b16 %v399, %v396
  %v427 = vpack.c.b16 %v403, %v400
  %v428 = vpack.c.b16 %v404, %v401
  %v429 = vpack.c.b16 %v405, %v402
  %454 = vmatprep.subr.bf16.mxu0 %v407
  %455 = vmatpush1.bf16.msra.mxu0 %v406
  %456 = vmatprep.subr.bf16.mxu0 %v410
  %457 = vmatpush1.bf16.msra.mxu0 %v409
  %458 = vmatprep.subr.bf16.mxu0 %v413
  %459 = vmatpush1.bf16.msra.mxu0 %v412
  %460 = vmatprep.subr.bf16.mxu0 %v416
  %461 = vmatpush1.bf16.msra.mxu0 %v415
  %462 = vmatprep.subr.bf16.mxu0 %v419
  %463 = vmatpush1.bf16.msra.mxu0 %v418
  %464 = vmatprep.subr.bf16.mxu0 %v422
  %465 = vmatpush1.bf16.msra.mxu0 %v421
  %466 = vmatprep.subr.bf16.mxu0 %v425
  %467 = vmatpush1.bf16.msra.mxu0 %v424
  %468 = vmatprep.subr.bf16.mxu0 %v428
  %469 = vmatpush1.bf16.msra.mxu0 %v427
  %470 = vmatprep.subr.bf16.mxu0 0
  %471 = vmatpush1.bf16.msra.mxu0 0
  %472 = vmatprep.subr.bf16.mxu0 0
  %473 = vmatpush1.bf16.msra.mxu0 0
  %474 = vmatprep.subr.bf16.mxu0 0
  %475 = vmatpush1.bf16.msra.mxu0 0
  %476 = vmatprep.subr.bf16.mxu0 0
  %477 = vmatpush1.bf16.msra.mxu0 0
  %478 = vmatprep.subr.bf16.mxu0 0
  %479 = vmatpush1.bf16.msra.mxu0 0
  %480 = vmatprep.subr.bf16.mxu0 0
  %481 = vmatpush1.bf16.msra.mxu0 0
  %482 = vmatprep.subr.bf16.mxu0 0
  %483 = vmatpush1.bf16.msra.mxu0 0
  %484 = vmatprep.subr.bf16.mxu0 0
  %485 = vmatpush1.bf16.msra.mxu0 0
  %486 = vmatprep.mubr.bf16.mxu0 0
  %487 = vmatmul.mubr.bf16.gmra.mrb[0].mxu0 %v325
  %v488 = vpop.f32.mrb[0].mxu0
  %v489 = vadd.f32 0.0, %v488
  %v490 = vpop.f32.mrb[0].mxu0
  %v491 = vadd.f32 0.0, %v490
  %v492 = vpop.f32.mrb[0].mxu0
  %v493 = vpop.f32.mrb[0].mxu0
  %494 = vdwg.mxu0
  %495 = vmatprep.subr.bf16.mxu0 0
  %496 = vmatpush1.bf16.msra.mxu0 %v408
  %497 = vmatprep.subr.bf16.mxu0 0
  %498 = vmatpush1.bf16.msra.mxu0 %v411
  %499 = vmatprep.subr.bf16.mxu0 0
  %500 = vmatpush1.bf16.msra.mxu0 %v414
  %501 = vmatprep.subr.bf16.mxu0 0
  %502 = vmatpush1.bf16.msra.mxu0 %v417
  %503 = vmatprep.subr.bf16.mxu0 0
  %504 = vmatpush1.bf16.msra.mxu0 %v420
  %505 = vmatprep.subr.bf16.mxu0 0
  %506 = vmatpush1.bf16.msra.mxu0 %v423
  %507 = vmatprep.subr.bf16.mxu0 0
  %508 = vmatpush1.bf16.msra.mxu0 %v426
  %509 = vmatprep.subr.bf16.mxu0 0
  %510 = vmatpush1.bf16.msra.mxu0 %v429
  %511 = vmatprep.subr.bf16.mxu0 0
  %512 = vmatpush1.bf16.msra.mxu0 0
  %513 = vmatprep.subr.bf16.mxu0 0
  %514 = vmatpush1.bf16.msra.mxu0 0
  %515 = vmatprep.subr.bf16.mxu0 0
  %516 = vmatpush1.bf16.msra.mxu0 0
  %517 = vmatprep.subr.bf16.mxu0 0
  %518 = vmatpush1.bf16.msra.mxu0 0
  %519 = vmatprep.subr.bf16.mxu0 0
  %520 = vmatpush1.bf16.msra.mxu0 0
  %521 = vmatprep.subr.bf16.mxu0 0
  %522 = vmatpush1.bf16.msra.mxu0 0
  %523 = vmatprep.subr.bf16.mxu0 0
  %524 = vmatpush1.bf16.msra.mxu0 0
  %525 = vmatprep.subr.bf16.mxu0 0
  %526 = vmatpush1.bf16.msra.mxu0 0
  %527 = vmatprep.mubr.bf16.mxu0 0
  %528 = vmatmul.mubr.bf16.gmra.mrb[0].mxu0 %v325
  %v529 = vpop.f32.mrb[0].mxu0
  %v530 = vadd.f32 0.0, %v529
  %v531 = vpop.f32.mrb[0].mxu0
  %v532 = vpop.f32.mrb[0].mxu0
  %v533 = vpop.f32.mrb[0].mxu0
  %534 = vdwg.mxu0
  %v535 = vadd.f32 %v279, %v489
  %v536 = vxor.u32 %v535, 2147483648
  %v537 = vmul.f32 %v536, 1.442695
  %v538 = vpow.pop %v537
  %v539 = vadd.f32 %v538, 1.0
  %v540 = vrcp.pop %v539
  %v541 = vmul.f32 1.0, %v540
  %v542 = vadd.f32 %v281, %v491
  %v543 = vxor.u32 %v542, 2147483648
  %v544 = vmul.f32 %v543, 1.442695
  %v545 = vpow.pop %v544
  %v546 = vadd.f32 %v545, 1.0
  %v547 = vrcp.pop %v546
  %v548 = vmul.f32 1.0, %v547
  %v550 = vlaneseq
  %v551 = vshrl.u32 %v550, 7
  %v552 = vsub.s32 0, %v551
  %v553 = vrot.slane %v97, %v552
  %v555 = vadd.f32 %v530, %v553
  %v556 = vmul.f32 %v541, %v555
  %v557 = vadd.f32 %v320, %v556
  %v558 = vtanh.pop %v557
  %v559 = vsub.f32 1.0, %v548
  %v560 = vmul.f32 %v559, %v558
  %v561 = vmul.f32 %v548, %v98
  %v562 = vadd.f32 %v560, %v561
  %s563 = scalar_lea.vmem %s0, 4
  %v564 = vld [vmem:[%s563] sm:$0xf]
  %565 = vmatprep.subr.bf16.mxu0 %v197
  %566 = vmatpush1.bf16.msra.mxu0 %v196
  %567 = vmatprep.subr.bf16.mxu0 %v200
  %568 = vmatpush1.bf16.msra.mxu0 %v199
  %569 = vmatprep.subr.bf16.mxu0 %v203
  %570 = vmatpush1.bf16.msra.mxu0 %v202
  %571 = vmatprep.subr.bf16.mxu0 %v206
  %572 = vmatpush1.bf16.msra.mxu0 %v205
  %573 = vmatprep.subr.bf16.mxu0 %v209
  %574 = vmatpush1.bf16.msra.mxu0 %v208
  %575 = vmatprep.subr.bf16.mxu0 %v212
  %576 = vmatpush1.bf16.msra.mxu0 %v211
  %577 = vmatprep.subr.bf16.mxu0 %v215
  %578 = vmatpush1.bf16.msra.mxu0 %v214
  %579 = vmatprep.subr.bf16.mxu0 %v218
  %580 = vmatpush1.bf16.msra.mxu0 %v217
  %581 = vmatprep.subr.bf16.mxu0 0
  %582 = vmatpush1.bf16.msra.mxu0 0
  %583 = vmatprep.subr.bf16.mxu0 0
  %584 = vmatpush1.bf16.msra.mxu0 0
  %585 = vmatprep.subr.bf16.mxu0 0
  %586 = vmatpush1.bf16.msra.mxu0 0
  %587 = vmatprep.subr.bf16.mxu0 0
  %588 = vmatpush1.bf16.msra.mxu0 0
  %589 = vmatprep.subr.bf16.mxu0 0
  %590 = vmatpush1.bf16.msra.mxu0 0
  %591 = vmatprep.subr.bf16.mxu0 0
  %592 = vmatpush1.bf16.msra.mxu0 0
  %593 = vmatprep.subr.bf16.mxu0 0
  %594 = vmatpush1.bf16.msra.mxu0 0
  %595 = vmatprep.subr.bf16.mxu0 0
  %596 = vmatpush1.bf16.msra.mxu0 0
  %597 = vmatprep.mubr.bf16.mxu0 0
  %598 = vmatmul.mubr.bf16.gmra.mrb[0].mxu0 %v564
  %v599 = vpop.f32.mrb[0].mxu0
  %v600 = vadd.f32 %v104, %v599
  %v601 = vpop.f32.mrb[0].mxu0
  %v602 = vadd.f32 %v108, %v601
  %v603 = vpop.f32.mrb[0].mxu0
  %v604 = vpop.f32.mrb[0].mxu0
  %605 = vdwg.mxu0
  %606 = vmatprep.subr.bf16.mxu0 0
  %607 = vmatpush1.bf16.msra.mxu0 %v198
  %608 = vmatprep.subr.bf16.mxu0 0
  %609 = vmatpush1.bf16.msra.mxu0 %v201
  %610 = vmatprep.subr.bf16.mxu0 0
  %611 = vmatpush1.bf16.msra.mxu0 %v204
  %612 = vmatprep.subr.bf16.mxu0 0
  %613 = vmatpush1.bf16.msra.mxu0 %v207
  %614 = vmatprep.subr.bf16.mxu0 0
  %615 = vmatpush1.bf16.msra.mxu0 %v210
  %616 = vmatprep.subr.bf16.mxu0 0
  %617 = vmatpush1.bf16.msra.mxu0 %v213
  %618 = vmatprep.subr.bf16.mxu0 0
  %619 = vmatpush1.bf16.msra.mxu0 %v216
  %620 = vmatprep.subr.bf16.mxu0 0
  %621 = vmatpush1.bf16.msra.mxu0 %v219
  %622 = vmatprep.subr.bf16.mxu0 0
  %623 = vmatpush1.bf16.msra.mxu0 0
  %624 = vmatprep.subr.bf16.mxu0 0
  %625 = vmatpush1.bf16.msra.mxu0 0
  %626 = vmatprep.subr.bf16.mxu0 0
  %627 = vmatpush1.bf16.msra.mxu0 0
  %628 = vmatprep.subr.bf16.mxu0 0
  %629 = vmatpush1.bf16.msra.mxu0 0
  %630 = vmatprep.subr.bf16.mxu0 0
  %631 = vmatpush1.bf16.msra.mxu0 0
  %632 = vmatprep.subr.bf16.mxu0 0
  %633 = vmatpush1.bf16.msra.mxu0 0
  %634 = vmatprep.subr.bf16.mxu0 0
  %635 = vmatpush1.bf16.msra.mxu0 0
  %636 = vmatprep.subr.bf16.mxu0 0
  %637 = vmatpush1.bf16.msra.mxu0 0
  %638 = vmatprep.mubr.bf16.mxu0 0
  %639 = vmatmul.mubr.bf16.gmra.mrb[0].mxu0 %v564
  %v640 = vpop.f32.mrb[0].mxu0
  %v641 = vadd.f32 %v112, %v640
  %v642 = vpop.f32.mrb[0].mxu0
  %v643 = vpop.f32.mrb[0].mxu0
  %v644 = vpop.f32.mrb[0].mxu0
  %645 = vdwg.mxu0
  %v646 = vpack.c.bf16 %v562, %v562
  %647 = vmatprep.subr.bf16.mxu0 %v407
  %648 = vmatpush1.bf16.msra.mxu0 %v406
  %649 = vmatprep.subr.bf16.mxu0 %v410
  %650 = vmatpush1.bf16.msra.mxu0 %v409
  %651 = vmatprep.subr.bf16.mxu0 %v413
  %652 = vmatpush1.bf16.msra.mxu0 %v412
  %653 = vmatprep.subr.bf16.mxu0 %v416
  %654 = vmatpush1.bf16.msra.mxu0 %v415
  %655 = vmatprep.subr.bf16.mxu0 %v419
  %656 = vmatpush1.bf16.msra.mxu0 %v418
  %657 = vmatprep.subr.bf16.mxu0 %v422
  %658 = vmatpush1.bf16.msra.mxu0 %v421
  %659 = vmatprep.subr.bf16.mxu0 %v425
  %660 = vmatpush1.bf16.msra.mxu0 %v424
  %661 = vmatprep.subr.bf16.mxu0 %v428
  %662 = vmatpush1.bf16.msra.mxu0 %v427
  %663 = vmatprep.subr.bf16.mxu0 0
  %664 = vmatpush1.bf16.msra.mxu0 0
  %665 = vmatprep.subr.bf16.mxu0 0
  %666 = vmatpush1.bf16.msra.mxu0 0
  %667 = vmatprep.subr.bf16.mxu0 0
  %668 = vmatpush1.bf16.msra.mxu0 0
  %669 = vmatprep.subr.bf16.mxu0 0
  %670 = vmatpush1.bf16.msra.mxu0 0
  %671 = vmatprep.subr.bf16.mxu0 0
  %672 = vmatpush1.bf16.msra.mxu0 0
  %673 = vmatprep.subr.bf16.mxu0 0
  %674 = vmatpush1.bf16.msra.mxu0 0
  %675 = vmatprep.subr.bf16.mxu0 0
  %676 = vmatpush1.bf16.msra.mxu0 0
  %677 = vmatprep.subr.bf16.mxu0 0
  %678 = vmatpush1.bf16.msra.mxu0 0
  %679 = vmatprep.mubr.bf16.mxu0 0
  %680 = vmatmul.mubr.bf16.gmra.mrb[0].mxu0 %v646
  %v681 = vpop.f32.mrb[0].mxu0
  %v682 = vadd.f32 0.0, %v681
  %v683 = vpop.f32.mrb[0].mxu0
  %v684 = vadd.f32 0.0, %v683
  %v685 = vpop.f32.mrb[0].mxu0
  %v686 = vpop.f32.mrb[0].mxu0
  %687 = vdwg.mxu0
  %688 = vmatprep.subr.bf16.mxu0 0
  %689 = vmatpush1.bf16.msra.mxu0 %v408
  %690 = vmatprep.subr.bf16.mxu0 0
  %691 = vmatpush1.bf16.msra.mxu0 %v411
  %692 = vmatprep.subr.bf16.mxu0 0
  %693 = vmatpush1.bf16.msra.mxu0 %v414
  %694 = vmatprep.subr.bf16.mxu0 0
  %695 = vmatpush1.bf16.msra.mxu0 %v417
  %696 = vmatprep.subr.bf16.mxu0 0
  %697 = vmatpush1.bf16.msra.mxu0 %v420
  %698 = vmatprep.subr.bf16.mxu0 0
  %699 = vmatpush1.bf16.msra.mxu0 %v423
  %700 = vmatprep.subr.bf16.mxu0 0
  %701 = vmatpush1.bf16.msra.mxu0 %v426
  %702 = vmatprep.subr.bf16.mxu0 0
  %703 = vmatpush1.bf16.msra.mxu0 %v429
  %704 = vmatprep.subr.bf16.mxu0 0
  %705 = vmatpush1.bf16.msra.mxu0 0
  %706 = vmatprep.subr.bf16.mxu0 0
  %707 = vmatpush1.bf16.msra.mxu0 0
  %708 = vmatprep.subr.bf16.mxu0 0
  %709 = vmatpush1.bf16.msra.mxu0 0
  %710 = vmatprep.subr.bf16.mxu0 0
  %711 = vmatpush1.bf16.msra.mxu0 0
  %712 = vmatprep.subr.bf16.mxu0 0
  %713 = vmatpush1.bf16.msra.mxu0 0
  %714 = vmatprep.subr.bf16.mxu0 0
  %715 = vmatpush1.bf16.msra.mxu0 0
  %716 = vmatprep.subr.bf16.mxu0 0
  %717 = vmatpush1.bf16.msra.mxu0 0
  %718 = vmatprep.subr.bf16.mxu0 0
  %719 = vmatpush1.bf16.msra.mxu0 0
  %720 = vmatprep.mubr.bf16.mxu0 0
  %721 = vmatmul.mubr.bf16.gmra.mrb[0].mxu0 %v646
  %v722 = vpop.f32.mrb[0].mxu0
  %v723 = vadd.f32 0.0, %v722
  %v724 = vpop.f32.mrb[0].mxu0
  %v725 = vpop.f32.mrb[0].mxu0
  %v726 = vpop.f32.mrb[0].mxu0
  %727 = vdwg.mxu0
  %v728 = vadd.f32 %v600, %v682
  %v729 = vxor.u32 %v728, 2147483648
  %v730 = vmul.f32 %v729, 1.442695
  %v731 = vpow.pop %v730
  %v732 = vadd.f32 %v731, 1.0
  %v733 = vrcp.pop %v732
  %v734 = vmul.f32 1.0, %v733
  %v735 = vadd.f32 %v602, %v684
  %v736 = vxor.u32 %v735, 2147483648
  %v737 = vmul.f32 %v736, 1.442695
  %v738 = vpow.pop %v737
  %v739 = vadd.f32 %v738, 1.0
  %v740 = vrcp.pop %v739
  %v741 = vmul.f32 1.0, %v740
  %v742 = vadd.f32 %v723, %v553
  %v743 = vmul.f32 %v734, %v742
  %v744 = vadd.f32 %v641, %v743
  %v745 = vtanh.pop %v744
  %v746 = vsub.f32 1.0, %v741
  %v747 = vmul.f32 %v746, %v745
  %v748 = vmul.f32 %v741, %v562
  %v749 = vadd.f32 %v747, %v748
  %s750 = scalar_lea.vmem %s0, 8
  %v751 = vld [vmem:[%s750] sm:$0xf]
  %752 = vmatprep.subr.bf16.mxu0 %v197
  %753 = vmatpush1.bf16.msra.mxu0 %v196
  %754 = vmatprep.subr.bf16.mxu0 %v200
  %755 = vmatpush1.bf16.msra.mxu0 %v199
  %756 = vmatprep.subr.bf16.mxu0 %v203
  %757 = vmatpush1.bf16.msra.mxu0 %v202
  %758 = vmatprep.subr.bf16.mxu0 %v206
  %759 = vmatpush1.bf16.msra.mxu0 %v205
  %760 = vmatprep.subr.bf16.mxu0 %v209
  %761 = vmatpush1.bf16.msra.mxu0 %v208
  %762 = vmatprep.subr.bf16.mxu0 %v212
  %763 = vmatpush1.bf16.msra.mxu0 %v211
  %764 = vmatprep.subr.bf16.mxu0 %v215
  %765 = vmatpush1.bf16.msra.mxu0 %v214
  %766 = vmatprep.subr.bf16.mxu0 %v218
  %767 = vmatpush1.bf16.msra.mxu0 %v217
  %768 = vmatprep.subr.bf16.mxu0 0
  %769 = vmatpush1.bf16.msra.mxu0 0
  %770 = vmatprep.subr.bf16.mxu0 0
  %771 = vmatpush1.bf16.msra.mxu0 0
  %772 = vmatprep.subr.bf16.mxu0 0
  %773 = vmatpush1.bf16.msra.mxu0 0
  %774 = vmatprep.subr.bf16.mxu0 0
  %775 = vmatpush1.bf16.msra.mxu0 0
  %776 = vmatprep.subr.bf16.mxu0 0
  %777 = vmatpush1.bf16.msra.mxu0 0
  %778 = vmatprep.subr.bf16.mxu0 0
  %779 = vmatpush1.bf16.msra.mxu0 0
  %780 = vmatprep.subr.bf16.mxu0 0
  %781 = vmatpush1.bf16.msra.mxu0 0
  %782 = vmatprep.subr.bf16.mxu0 0
  %783 = vmatpush1.bf16.msra.mxu0 0
  %784 = vmatprep.mubr.bf16.mxu0 0
  %785 = vmatmul.mubr.bf16.gmra.mrb[0].mxu0 %v751
  %v786 = vpop.f32.mrb[0].mxu0
  %v787 = vadd.f32 %v104, %v786
  %v788 = vpop.f32.mrb[0].mxu0
  %v789 = vadd.f32 %v108, %v788
  %v790 = vpop.f32.mrb[0].mxu0
  %v791 = vpop.f32.mrb[0].mxu0
  %792 = vdwg.mxu0
  %793 = vmatprep.subr.bf16.mxu0 0
  %794 = vmatpush1.bf16.msra.mxu0 %v198
  %795 = vmatprep.subr.bf16.mxu0 0
  %796 = vmatpush1.bf16.msra.mxu0 %v201
  %797 = vmatprep.subr.bf16.mxu0 0
  %798 = vmatpush1.bf16.msra.mxu0 %v204
  %799 = vmatprep.subr.bf16.mxu0 0
  %800 = vmatpush1.bf16.msra.mxu0 %v207
  %801 = vmatprep.subr.bf16.mxu0 0
  %802 = vmatpush1.bf16.msra.mxu0 %v210
  %803 = vmatprep.subr.bf16.mxu0 0
  %804 = vmatpush1.bf16.msra.mxu0 %v213
  %805 = vmatprep.subr.bf16.mxu0 0
  %806 = vmatpush1.bf16.msra.mxu0 %v216
  %807 = vmatprep.subr.bf16.mxu0 0
  %808 = vmatpush1.bf16.msra.mxu0 %v219
  %809 = vmatprep.subr.bf16.mxu0 0
  %810 = vmatpush1.bf16.msra.mxu0 0
  %811 = vmatprep.subr.bf16.mxu0 0
  %812 = vmatpush1.bf16.msra.mxu0 0
  %813 = vmatprep.subr.bf16.mxu0 0
  %814 = vmatpush1.bf16.msra.mxu0 0
  %815 = vmatprep.subr.bf16.mxu0 0
  %816 = vmatpush1.bf16.msra.mxu0 0
  %817 = vmatprep.subr.bf16.mxu0 0
  %818 = vmatpush1.bf16.msra.mxu0 0
  %819 = vmatprep.subr.bf16.mxu0 0
  %820 = vmatpush1.bf16.msra.mxu0 0
  %821 = vmatprep.subr.bf16.mxu0 0
  %822 = vmatpush1.bf16.msra.mxu0 0
  %823 = vmatprep.subr.bf16.mxu0 0
  %824 = vmatpush1.bf16.msra.mxu0 0
  %825 = vmatprep.mubr.bf16.mxu0 0
  %826 = vmatmul.mubr.bf16.gmra.mrb[0].mxu0 %v751
  %v827 = vpop.f32.mrb[0].mxu0
  %v828 = vadd.f32 %v112, %v827
  %v829 = vpop.f32.mrb[0].mxu0
  %v830 = vpop.f32.mrb[0].mxu0
  %v831 = vpop.f32.mrb[0].mxu0
  %832 = vdwg.mxu0
  %v833 = vpack.c.bf16 %v749, %v749
  %834 = vmatprep.subr.bf16.mxu0 %v407
  %835 = vmatpush1.bf16.msra.mxu0 %v406
  %836 = vmatprep.subr.bf16.mxu0 %v410
  %837 = vmatpush1.bf16.msra.mxu0 %v409
  %838 = vmatprep.subr.bf16.mxu0 %v413
  %839 = vmatpush1.bf16.msra.mxu0 %v412
  %840 = vmatprep.subr.bf16.mxu0 %v416
  %841 = vmatpush1.bf16.msra.mxu0 %v415
  %842 = vmatprep.subr.bf16.mxu0 %v419
  %843 = vmatpush1.bf16.msra.mxu0 %v418
  %844 = vmatprep.subr.bf16.mxu0 %v422
  %845 = vmatpush1.bf16.msra.mxu0 %v421
  %846 = vmatprep.subr.bf16.mxu0 %v425
  %847 = vmatpush1.bf16.msra.mxu0 %v424
  %848 = vmatprep.subr.bf16.mxu0 %v428
  %849 = vmatpush1.bf16.msra.mxu0 %v427
  %850 = vmatprep.subr.bf16.mxu0 0
  %851 = vmatpush1.bf16.msra.mxu0 0
  %852 = vmatprep.subr.bf16.mxu0 0
  %853 = vmatpush1.bf16.msra.mxu0 0
  %854 = vmatprep.subr.bf16.mxu0 0
  %855 = vmatpush1.bf16.msra.mxu0 0
  %856 = vmatprep.subr.bf16.mxu0 0
  %857 = vmatpush1.bf16.msra.mxu0 0
  %858 = vmatprep.subr.bf16.mxu0 0
  %859 = vmatpush1.bf16.msra.mxu0 0
  %860 = vmatprep.subr.bf16.mxu0 0
  %861 = vmatpush1.bf16.msra.mxu0 0
  %862 = vmatprep.subr.bf16.mxu0 0
  %863 = vmatpush1.bf16.msra.mxu0 0
  %864 = vmatprep.subr.bf16.mxu0 0
  %865 = vmatpush1.bf16.msra.mxu0 0
  %866 = vmatprep.mubr.bf16.mxu0 0
  %867 = vmatmul.mubr.bf16.gmra.mrb[0].mxu0 %v833
  %v868 = vpop.f32.mrb[0].mxu0
  %v869 = vadd.f32 0.0, %v868
  %v870 = vpop.f32.mrb[0].mxu0
  %v871 = vadd.f32 0.0, %v870
  %v872 = vpop.f32.mrb[0].mxu0
  %v873 = vpop.f32.mrb[0].mxu0
  %874 = vdwg.mxu0
  %875 = vmatprep.subr.bf16.mxu0 0
  %876 = vmatpush1.bf16.msra.mxu0 %v408
  %877 = vmatprep.subr.bf16.mxu0 0
  %878 = vmatpush1.bf16.msra.mxu0 %v411
  %879 = vmatprep.subr.bf16.mxu0 0
  %880 = vmatpush1.bf16.msra.mxu0 %v414
  %881 = vmatprep.subr.bf16.mxu0 0
  %882 = vmatpush1.bf16.msra.mxu0 %v417
  %883 = vmatprep.subr.bf16.mxu0 0
  %884 = vmatpush1.bf16.msra.mxu0 %v420
  %885 = vmatprep.subr.bf16.mxu0 0
  %886 = vmatpush1.bf16.msra.mxu0 %v423
  %887 = vmatprep.subr.bf16.mxu0 0
  %888 = vmatpush1.bf16.msra.mxu0 %v426
  %889 = vmatprep.subr.bf16.mxu0 0
  %890 = vmatpush1.bf16.msra.mxu0 %v429
  %891 = vmatprep.subr.bf16.mxu0 0
  %892 = vmatpush1.bf16.msra.mxu0 0
  %893 = vmatprep.subr.bf16.mxu0 0
  %894 = vmatpush1.bf16.msra.mxu0 0
  %895 = vmatprep.subr.bf16.mxu0 0
  %896 = vmatpush1.bf16.msra.mxu0 0
  %897 = vmatprep.subr.bf16.mxu0 0
  %898 = vmatpush1.bf16.msra.mxu0 0
  %899 = vmatprep.subr.bf16.mxu0 0
  %900 = vmatpush1.bf16.msra.mxu0 0
  %901 = vmatprep.subr.bf16.mxu0 0
  %902 = vmatpush1.bf16.msra.mxu0 0
  %903 = vmatprep.subr.bf16.mxu0 0
  %904 = vmatpush1.bf16.msra.mxu0 0
  %905 = vmatprep.subr.bf16.mxu0 0
  %906 = vmatpush1.bf16.msra.mxu0 0
  %907 = vmatprep.mubr.bf16.mxu0 0
  %908 = vmatmul.mubr.bf16.gmra.mrb[0].mxu0 %v833
  %v909 = vpop.f32.mrb[0].mxu0
  %v910 = vadd.f32 0.0, %v909
  %v911 = vpop.f32.mrb[0].mxu0
  %v912 = vpop.f32.mrb[0].mxu0
  %v913 = vpop.f32.mrb[0].mxu0
  %914 = vdwg.mxu0
  %v915 = vadd.f32 %v787, %v869
  %v916 = vxor.u32 %v915, 2147483648
  %v917 = vmul.f32 %v916, 1.442695
  %v918 = vpow.pop %v917
  %v919 = vadd.f32 %v918, 1.0
  %v920 = vrcp.pop %v919
  %v921 = vmul.f32 1.0, %v920
  %v922 = vadd.f32 %v789, %v871
  %v923 = vxor.u32 %v922, 2147483648
  %v924 = vmul.f32 %v923, 1.442695
  %v925 = vpow.pop %v924
  %v926 = vadd.f32 %v925, 1.0
  %v927 = vrcp.pop %v926
  %v928 = vmul.f32 1.0, %v927
  %v929 = vadd.f32 %v910, %v553
  %v930 = vmul.f32 %v921, %v929
  %v931 = vadd.f32 %v828, %v930
  %v932 = vtanh.pop %v931
  %v933 = vsub.f32 1.0, %v928
  %v934 = vmul.f32 %v933, %v932
  %v935 = vmul.f32 %v928, %v749
  %v936 = vadd.f32 %v934, %v935
  %s937 = scalar_lea.vmem %s0, 12
  %v938 = vld [vmem:[%s937] sm:$0xf]
  %939 = vmatprep.subr.bf16.mxu0 %v197
  %940 = vmatpush1.bf16.msra.mxu0 %v196
  %941 = vmatprep.subr.bf16.mxu0 %v200
  %942 = vmatpush1.bf16.msra.mxu0 %v199
  %943 = vmatprep.subr.bf16.mxu0 %v203
  %944 = vmatpush1.bf16.msra.mxu0 %v202
  %945 = vmatprep.subr.bf16.mxu0 %v206
  %946 = vmatpush1.bf16.msra.mxu0 %v205
  %947 = vmatprep.subr.bf16.mxu0 %v209
  %948 = vmatpush1.bf16.msra.mxu0 %v208
  %949 = vmatprep.subr.bf16.mxu0 %v212
  %950 = vmatpush1.bf16.msra.mxu0 %v211
  %951 = vmatprep.subr.bf16.mxu0 %v215
  %952 = vmatpush1.bf16.msra.mxu0 %v214
  %953 = vmatprep.subr.bf16.mxu0 %v218
  %954 = vmatpush1.bf16.msra.mxu0 %v217
  %955 = vmatprep.subr.bf16.mxu0 0
  %956 = vmatpush1.bf16.msra.mxu0 0
  %957 = vmatprep.subr.bf16.mxu0 0
  %958 = vmatpush1.bf16.msra.mxu0 0
  %959 = vmatprep.subr.bf16.mxu0 0
  %960 = vmatpush1.bf16.msra.mxu0 0
  %961 = vmatprep.subr.bf16.mxu0 0
  %962 = vmatpush1.bf16.msra.mxu0 0
  %963 = vmatprep.subr.bf16.mxu0 0
  %964 = vmatpush1.bf16.msra.mxu0 0
  %965 = vmatprep.subr.bf16.mxu0 0
  %966 = vmatpush1.bf16.msra.mxu0 0
  %967 = vmatprep.subr.bf16.mxu0 0
  %968 = vmatpush1.bf16.msra.mxu0 0
  %969 = vmatprep.subr.bf16.mxu0 0
  %970 = vmatpush1.bf16.msra.mxu0 0
  %971 = vmatprep.mubr.bf16.mxu0 0
  %972 = vmatmul.mubr.bf16.gmra.mrb[0].mxu0 %v938
  %v973 = vpop.f32.mrb[0].mxu0
  %v974 = vadd.f32 %v104, %v973
  %v975 = vpop.f32.mrb[0].mxu0
  %v976 = vadd.f32 %v108, %v975
  %v977 = vpop.f32.mrb[0].mxu0
  %v978 = vpop.f32.mrb[0].mxu0
  %979 = vdwg.mxu0
  %980 = vmatprep.subr.bf16.mxu0 0
  %981 = vmatpush1.bf16.msra.mxu0 %v198
  %982 = vmatprep.subr.bf16.mxu0 0
  %983 = vmatpush1.bf16.msra.mxu0 %v201
  %984 = vmatprep.subr.bf16.mxu0 0
  %985 = vmatpush1.bf16.msra.mxu0 %v204
  %986 = vmatprep.subr.bf16.mxu0 0
  %987 = vmatpush1.bf16.msra.mxu0 %v207
  %988 = vmatprep.subr.bf16.mxu0 0
  %989 = vmatpush1.bf16.msra.mxu0 %v210
  %990 = vmatprep.subr.bf16.mxu0 0
  %991 = vmatpush1.bf16.msra.mxu0 %v213
  %992 = vmatprep.subr.bf16.mxu0 0
  %993 = vmatpush1.bf16.msra.mxu0 %v216
  %994 = vmatprep.subr.bf16.mxu0 0
  %995 = vmatpush1.bf16.msra.mxu0 %v219
  %996 = vmatprep.subr.bf16.mxu0 0
  %997 = vmatpush1.bf16.msra.mxu0 0
  %998 = vmatprep.subr.bf16.mxu0 0
  %999 = vmatpush1.bf16.msra.mxu0 0
  %1000 = vmatprep.subr.bf16.mxu0 0
  %1001 = vmatpush1.bf16.msra.mxu0 0
  %1002 = vmatprep.subr.bf16.mxu0 0
  %1003 = vmatpush1.bf16.msra.mxu0 0
  %1004 = vmatprep.subr.bf16.mxu0 0
  %1005 = vmatpush1.bf16.msra.mxu0 0
  %1006 = vmatprep.subr.bf16.mxu0 0
  %1007 = vmatpush1.bf16.msra.mxu0 0
  %1008 = vmatprep.subr.bf16.mxu0 0
  %1009 = vmatpush1.bf16.msra.mxu0 0
  %1010 = vmatprep.subr.bf16.mxu0 0
  %1011 = vmatpush1.bf16.msra.mxu0 0
  %1012 = vmatprep.mubr.bf16.mxu0 0
  %1013 = vmatmul.mubr.bf16.gmra.mrb[0].mxu0 %v938
  %v1014 = vpop.f32.mrb[0].mxu0
  %v1015 = vadd.f32 %v112, %v1014
  %v1016 = vpop.f32.mrb[0].mxu0
  %v1017 = vpop.f32.mrb[0].mxu0
  %v1018 = vpop.f32.mrb[0].mxu0
  %1019 = vdwg.mxu0
  %v1020 = vpack.c.bf16 %v936, %v936
  %1021 = vmatprep.subr.bf16.mxu0 %v407
  %1022 = vmatpush1.bf16.msra.mxu0 %v406
  %1023 = vmatprep.subr.bf16.mxu0 %v410
  %1024 = vmatpush1.bf16.msra.mxu0 %v409
  %1025 = vmatprep.subr.bf16.mxu0 %v413
  %1026 = vmatpush1.bf16.msra.mxu0 %v412
  %1027 = vmatprep.subr.bf16.mxu0 %v416
  %1028 = vmatpush1.bf16.msra.mxu0 %v415
  %1029 = vmatprep.subr.bf16.mxu0 %v419
  %1030 = vmatpush1.bf16.msra.mxu0 %v418
  %1031 = vmatprep.subr.bf16.mxu0 %v422
  %1032 = vmatpush1.bf16.msra.mxu0 %v421
  %1033 = vmatprep.subr.bf16.mxu0 %v425
  %1034 = vmatpush1.bf16.msra.mxu0 %v424
  %1035 = vmatprep.subr.bf16.mxu0 %v428
  %1036 = vmatpush1.bf16.msra.mxu0 %v427
  %1037 = vmatprep.subr.bf16.mxu0 0
  %1038 = vmatpush1.bf16.msra.mxu0 0
  %1039 = vmatprep.subr.bf16.mxu0 0
  %1040 = vmatpush1.bf16.msra.mxu0 0
  %1041 = vmatprep.subr.bf16.mxu0 0
  %1042 = vmatpush1.bf16.msra.mxu0 0
  %1043 = vmatprep.subr.bf16.mxu0 0
  %1044 = vmatpush1.bf16.msra.mxu0 0
  %1045 = vmatprep.subr.bf16.mxu0 0
  %1046 = vmatpush1.bf16.msra.mxu0 0
  %1047 = vmatprep.subr.bf16.mxu0 0
  %1048 = vmatpush1.bf16.msra.mxu0 0
  %1049 = vmatprep.subr.bf16.mxu0 0
  %1050 = vmatpush1.bf16.msra.mxu0 0
  %1051 = vmatprep.subr.bf16.mxu0 0
  %1052 = vmatpush1.bf16.msra.mxu0 0
  %1053 = vmatprep.mubr.bf16.mxu0 0
  %1054 = vmatmul.mubr.bf16.gmra.mrb[0].mxu0 %v1020
  %v1055 = vpop.f32.mrb[0].mxu0
  %v1056 = vadd.f32 0.0, %v1055
  %v1057 = vpop.f32.mrb[0].mxu0
  %v1058 = vadd.f32 0.0, %v1057
  %v1059 = vpop.f32.mrb[0].mxu0
  %v1060 = vpop.f32.mrb[0].mxu0
  %1061 = vdwg.mxu0
  %1062 = vmatprep.subr.bf16.mxu0 0
  %1063 = vmatpush1.bf16.msra.mxu0 %v408
  %1064 = vmatprep.subr.bf16.mxu0 0
  %1065 = vmatpush1.bf16.msra.mxu0 %v411
  %1066 = vmatprep.subr.bf16.mxu0 0
  %1067 = vmatpush1.bf16.msra.mxu0 %v414
  %1068 = vmatprep.subr.bf16.mxu0 0
  %1069 = vmatpush1.bf16.msra.mxu0 %v417
  %1070 = vmatprep.subr.bf16.mxu0 0
  %1071 = vmatpush1.bf16.msra.mxu0 %v420
  %1072 = vmatprep.subr.bf16.mxu0 0
  %1073 = vmatpush1.bf16.msra.mxu0 %v423
  %1074 = vmatprep.subr.bf16.mxu0 0
  %1075 = vmatpush1.bf16.msra.mxu0 %v426
  %1076 = vmatprep.subr.bf16.mxu0 0
  %1077 = vmatpush1.bf16.msra.mxu0 %v429
  %1078 = vmatprep.subr.bf16.mxu0 0
  %1079 = vmatpush1.bf16.msra.mxu0 0
  %1080 = vmatprep.subr.bf16.mxu0 0
  %1081 = vmatpush1.bf16.msra.mxu0 0
  %1082 = vmatprep.subr.bf16.mxu0 0
  %1083 = vmatpush1.bf16.msra.mxu0 0
  %1084 = vmatprep.subr.bf16.mxu0 0
  %1085 = vmatpush1.bf16.msra.mxu0 0
  %1086 = vmatprep.subr.bf16.mxu0 0
  %1087 = vmatpush1.bf16.msra.mxu0 0
  %1088 = vmatprep.subr.bf16.mxu0 0
  %1089 = vmatpush1.bf16.msra.mxu0 0
  %1090 = vmatprep.subr.bf16.mxu0 0
  %1091 = vmatpush1.bf16.msra.mxu0 0
  %1092 = vmatprep.subr.bf16.mxu0 0
  %1093 = vmatpush1.bf16.msra.mxu0 0
  %1094 = vmatprep.mubr.bf16.mxu0 0
  %1095 = vmatmul.mubr.bf16.gmra.mrb[0].mxu0 %v1020
  %v1096 = vpop.f32.mrb[0].mxu0
  %v1097 = vadd.f32 0.0, %v1096
  %v1098 = vpop.f32.mrb[0].mxu0
  %v1099 = vpop.f32.mrb[0].mxu0
  %v1100 = vpop.f32.mrb[0].mxu0
  %1101 = vdwg.mxu0
  %v1102 = vadd.f32 %v974, %v1056
  %v1103 = vxor.u32 %v1102, 2147483648
  %v1104 = vmul.f32 %v1103, 1.442695
  %v1105 = vpow.pop %v1104
  %v1106 = vadd.f32 %v1105, 1.0
  %v1107 = vrcp.pop %v1106
  %v1108 = vmul.f32 1.0, %v1107
  %v1109 = vadd.f32 %v976, %v1058
  %v1110 = vxor.u32 %v1109, 2147483648
  %v1111 = vmul.f32 %v1110, 1.442695
  %v1112 = vpow.pop %v1111
  %v1113 = vadd.f32 %v1112, 1.0
  %v1114 = vrcp.pop %v1113
  %v1115 = vmul.f32 1.0, %v1114
  %v1116 = vadd.f32 %v1097, %v553
  %v1117 = vmul.f32 %v1108, %v1116
  %v1118 = vadd.f32 %v1015, %v1117
  %v1119 = vtanh.pop %v1118
  %v1120 = vsub.f32 1.0, %v1115
  %v1121 = vmul.f32 %v1120, %v1119
  %v1122 = vmul.f32 %v1115, %v936
  %v1123 = vadd.f32 %v1121, %v1122
  %s1124 = scalar_lea.vmem %s0, 16
  %v1125 = vld [vmem:[%s1124] sm:$0xf]
  %1126 = vmatprep.subr.bf16.mxu0 %v197
  %1127 = vmatpush1.bf16.msra.mxu0 %v196
  %1128 = vmatprep.subr.bf16.mxu0 %v200
  %1129 = vmatpush1.bf16.msra.mxu0 %v199
  %1130 = vmatprep.subr.bf16.mxu0 %v203
  %1131 = vmatpush1.bf16.msra.mxu0 %v202
  %1132 = vmatprep.subr.bf16.mxu0 %v206
  %1133 = vmatpush1.bf16.msra.mxu0 %v205
  %1134 = vmatprep.subr.bf16.mxu0 %v209
  %1135 = vmatpush1.bf16.msra.mxu0 %v208
  %1136 = vmatprep.subr.bf16.mxu0 %v212
  %1137 = vmatpush1.bf16.msra.mxu0 %v211
  %1138 = vmatprep.subr.bf16.mxu0 %v215
  %1139 = vmatpush1.bf16.msra.mxu0 %v214
  %1140 = vmatprep.subr.bf16.mxu0 %v218
  %1141 = vmatpush1.bf16.msra.mxu0 %v217
  %1142 = vmatprep.subr.bf16.mxu0 0
  %1143 = vmatpush1.bf16.msra.mxu0 0
  %1144 = vmatprep.subr.bf16.mxu0 0
  %1145 = vmatpush1.bf16.msra.mxu0 0
  %1146 = vmatprep.subr.bf16.mxu0 0
  %1147 = vmatpush1.bf16.msra.mxu0 0
  %1148 = vmatprep.subr.bf16.mxu0 0
  %1149 = vmatpush1.bf16.msra.mxu0 0
  %1150 = vmatprep.subr.bf16.mxu0 0
  %1151 = vmatpush1.bf16.msra.mxu0 0
  %1152 = vmatprep.subr.bf16.mxu0 0
  %1153 = vmatpush1.bf16.msra.mxu0 0
  %1154 = vmatprep.subr.bf16.mxu0 0
  %1155 = vmatpush1.bf16.msra.mxu0 0
  %1156 = vmatprep.subr.bf16.mxu0 0
  %1157 = vmatpush1.bf16.msra.mxu0 0
  %1158 = vmatprep.mubr.bf16.mxu0 0
  %1159 = vmatmul.mubr.bf16.gmra.mrb[0].mxu0 %v1125
  %v1160 = vpop.f32.mrb[0].mxu0
  %v1161 = vadd.f32 %v104, %v1160
  %v1162 = vpop.f32.mrb[0].mxu0
  %v1163 = vadd.f32 %v108, %v1162
  %v1164 = vpop.f32.mrb[0].mxu0
  %v1165 = vpop.f32.mrb[0].mxu0
  %1166 = vdwg.mxu0
  %1167 = vmatprep.subr.bf16.mxu0 0
  %1168 = vmatpush1.bf16.msra.mxu0 %v198
  %1169 = vmatprep.subr.bf16.mxu0 0
  %1170 = vmatpush1.bf16.msra.mxu0 %v201
  %1171 = vmatprep.subr.bf16.mxu0 0
  %1172 = vmatpush1.bf16.msra.mxu0 %v204
  %1173 = vmatprep.subr.bf16.mxu0 0
  %1174 = vmatpush1.bf16.msra.mxu0 %v207
  %1175 = vmatprep.subr.bf16.mxu0 0
  %1176 = vmatpush1.bf16.msra.mxu0 %v210
  %1177 = vmatprep.subr.bf16.mxu0 0
  %1178 = vmatpush1.bf16.msra.mxu0 %v213
  %1179 = vmatprep.subr.bf16.mxu0 0
  %1180 = vmatpush1.bf16.msra.mxu0 %v216
  %1181 = vmatprep.subr.bf16.mxu0 0
  %1182 = vmatpush1.bf16.msra.mxu0 %v219
  %1183 = vmatprep.subr.bf16.mxu0 0
  %1184 = vmatpush1.bf16.msra.mxu0 0
  %1185 = vmatprep.subr.bf16.mxu0 0
  %1186 = vmatpush1.bf16.msra.mxu0 0
  %1187 = vmatprep.subr.bf16.mxu0 0
  %1188 = vmatpush1.bf16.msra.mxu0 0
  %1189 = vmatprep.subr.bf16.mxu0 0
  %1190 = vmatpush1.bf16.msra.mxu0 0
  %1191 = vmatprep.subr.bf16.mxu0 0
  %1192 = vmatpush1.bf16.msra.mxu0 0
  %1193 = vmatprep.subr.bf16.mxu0 0
  %1194 = vmatpush1.bf16.msra.mxu0 0
  %1195 = vmatprep.subr.bf16.mxu0 0
  %1196 = vmatpush1.bf16.msra.mxu0 0
  %1197 = vmatprep.subr.bf16.mxu0 0
  %1198 = vmatpush1.bf16.msra.mxu0 0
  %1199 = vmatprep.mubr.bf16.mxu0 0
  %1200 = vmatmul.mubr.bf16.gmra.mrb[0].mxu0 %v1125
  %v1201 = vpop.f32.mrb[0].mxu0
  %v1202 = vadd.f32 %v112, %v1201
  %v1203 = vpop.f32.mrb[0].mxu0
  %v1204 = vpop.f32.mrb[0].mxu0
  %v1205 = vpop.f32.mrb[0].mxu0
  %1206 = vdwg.mxu0
  %v1207 = vpack.c.bf16 %v1123, %v1123
  %1208 = vmatprep.subr.bf16.mxu0 %v407
  %1209 = vmatpush1.bf16.msra.mxu0 %v406
  %1210 = vmatprep.subr.bf16.mxu0 %v410
  %1211 = vmatpush1.bf16.msra.mxu0 %v409
  %1212 = vmatprep.subr.bf16.mxu0 %v413
  %1213 = vmatpush1.bf16.msra.mxu0 %v412
  %1214 = vmatprep.subr.bf16.mxu0 %v416
  %1215 = vmatpush1.bf16.msra.mxu0 %v415
  %1216 = vmatprep.subr.bf16.mxu0 %v419
  %1217 = vmatpush1.bf16.msra.mxu0 %v418
  %1218 = vmatprep.subr.bf16.mxu0 %v422
  %1219 = vmatpush1.bf16.msra.mxu0 %v421
  %1220 = vmatprep.subr.bf16.mxu0 %v425
  %1221 = vmatpush1.bf16.msra.mxu0 %v424
  %1222 = vmatprep.subr.bf16.mxu0 %v428
  %1223 = vmatpush1.bf16.msra.mxu0 %v427
  %1224 = vmatprep.subr.bf16.mxu0 0
  %1225 = vmatpush1.bf16.msra.mxu0 0
  %1226 = vmatprep.subr.bf16.mxu0 0
  %1227 = vmatpush1.bf16.msra.mxu0 0
  %1228 = vmatprep.subr.bf16.mxu0 0
  %1229 = vmatpush1.bf16.msra.mxu0 0
  %1230 = vmatprep.subr.bf16.mxu0 0
  %1231 = vmatpush1.bf16.msra.mxu0 0
  %1232 = vmatprep.subr.bf16.mxu0 0
  %1233 = vmatpush1.bf16.msra.mxu0 0
  %1234 = vmatprep.subr.bf16.mxu0 0
  %1235 = vmatpush1.bf16.msra.mxu0 0
  %1236 = vmatprep.subr.bf16.mxu0 0
  %1237 = vmatpush1.bf16.msra.mxu0 0
  %1238 = vmatprep.subr.bf16.mxu0 0
  %1239 = vmatpush1.bf16.msra.mxu0 0
  %1240 = vmatprep.mubr.bf16.mxu0 0
  %1241 = vmatmul.mubr.bf16.gmra.mrb[0].mxu0 %v1207
  %v1242 = vpop.f32.mrb[0].mxu0
  %v1243 = vadd.f32 0.0, %v1242
  %v1244 = vpop.f32.mrb[0].mxu0
  %v1245 = vadd.f32 0.0, %v1244
  %v1246 = vpop.f32.mrb[0].mxu0
  %v1247 = vpop.f32.mrb[0].mxu0
  %1248 = vdwg.mxu0
  %1249 = vmatprep.subr.bf16.mxu0 0
  %1250 = vmatpush1.bf16.msra.mxu0 %v408
  %1251 = vmatprep.subr.bf16.mxu0 0
  %1252 = vmatpush1.bf16.msra.mxu0 %v411
  %1253 = vmatprep.subr.bf16.mxu0 0
  %1254 = vmatpush1.bf16.msra.mxu0 %v414
  %1255 = vmatprep.subr.bf16.mxu0 0
  %1256 = vmatpush1.bf16.msra.mxu0 %v417
  %1257 = vmatprep.subr.bf16.mxu0 0
  %1258 = vmatpush1.bf16.msra.mxu0 %v420
  %1259 = vmatprep.subr.bf16.mxu0 0
  %1260 = vmatpush1.bf16.msra.mxu0 %v423
  %1261 = vmatprep.subr.bf16.mxu0 0
  %1262 = vmatpush1.bf16.msra.mxu0 %v426
  %1263 = vmatprep.subr.bf16.mxu0 0
  %1264 = vmatpush1.bf16.msra.mxu0 %v429
  %1265 = vmatprep.subr.bf16.mxu0 0
  %1266 = vmatpush1.bf16.msra.mxu0 0
  %1267 = vmatprep.subr.bf16.mxu0 0
  %1268 = vmatpush1.bf16.msra.mxu0 0
  %1269 = vmatprep.subr.bf16.mxu0 0
  %1270 = vmatpush1.bf16.msra.mxu0 0
  %1271 = vmatprep.subr.bf16.mxu0 0
  %1272 = vmatpush1.bf16.msra.mxu0 0
  %1273 = vmatprep.subr.bf16.mxu0 0
  %1274 = vmatpush1.bf16.msra.mxu0 0
  %1275 = vmatprep.subr.bf16.mxu0 0
  %1276 = vmatpush1.bf16.msra.mxu0 0
  %1277 = vmatprep.subr.bf16.mxu0 0
  %1278 = vmatpush1.bf16.msra.mxu0 0
  %1279 = vmatprep.subr.bf16.mxu0 0
  %1280 = vmatpush1.bf16.msra.mxu0 0
  %1281 = vmatprep.mubr.bf16.mxu0 0
  %1282 = vmatmul.mubr.bf16.gmra.mrb[0].mxu0 %v1207
  %v1283 = vpop.f32.mrb[0].mxu0
  %v1284 = vadd.f32 0.0, %v1283
  %v1285 = vpop.f32.mrb[0].mxu0
  %v1286 = vpop.f32.mrb[0].mxu0
  %v1287 = vpop.f32.mrb[0].mxu0
  %1288 = vdwg.mxu0
  %v1289 = vadd.f32 %v1161, %v1243
  %v1290 = vxor.u32 %v1289, 2147483648
  %v1291 = vmul.f32 %v1290, 1.442695
  %v1292 = vpow.pop %v1291
  %v1293 = vadd.f32 %v1292, 1.0
  %v1294 = vrcp.pop %v1293
  %v1295 = vmul.f32 1.0, %v1294
  %v1296 = vadd.f32 %v1163, %v1245
  %v1297 = vxor.u32 %v1296, 2147483648
  %v1298 = vmul.f32 %v1297, 1.442695
  %v1299 = vpow.pop %v1298
  %v1300 = vadd.f32 %v1299, 1.0
  %v1301 = vrcp.pop %v1300
  %v1302 = vmul.f32 1.0, %v1301
  %v1303 = vadd.f32 %v1284, %v553
  %v1304 = vmul.f32 %v1295, %v1303
  %v1305 = vadd.f32 %v1202, %v1304
  %v1306 = vtanh.pop %v1305
  %v1307 = vsub.f32 1.0, %v1302
  %v1308 = vmul.f32 %v1307, %v1306
  %v1309 = vmul.f32 %v1302, %v1123
  %v1310 = vadd.f32 %v1308, %v1309
  %s1311 = scalar_lea.vmem %s0, 20
  %v1312 = vld [vmem:[%s1311] sm:$0xf]
  %1313 = vmatprep.subr.bf16.mxu0 %v197
  %1314 = vmatpush1.bf16.msra.mxu0 %v196
  %1315 = vmatprep.subr.bf16.mxu0 %v200
  %1316 = vmatpush1.bf16.msra.mxu0 %v199
  %1317 = vmatprep.subr.bf16.mxu0 %v203
  %1318 = vmatpush1.bf16.msra.mxu0 %v202
  %1319 = vmatprep.subr.bf16.mxu0 %v206
  %1320 = vmatpush1.bf16.msra.mxu0 %v205
  %1321 = vmatprep.subr.bf16.mxu0 %v209
  %1322 = vmatpush1.bf16.msra.mxu0 %v208
  %1323 = vmatprep.subr.bf16.mxu0 %v212
  %1324 = vmatpush1.bf16.msra.mxu0 %v211
  %1325 = vmatprep.subr.bf16.mxu0 %v215
  %1326 = vmatpush1.bf16.msra.mxu0 %v214
  %1327 = vmatprep.subr.bf16.mxu0 %v218
  %1328 = vmatpush1.bf16.msra.mxu0 %v217
  %1329 = vmatprep.subr.bf16.mxu0 0
  %1330 = vmatpush1.bf16.msra.mxu0 0
  %1331 = vmatprep.subr.bf16.mxu0 0
  %1332 = vmatpush1.bf16.msra.mxu0 0
  %1333 = vmatprep.subr.bf16.mxu0 0
  %1334 = vmatpush1.bf16.msra.mxu0 0
  %1335 = vmatprep.subr.bf16.mxu0 0
  %1336 = vmatpush1.bf16.msra.mxu0 0
  %1337 = vmatprep.subr.bf16.mxu0 0
  %1338 = vmatpush1.bf16.msra.mxu0 0
  %1339 = vmatprep.subr.bf16.mxu0 0
  %1340 = vmatpush1.bf16.msra.mxu0 0
  %1341 = vmatprep.subr.bf16.mxu0 0
  %1342 = vmatpush1.bf16.msra.mxu0 0
  %1343 = vmatprep.subr.bf16.mxu0 0
  %1344 = vmatpush1.bf16.msra.mxu0 0
  %1345 = vmatprep.mubr.bf16.mxu0 0
  %1346 = vmatmul.mubr.bf16.gmra.mrb[0].mxu0 %v1312
  %v1347 = vpop.f32.mrb[0].mxu0
  %v1348 = vadd.f32 %v104, %v1347
  %v1349 = vpop.f32.mrb[0].mxu0
  %v1350 = vadd.f32 %v108, %v1349
  %v1351 = vpop.f32.mrb[0].mxu0
  %v1352 = vpop.f32.mrb[0].mxu0
  %1353 = vdwg.mxu0
  %1354 = vmatprep.subr.bf16.mxu0 0
  %1355 = vmatpush1.bf16.msra.mxu0 %v198
  %1356 = vmatprep.subr.bf16.mxu0 0
  %1357 = vmatpush1.bf16.msra.mxu0 %v201
  %1358 = vmatprep.subr.bf16.mxu0 0
  %1359 = vmatpush1.bf16.msra.mxu0 %v204
  %1360 = vmatprep.subr.bf16.mxu0 0
  %1361 = vmatpush1.bf16.msra.mxu0 %v207
  %1362 = vmatprep.subr.bf16.mxu0 0
  %1363 = vmatpush1.bf16.msra.mxu0 %v210
  %1364 = vmatprep.subr.bf16.mxu0 0
  %1365 = vmatpush1.bf16.msra.mxu0 %v213
  %1366 = vmatprep.subr.bf16.mxu0 0
  %1367 = vmatpush1.bf16.msra.mxu0 %v216
  %1368 = vmatprep.subr.bf16.mxu0 0
  %1369 = vmatpush1.bf16.msra.mxu0 %v219
  %1370 = vmatprep.subr.bf16.mxu0 0
  %1371 = vmatpush1.bf16.msra.mxu0 0
  %1372 = vmatprep.subr.bf16.mxu0 0
  %1373 = vmatpush1.bf16.msra.mxu0 0
  %1374 = vmatprep.subr.bf16.mxu0 0
  %1375 = vmatpush1.bf16.msra.mxu0 0
  %1376 = vmatprep.subr.bf16.mxu0 0
  %1377 = vmatpush1.bf16.msra.mxu0 0
  %1378 = vmatprep.subr.bf16.mxu0 0
  %1379 = vmatpush1.bf16.msra.mxu0 0
  %1380 = vmatprep.subr.bf16.mxu0 0
  %1381 = vmatpush1.bf16.msra.mxu0 0
  %1382 = vmatprep.subr.bf16.mxu0 0
  %1383 = vmatpush1.bf16.msra.mxu0 0
  %1384 = vmatprep.subr.bf16.mxu0 0
  %1385 = vmatpush1.bf16.msra.mxu0 0
  %1386 = vmatprep.mubr.bf16.mxu0 0
  %1387 = vmatmul.mubr.bf16.gmra.mrb[0].mxu0 %v1312
  %v1388 = vpop.f32.mrb[0].mxu0
  %v1389 = vadd.f32 %v112, %v1388
  %v1390 = vpop.f32.mrb[0].mxu0
  %v1391 = vpop.f32.mrb[0].mxu0
  %v1392 = vpop.f32.mrb[0].mxu0
  %1393 = vdwg.mxu0
  %v1394 = vpack.c.bf16 %v1310, %v1310
  %1395 = vmatprep.subr.bf16.mxu0 %v407
  %1396 = vmatpush1.bf16.msra.mxu0 %v406
  %1397 = vmatprep.subr.bf16.mxu0 %v410
  %1398 = vmatpush1.bf16.msra.mxu0 %v409
  %1399 = vmatprep.subr.bf16.mxu0 %v413
  %1400 = vmatpush1.bf16.msra.mxu0 %v412
  %1401 = vmatprep.subr.bf16.mxu0 %v416
  %1402 = vmatpush1.bf16.msra.mxu0 %v415
  %1403 = vmatprep.subr.bf16.mxu0 %v419
  %1404 = vmatpush1.bf16.msra.mxu0 %v418
  %1405 = vmatprep.subr.bf16.mxu0 %v422
  %1406 = vmatpush1.bf16.msra.mxu0 %v421
  %1407 = vmatprep.subr.bf16.mxu0 %v425
  %1408 = vmatpush1.bf16.msra.mxu0 %v424
  %1409 = vmatprep.subr.bf16.mxu0 %v428
  %1410 = vmatpush1.bf16.msra.mxu0 %v427
  %1411 = vmatprep.subr.bf16.mxu0 0
  %1412 = vmatpush1.bf16.msra.mxu0 0
  %1413 = vmatprep.subr.bf16.mxu0 0
  %1414 = vmatpush1.bf16.msra.mxu0 0
  %1415 = vmatprep.subr.bf16.mxu0 0
  %1416 = vmatpush1.bf16.msra.mxu0 0
  %1417 = vmatprep.subr.bf16.mxu0 0
  %1418 = vmatpush1.bf16.msra.mxu0 0
  %1419 = vmatprep.subr.bf16.mxu0 0
  %1420 = vmatpush1.bf16.msra.mxu0 0
  %1421 = vmatprep.subr.bf16.mxu0 0
  %1422 = vmatpush1.bf16.msra.mxu0 0
  %1423 = vmatprep.subr.bf16.mxu0 0
  %1424 = vmatpush1.bf16.msra.mxu0 0
  %1425 = vmatprep.subr.bf16.mxu0 0
  %1426 = vmatpush1.bf16.msra.mxu0 0
  %1427 = vmatprep.mubr.bf16.mxu0 0
  %1428 = vmatmul.mubr.bf16.gmra.mrb[0].mxu0 %v1394
  %v1429 = vpop.f32.mrb[0].mxu0
  %v1430 = vadd.f32 0.0, %v1429
  %v1431 = vpop.f32.mrb[0].mxu0
  %v1432 = vadd.f32 0.0, %v1431
  %v1433 = vpop.f32.mrb[0].mxu0
  %v1434 = vpop.f32.mrb[0].mxu0
  %1435 = vdwg.mxu0
  %1436 = vmatprep.subr.bf16.mxu0 0
  %1437 = vmatpush1.bf16.msra.mxu0 %v408
  %1438 = vmatprep.subr.bf16.mxu0 0
  %1439 = vmatpush1.bf16.msra.mxu0 %v411
  %1440 = vmatprep.subr.bf16.mxu0 0
  %1441 = vmatpush1.bf16.msra.mxu0 %v414
  %1442 = vmatprep.subr.bf16.mxu0 0
  %1443 = vmatpush1.bf16.msra.mxu0 %v417
  %1444 = vmatprep.subr.bf16.mxu0 0
  %1445 = vmatpush1.bf16.msra.mxu0 %v420
  %1446 = vmatprep.subr.bf16.mxu0 0
  %1447 = vmatpush1.bf16.msra.mxu0 %v423
  %1448 = vmatprep.subr.bf16.mxu0 0
  %1449 = vmatpush1.bf16.msra.mxu0 %v426
  %1450 = vmatprep.subr.bf16.mxu0 0
  %1451 = vmatpush1.bf16.msra.mxu0 %v429
  %1452 = vmatprep.subr.bf16.mxu0 0
  %1453 = vmatpush1.bf16.msra.mxu0 0
  %1454 = vmatprep.subr.bf16.mxu0 0
  %1455 = vmatpush1.bf16.msra.mxu0 0
  %1456 = vmatprep.subr.bf16.mxu0 0
  %1457 = vmatpush1.bf16.msra.mxu0 0
  %1458 = vmatprep.subr.bf16.mxu0 0
  %1459 = vmatpush1.bf16.msra.mxu0 0
  %1460 = vmatprep.subr.bf16.mxu0 0
  %1461 = vmatpush1.bf16.msra.mxu0 0
  %1462 = vmatprep.subr.bf16.mxu0 0
  %1463 = vmatpush1.bf16.msra.mxu0 0
  %1464 = vmatprep.subr.bf16.mxu0 0
  %1465 = vmatpush1.bf16.msra.mxu0 0
  %1466 = vmatprep.subr.bf16.mxu0 0
  %1467 = vmatpush1.bf16.msra.mxu0 0
  %1468 = vmatprep.mubr.bf16.mxu0 0
  %1469 = vmatmul.mubr.bf16.gmra.mrb[0].mxu0 %v1394
  %v1470 = vpop.f32.mrb[0].mxu0
  %v1471 = vadd.f32 0.0, %v1470
  %v1472 = vpop.f32.mrb[0].mxu0
  %v1473 = vpop.f32.mrb[0].mxu0
  %v1474 = vpop.f32.mrb[0].mxu0
  %1475 = vdwg.mxu0
  %v1476 = vadd.f32 %v1348, %v1430
  %v1477 = vxor.u32 %v1476, 2147483648
  %v1478 = vmul.f32 %v1477, 1.442695
  %v1479 = vpow.pop %v1478
  %v1480 = vadd.f32 %v1479, 1.0
  %v1481 = vrcp.pop %v1480
  %v1482 = vmul.f32 1.0, %v1481
  %v1483 = vadd.f32 %v1350, %v1432
  %v1484 = vxor.u32 %v1483, 2147483648
  %v1485 = vmul.f32 %v1484, 1.442695
  %v1486 = vpow.pop %v1485
  %v1487 = vadd.f32 %v1486, 1.0
  %v1488 = vrcp.pop %v1487
  %v1489 = vmul.f32 1.0, %v1488
  %v1490 = vadd.f32 %v1471, %v553
  %v1491 = vmul.f32 %v1482, %v1490
  %v1492 = vadd.f32 %v1389, %v1491
  %v1493 = vtanh.pop %v1492
  %v1494 = vsub.f32 1.0, %v1489
  %v1495 = vmul.f32 %v1494, %v1493
  %v1496 = vmul.f32 %v1489, %v1310
  %v1497 = vadd.f32 %v1495, %v1496
  %s1498 = scalar_lea.vmem %s0, 24
  %v1499 = vld [vmem:[%s1498] sm:$0xf]
  %1500 = vmatprep.subr.bf16.mxu0 %v197
  %1501 = vmatpush1.bf16.msra.mxu0 %v196
  %1502 = vmatprep.subr.bf16.mxu0 %v200
  %1503 = vmatpush1.bf16.msra.mxu0 %v199
  %1504 = vmatprep.subr.bf16.mxu0 %v203
  %1505 = vmatpush1.bf16.msra.mxu0 %v202
  %1506 = vmatprep.subr.bf16.mxu0 %v206
  %1507 = vmatpush1.bf16.msra.mxu0 %v205
  %1508 = vmatprep.subr.bf16.mxu0 %v209
  %1509 = vmatpush1.bf16.msra.mxu0 %v208
  %1510 = vmatprep.subr.bf16.mxu0 %v212
  %1511 = vmatpush1.bf16.msra.mxu0 %v211
  %1512 = vmatprep.subr.bf16.mxu0 %v215
  %1513 = vmatpush1.bf16.msra.mxu0 %v214
  %1514 = vmatprep.subr.bf16.mxu0 %v218
  %1515 = vmatpush1.bf16.msra.mxu0 %v217
  %1516 = vmatprep.subr.bf16.mxu0 0
  %1517 = vmatpush1.bf16.msra.mxu0 0
  %1518 = vmatprep.subr.bf16.mxu0 0
  %1519 = vmatpush1.bf16.msra.mxu0 0
  %1520 = vmatprep.subr.bf16.mxu0 0
  %1521 = vmatpush1.bf16.msra.mxu0 0
  %1522 = vmatprep.subr.bf16.mxu0 0
  %1523 = vmatpush1.bf16.msra.mxu0 0
  %1524 = vmatprep.subr.bf16.mxu0 0
  %1525 = vmatpush1.bf16.msra.mxu0 0
  %1526 = vmatprep.subr.bf16.mxu0 0
  %1527 = vmatpush1.bf16.msra.mxu0 0
  %1528 = vmatprep.subr.bf16.mxu0 0
  %1529 = vmatpush1.bf16.msra.mxu0 0
  %1530 = vmatprep.subr.bf16.mxu0 0
  %1531 = vmatpush1.bf16.msra.mxu0 0
  %1532 = vmatprep.mubr.bf16.mxu0 0
  %1533 = vmatmul.mubr.bf16.gmra.mrb[0].mxu0 %v1499
  %v1534 = vpop.f32.mrb[0].mxu0
  %v1535 = vadd.f32 %v104, %v1534
  %v1536 = vpop.f32.mrb[0].mxu0
  %v1537 = vadd.f32 %v108, %v1536
  %v1538 = vpop.f32.mrb[0].mxu0
  %v1539 = vpop.f32.mrb[0].mxu0
  %1540 = vdwg.mxu0
  %1541 = vmatprep.subr.bf16.mxu0 0
  %1542 = vmatpush1.bf16.msra.mxu0 %v198
  %1543 = vmatprep.subr.bf16.mxu0 0
  %1544 = vmatpush1.bf16.msra.mxu0 %v201
  %1545 = vmatprep.subr.bf16.mxu0 0
  %1546 = vmatpush1.bf16.msra.mxu0 %v204
  %1547 = vmatprep.subr.bf16.mxu0 0
  %1548 = vmatpush1.bf16.msra.mxu0 %v207
  %1549 = vmatprep.subr.bf16.mxu0 0
  %1550 = vmatpush1.bf16.msra.mxu0 %v210
  %1551 = vmatprep.subr.bf16.mxu0 0
  %1552 = vmatpush1.bf16.msra.mxu0 %v213
  %1553 = vmatprep.subr.bf16.mxu0 0
  %1554 = vmatpush1.bf16.msra.mxu0 %v216
  %1555 = vmatprep.subr.bf16.mxu0 0
  %1556 = vmatpush1.bf16.msra.mxu0 %v219
  %1557 = vmatprep.subr.bf16.mxu0 0
  %1558 = vmatpush1.bf16.msra.mxu0 0
  %1559 = vmatprep.subr.bf16.mxu0 0
  %1560 = vmatpush1.bf16.msra.mxu0 0
  %1561 = vmatprep.subr.bf16.mxu0 0
  %1562 = vmatpush1.bf16.msra.mxu0 0
  %1563 = vmatprep.subr.bf16.mxu0 0
  %1564 = vmatpush1.bf16.msra.mxu0 0
  %1565 = vmatprep.subr.bf16.mxu0 0
  %1566 = vmatpush1.bf16.msra.mxu0 0
  %1567 = vmatprep.subr.bf16.mxu0 0
  %1568 = vmatpush1.bf16.msra.mxu0 0
  %1569 = vmatprep.subr.bf16.mxu0 0
  %1570 = vmatpush1.bf16.msra.mxu0 0
  %1571 = vmatprep.subr.bf16.mxu0 0
  %1572 = vmatpush1.bf16.msra.mxu0 0
  %1573 = vmatprep.mubr.bf16.mxu0 0
  %1574 = vmatmul.mubr.bf16.gmra.mrb[0].mxu0 %v1499
  %v1575 = vpop.f32.mrb[0].mxu0
  %v1576 = vadd.f32 %v112, %v1575
  %v1577 = vpop.f32.mrb[0].mxu0
  %v1578 = vpop.f32.mrb[0].mxu0
  %v1579 = vpop.f32.mrb[0].mxu0
  %1580 = vdwg.mxu0
  %v1581 = vpack.c.bf16 %v1497, %v1497
  %1582 = vmatprep.subr.bf16.mxu0 %v407
  %1583 = vmatpush1.bf16.msra.mxu0 %v406
  %1584 = vmatprep.subr.bf16.mxu0 %v410
  %1585 = vmatpush1.bf16.msra.mxu0 %v409
  %1586 = vmatprep.subr.bf16.mxu0 %v413
  %1587 = vmatpush1.bf16.msra.mxu0 %v412
  %1588 = vmatprep.subr.bf16.mxu0 %v416
  %1589 = vmatpush1.bf16.msra.mxu0 %v415
  %1590 = vmatprep.subr.bf16.mxu0 %v419
  %1591 = vmatpush1.bf16.msra.mxu0 %v418
  %1592 = vmatprep.subr.bf16.mxu0 %v422
  %1593 = vmatpush1.bf16.msra.mxu0 %v421
  %1594 = vmatprep.subr.bf16.mxu0 %v425
  %1595 = vmatpush1.bf16.msra.mxu0 %v424
  %1596 = vmatprep.subr.bf16.mxu0 %v428
  %1597 = vmatpush1.bf16.msra.mxu0 %v427
  %1598 = vmatprep.subr.bf16.mxu0 0
  %1599 = vmatpush1.bf16.msra.mxu0 0
  %1600 = vmatprep.subr.bf16.mxu0 0
  %1601 = vmatpush1.bf16.msra.mxu0 0
  %1602 = vmatprep.subr.bf16.mxu0 0
  %1603 = vmatpush1.bf16.msra.mxu0 0
  %1604 = vmatprep.subr.bf16.mxu0 0
  %1605 = vmatpush1.bf16.msra.mxu0 0
  %1606 = vmatprep.subr.bf16.mxu0 0
  %1607 = vmatpush1.bf16.msra.mxu0 0
  %1608 = vmatprep.subr.bf16.mxu0 0
  %1609 = vmatpush1.bf16.msra.mxu0 0
  %1610 = vmatprep.subr.bf16.mxu0 0
  %1611 = vmatpush1.bf16.msra.mxu0 0
  %1612 = vmatprep.subr.bf16.mxu0 0
  %1613 = vmatpush1.bf16.msra.mxu0 0
  %1614 = vmatprep.mubr.bf16.mxu0 0
  %1615 = vmatmul.mubr.bf16.gmra.mrb[0].mxu0 %v1581
  %v1616 = vpop.f32.mrb[0].mxu0
  %v1617 = vadd.f32 0.0, %v1616
  %v1618 = vpop.f32.mrb[0].mxu0
  %v1619 = vadd.f32 0.0, %v1618
  %v1620 = vpop.f32.mrb[0].mxu0
  %v1621 = vpop.f32.mrb[0].mxu0
  %1622 = vdwg.mxu0
  %1623 = vmatprep.subr.bf16.mxu0 0
  %1624 = vmatpush1.bf16.msra.mxu0 %v408
  %1625 = vmatprep.subr.bf16.mxu0 0
  %1626 = vmatpush1.bf16.msra.mxu0 %v411
  %1627 = vmatprep.subr.bf16.mxu0 0
  %1628 = vmatpush1.bf16.msra.mxu0 %v414
  %1629 = vmatprep.subr.bf16.mxu0 0
  %1630 = vmatpush1.bf16.msra.mxu0 %v417
  %1631 = vmatprep.subr.bf16.mxu0 0
  %1632 = vmatpush1.bf16.msra.mxu0 %v420
  %1633 = vmatprep.subr.bf16.mxu0 0
  %1634 = vmatpush1.bf16.msra.mxu0 %v423
  %1635 = vmatprep.subr.bf16.mxu0 0
  %1636 = vmatpush1.bf16.msra.mxu0 %v426
  %1637 = vmatprep.subr.bf16.mxu0 0
  %1638 = vmatpush1.bf16.msra.mxu0 %v429
  %1639 = vmatprep.subr.bf16.mxu0 0
  %1640 = vmatpush1.bf16.msra.mxu0 0
  %1641 = vmatprep.subr.bf16.mxu0 0
  %1642 = vmatpush1.bf16.msra.mxu0 0
  %1643 = vmatprep.subr.bf16.mxu0 0
  %1644 = vmatpush1.bf16.msra.mxu0 0
  %1645 = vmatprep.subr.bf16.mxu0 0
  %1646 = vmatpush1.bf16.msra.mxu0 0
  %1647 = vmatprep.subr.bf16.mxu0 0
  %1648 = vmatpush1.bf16.msra.mxu0 0
  %1649 = vmatprep.subr.bf16.mxu0 0
  %1650 = vmatpush1.bf16.msra.mxu0 0
  %1651 = vmatprep.subr.bf16.mxu0 0
  %1652 = vmatpush1.bf16.msra.mxu0 0
  %1653 = vmatprep.subr.bf16.mxu0 0
  %1654 = vmatpush1.bf16.msra.mxu0 0
  %1655 = vmatprep.mubr.bf16.mxu0 0
  %1656 = vmatmul.mubr.bf16.gmra.mrb[0].mxu0 %v1581
  %v1657 = vpop.f32.mrb[0].mxu0
  %v1658 = vadd.f32 0.0, %v1657
  %v1659 = vpop.f32.mrb[0].mxu0
  %v1660 = vpop.f32.mrb[0].mxu0
  %v1661 = vpop.f32.mrb[0].mxu0
  %1662 = vdwg.mxu0
  %v1663 = vadd.f32 %v1535, %v1617
  %v1664 = vxor.u32 %v1663, 2147483648
  %v1665 = vmul.f32 %v1664, 1.442695
  %v1666 = vpow.pop %v1665
  %v1667 = vadd.f32 %v1666, 1.0
  %v1668 = vrcp.pop %v1667
  %v1669 = vmul.f32 1.0, %v1668
  %v1670 = vadd.f32 %v1537, %v1619
  %v1671 = vxor.u32 %v1670, 2147483648
  %v1672 = vmul.f32 %v1671, 1.442695
  %v1673 = vpow.pop %v1672
  %v1674 = vadd.f32 %v1673, 1.0
  %v1675 = vrcp.pop %v1674
  %v1676 = vmul.f32 1.0, %v1675
  %v1677 = vadd.f32 %v1658, %v553
  %v1678 = vmul.f32 %v1669, %v1677
  %v1679 = vadd.f32 %v1576, %v1678
  %v1680 = vtanh.pop %v1679
  %v1681 = vsub.f32 1.0, %v1676
  %v1682 = vmul.f32 %v1681, %v1680
  %v1683 = vmul.f32 %v1676, %v1497
  %v1684 = vadd.f32 %v1682, %v1683
  %s1685 = scalar_lea.vmem %s0, 28
  %v1686 = vld [vmem:[%s1685] sm:$0xf]
  %1687 = vmatprep.subr.bf16.mxu0 %v197
  %1688 = vmatpush1.bf16.msra.mxu0 %v196
  %1689 = vmatprep.subr.bf16.mxu0 %v200
  %1690 = vmatpush1.bf16.msra.mxu0 %v199
  %1691 = vmatprep.subr.bf16.mxu0 %v203
  %1692 = vmatpush1.bf16.msra.mxu0 %v202
  %1693 = vmatprep.subr.bf16.mxu0 %v206
  %1694 = vmatpush1.bf16.msra.mxu0 %v205
  %1695 = vmatprep.subr.bf16.mxu0 %v209
  %1696 = vmatpush1.bf16.msra.mxu0 %v208
  %1697 = vmatprep.subr.bf16.mxu0 %v212
  %1698 = vmatpush1.bf16.msra.mxu0 %v211
  %1699 = vmatprep.subr.bf16.mxu0 %v215
  %1700 = vmatpush1.bf16.msra.mxu0 %v214
  %1701 = vmatprep.subr.bf16.mxu0 %v218
  %1702 = vmatpush1.bf16.msra.mxu0 %v217
  %1703 = vmatprep.subr.bf16.mxu0 0
  %1704 = vmatpush1.bf16.msra.mxu0 0
  %1705 = vmatprep.subr.bf16.mxu0 0
  %1706 = vmatpush1.bf16.msra.mxu0 0
  %1707 = vmatprep.subr.bf16.mxu0 0
  %1708 = vmatpush1.bf16.msra.mxu0 0
  %1709 = vmatprep.subr.bf16.mxu0 0
  %1710 = vmatpush1.bf16.msra.mxu0 0
  %1711 = vmatprep.subr.bf16.mxu0 0
  %1712 = vmatpush1.bf16.msra.mxu0 0
  %1713 = vmatprep.subr.bf16.mxu0 0
  %1714 = vmatpush1.bf16.msra.mxu0 0
  %1715 = vmatprep.subr.bf16.mxu0 0
  %1716 = vmatpush1.bf16.msra.mxu0 0
  %1717 = vmatprep.subr.bf16.mxu0 0
  %1718 = vmatpush1.bf16.msra.mxu0 0
  %1719 = vmatprep.mubr.bf16.mxu0 0
  %1720 = vmatmul.mubr.bf16.gmra.mrb[0].mxu0 %v1686
  %v1721 = vpop.f32.mrb[0].mxu0
  %v1722 = vadd.f32 %v104, %v1721
  %v1723 = vpop.f32.mrb[0].mxu0
  %v1724 = vadd.f32 %v108, %v1723
  %v1725 = vpop.f32.mrb[0].mxu0
  %v1726 = vpop.f32.mrb[0].mxu0
  %1727 = vdwg.mxu0
  %1728 = vmatprep.subr.bf16.mxu0 0
  %1729 = vmatpush1.bf16.msra.mxu0 %v198
  %1730 = vmatprep.subr.bf16.mxu0 0
  %1731 = vmatpush1.bf16.msra.mxu0 %v201
  %1732 = vmatprep.subr.bf16.mxu0 0
  %1733 = vmatpush1.bf16.msra.mxu0 %v204
  %1734 = vmatprep.subr.bf16.mxu0 0
  %1735 = vmatpush1.bf16.msra.mxu0 %v207
  %1736 = vmatprep.subr.bf16.mxu0 0
  %1737 = vmatpush1.bf16.msra.mxu0 %v210
  %1738 = vmatprep.subr.bf16.mxu0 0
  %1739 = vmatpush1.bf16.msra.mxu0 %v213
  %1740 = vmatprep.subr.bf16.mxu0 0
  %1741 = vmatpush1.bf16.msra.mxu0 %v216
  %1742 = vmatprep.subr.bf16.mxu0 0
  %1743 = vmatpush1.bf16.msra.mxu0 %v219
  %1744 = vmatprep.subr.bf16.mxu0 0
  %1745 = vmatpush1.bf16.msra.mxu0 0
  %1746 = vmatprep.subr.bf16.mxu0 0
  %1747 = vmatpush1.bf16.msra.mxu0 0
  %1748 = vmatprep.subr.bf16.mxu0 0
  %1749 = vmatpush1.bf16.msra.mxu0 0
  %1750 = vmatprep.subr.bf16.mxu0 0
  %1751 = vmatpush1.bf16.msra.mxu0 0
  %1752 = vmatprep.subr.bf16.mxu0 0
  %1753 = vmatpush1.bf16.msra.mxu0 0
  %1754 = vmatprep.subr.bf16.mxu0 0
  %1755 = vmatpush1.bf16.msra.mxu0 0
  %1756 = vmatprep.subr.bf16.mxu0 0
  %1757 = vmatpush1.bf16.msra.mxu0 0
  %1758 = vmatprep.subr.bf16.mxu0 0
  %1759 = vmatpush1.bf16.msra.mxu0 0
  %1760 = vmatprep.mubr.bf16.mxu0 0
  %1761 = vmatmul.mubr.bf16.gmra.mrb[0].mxu0 %v1686
  %v1762 = vpop.f32.mrb[0].mxu0
  %v1763 = vadd.f32 %v112, %v1762
  %v1764 = vpop.f32.mrb[0].mxu0
  %v1765 = vpop.f32.mrb[0].mxu0
  %v1766 = vpop.f32.mrb[0].mxu0
  %1767 = vdwg.mxu0
  %v1768 = vpack.c.bf16 %v1684, %v1684
  %1769 = vmatprep.subr.bf16.mxu0 %v407
  %1770 = vmatpush1.bf16.msra.mxu0 %v406
  %1771 = vmatprep.subr.bf16.mxu0 %v410
  %1772 = vmatpush1.bf16.msra.mxu0 %v409
  %1773 = vmatprep.subr.bf16.mxu0 %v413
  %1774 = vmatpush1.bf16.msra.mxu0 %v412
  %1775 = vmatprep.subr.bf16.mxu0 %v416
  %1776 = vmatpush1.bf16.msra.mxu0 %v415
  %1777 = vmatprep.subr.bf16.mxu0 %v419
  %1778 = vmatpush1.bf16.msra.mxu0 %v418
  %1779 = vmatprep.subr.bf16.mxu0 %v422
  %1780 = vmatpush1.bf16.msra.mxu0 %v421
  %1781 = vmatprep.subr.bf16.mxu0 %v425
  %1782 = vmatpush1.bf16.msra.mxu0 %v424
  %1783 = vmatprep.subr.bf16.mxu0 %v428
  %1784 = vmatpush1.bf16.msra.mxu0 %v427
  %1785 = vmatprep.subr.bf16.mxu0 0
  %1786 = vmatpush1.bf16.msra.mxu0 0
  %1787 = vmatprep.subr.bf16.mxu0 0
  %1788 = vmatpush1.bf16.msra.mxu0 0
  %1789 = vmatprep.subr.bf16.mxu0 0
  %1790 = vmatpush1.bf16.msra.mxu0 0
  %1791 = vmatprep.subr.bf16.mxu0 0
  %1792 = vmatpush1.bf16.msra.mxu0 0
  %1793 = vmatprep.subr.bf16.mxu0 0
  %1794 = vmatpush1.bf16.msra.mxu0 0
  %1795 = vmatprep.subr.bf16.mxu0 0
  %1796 = vmatpush1.bf16.msra.mxu0 0
  %1797 = vmatprep.subr.bf16.mxu0 0
  %1798 = vmatpush1.bf16.msra.mxu0 0
  %1799 = vmatprep.subr.bf16.mxu0 0
  %1800 = vmatpush1.bf16.msra.mxu0 0
  %1801 = vmatprep.mubr.bf16.mxu0 0
  %1802 = vmatmul.mubr.bf16.gmra.mrb[0].mxu0 %v1768
  %v1803 = vpop.f32.mrb[0].mxu0
  %v1804 = vadd.f32 0.0, %v1803
  %v1805 = vpop.f32.mrb[0].mxu0
  %v1806 = vadd.f32 0.0, %v1805
  %v1807 = vpop.f32.mrb[0].mxu0
  %v1808 = vpop.f32.mrb[0].mxu0
  %1809 = vdwg.mxu0
  %1810 = vmatprep.subr.bf16.mxu0 0
  %1811 = vmatpush1.bf16.msra.mxu0 %v408
  %1812 = vmatprep.subr.bf16.mxu0 0
  %1813 = vmatpush1.bf16.msra.mxu0 %v411
  %1814 = vmatprep.subr.bf16.mxu0 0
  %1815 = vmatpush1.bf16.msra.mxu0 %v414
  %1816 = vmatprep.subr.bf16.mxu0 0
  %1817 = vmatpush1.bf16.msra.mxu0 %v417
  %1818 = vmatprep.subr.bf16.mxu0 0
  %1819 = vmatpush1.bf16.msra.mxu0 %v420
  %1820 = vmatprep.subr.bf16.mxu0 0
  %1821 = vmatpush1.bf16.msra.mxu0 %v423
  %1822 = vmatprep.subr.bf16.mxu0 0
  %1823 = vmatpush1.bf16.msra.mxu0 %v426
  %1824 = vmatprep.subr.bf16.mxu0 0
  %1825 = vmatpush1.bf16.msra.mxu0 %v429
  %1826 = vmatprep.subr.bf16.mxu0 0
  %1827 = vmatpush1.bf16.msra.mxu0 0
  %1828 = vmatprep.subr.bf16.mxu0 0
  %1829 = vmatpush1.bf16.msra.mxu0 0
  %1830 = vmatprep.subr.bf16.mxu0 0
  %1831 = vmatpush1.bf16.msra.mxu0 0
  %1832 = vmatprep.subr.bf16.mxu0 0
  %1833 = vmatpush1.bf16.msra.mxu0 0
  %1834 = vmatprep.subr.bf16.mxu0 0
  %1835 = vmatpush1.bf16.msra.mxu0 0
  %1836 = vmatprep.subr.bf16.mxu0 0
  %1837 = vmatpush1.bf16.msra.mxu0 0
  %1838 = vmatprep.subr.bf16.mxu0 0
  %1839 = vmatpush1.bf16.msra.mxu0 0
  %1840 = vmatprep.subr.bf16.mxu0 0
  %1841 = vmatpush1.bf16.msra.mxu0 0
  %1842 = vmatprep.mubr.bf16.mxu0 0
  %1843 = vmatmul.mubr.bf16.gmra.mrb[0].mxu0 %v1768
  %v1844 = vpop.f32.mrb[0].mxu0
  %v1845 = vadd.f32 0.0, %v1844
  %v1846 = vpop.f32.mrb[0].mxu0
  %v1847 = vpop.f32.mrb[0].mxu0
  %v1848 = vpop.f32.mrb[0].mxu0
  %1849 = vdwg.mxu0
  %v1850 = vadd.f32 %v1722, %v1804
  %v1851 = vxor.u32 %v1850, 2147483648
  %v1852 = vmul.f32 %v1851, 1.442695
  %v1853 = vpow.pop %v1852
  %v1854 = vadd.f32 %v1853, 1.0
  %v1855 = vrcp.pop %v1854
  %v1856 = vmul.f32 1.0, %v1855
  %v1857 = vadd.f32 %v1724, %v1806
  %v1858 = vxor.u32 %v1857, 2147483648
  %v1859 = vmul.f32 %v1858, 1.442695
  %v1860 = vpow.pop %v1859
  %v1861 = vadd.f32 %v1860, 1.0
  %v1862 = vrcp.pop %v1861
  %v1863 = vmul.f32 1.0, %v1862
  %v1864 = vadd.f32 %v1845, %v553
  %v1865 = vmul.f32 %v1856, %v1864
  %v1866 = vadd.f32 %v1763, %v1865
  %v1867 = vtanh.pop %v1866
  %v1868 = vsub.f32 1.0, %v1863
  %v1869 = vmul.f32 %v1868, %v1867
  %v1870 = vmul.f32 %v1863, %v1684
  %v1871 = vadd.f32 %v1869, %v1870
  %1872 = vst [vmem:[#allocation2] sm:$0xff] %v1871
  // Predicated region
  $region34: #{gru_imdb_forward.3} parent=0 // pred_check
    %p1873 = pneg %p27
  $region35: #{gru_imdb_forward.3} parent=0 // pred_check_branch
    %1875 = sbr.rel (%p1873) target = $region37
  $region36: #{gru_imdb_forward.3} parent=0 // pred_region
    %v1876 = vpack.c.bf16 %v1871, %v1871
    %v1877 = vld [vmem:[%s5] sm:$0xf]
    %v1878 = vld [vmem:[%s5 + $0x4] sm:$0xf]
    %v1879 = vld [vmem:[%s5 + $0x8] sm:$0xf]
    %v1880 = vld [vmem:[%s5 + $0xc] sm:$0xf]
    %v1881 = vld [vmem:[%s5 + $0x10] sm:$0xf]
    %v1882 = vld [vmem:[%s5 + $0x14] sm:$0xf]
    %v1883 = vld [vmem:[%s5 + $0x18] sm:$0xf]
    %v1884 = vld [vmem:[%s5 + $0x1c] sm:$0xf]
    %v1885 = vld [vmem:[%s5 + $0x20] sm:$0xf]
    %v1886 = vld [vmem:[%s5 + $0x24] sm:$0xf]
    %v1887 = vld [vmem:[%s5 + $0x28] sm:$0xf]
    %v1888 = vld [vmem:[%s5 + $0x2c] sm:$0xf]
    %v1889 = vld [vmem:[%s5 + $0x30] sm:$0xf]
    %v1890 = vld [vmem:[%s5 + $0x34] sm:$0xf]
    %v1891 = vld [vmem:[%s5 + $0x38] sm:$0xf]
    %v1892 = vld [vmem:[%s5 + $0x3c] sm:$0xf]
    %v1893 = vld [vmem:[%s6] sm:$0x1]
    %v1895 = vlaneseq
    %v1896 = vshrl.u32 %v1895, 7
    %v1897 = vsub.s32 0, %v1896
    %v1898 = vrot.slane %v1893, %v1897
    %v1916 = vunpack.c.l.b16 %v1877
    %v1917 = vunpack.c.l.b16 %v1878
    %v1918 = vunpack.c.l.b16 %v1879
    %v1919 = vunpack.c.l.b16 %v1880
    %v1920 = vunpack.c.l.b16 %v1881
    %v1921 = vunpack.c.l.b16 %v1882
    %v1922 = vunpack.c.l.b16 %v1883
    %v1923 = vunpack.c.l.b16 %v1884
    %v1924 = vunpack.c.l.b16 %v1885
    %v1925 = vunpack.c.l.b16 %v1886
    %v1926 = vunpack.c.l.b16 %v1887
    %v1927 = vunpack.c.l.b16 %v1888
    %v1928 = vunpack.c.l.b16 %v1889
    %v1929 = vunpack.c.l.b16 %v1890
    %v1930 = vunpack.c.l.b16 %v1891
    %v1931 = vunpack.c.l.b16 %v1892
    %v1932 = vpack.c.b16 %v1917, %v1916
    %v1933 = vpack.c.b16 %v1919, %v1918
    %v1934 = vpack.c.b16 %v1921, %v1920
    %v1935 = vpack.c.b16 %v1923, %v1922
    %v1936 = vpack.c.b16 %v1925, %v1924
    %v1937 = vpack.c.b16 %v1927, %v1926
    %v1938 = vpack.c.b16 %v1929, %v1928
    %v1939 = vpack.c.b16 %v1931, %v1930
    %1948 = vmatprep.subr.bf16.mxu0 0
    %1949 = vmatpush1.bf16.msra.mxu0 %v1932
    %1950 = vmatprep.subr.bf16.mxu0 0
    %1951 = vmatpush1.bf16.msra.mxu0 %v1933
    %1952 = vmatprep.subr.bf16.mxu0 0
    %1953 = vmatpush1.bf16.msra.mxu0 %v1934
    %1954 = vmatprep.subr.bf16.mxu0 0
    %1955 = vmatpush1.bf16.msra.mxu0 %v1935
    %1956 = vmatprep.subr.bf16.mxu0 0
    %1957 = vmatpush1.bf16.msra.mxu0 %v1936
    %1958 = vmatprep.subr.bf16.mxu0 0
    %1959 = vmatpush1.bf16.msra.mxu0 %v1937
    %1960 = vmatprep.subr.bf16.mxu0 0
    %1961 = vmatpush1.bf16.msra.mxu0 %v1938
    %1962 = vmatprep.subr.bf16.mxu0 0
    %1963 = vmatpush1.bf16.msra.mxu0 %v1939
    %1964 = vmatprep.subr.bf16.mxu0 0
    %1965 = vmatpush1.bf16.msra.mxu0 0
    %1966 = vmatprep.subr.bf16.mxu0 0
    %1967 = vmatpush1.bf16.msra.mxu0 0
    %1968 = vmatprep.subr.bf16.mxu0 0
    %1969 = vmatpush1.bf16.msra.mxu0 0
    %1970 = vmatprep.subr.bf16.mxu0 0
    %1971 = vmatpush1.bf16.msra.mxu0 0
    %1972 = vmatprep.subr.bf16.mxu0 0
    %1973 = vmatpush1.bf16.msra.mxu0 0
    %1974 = vmatprep.subr.bf16.mxu0 0
    %1975 = vmatpush1.bf16.msra.mxu0 0
    %1976 = vmatprep.subr.bf16.mxu0 0
    %1977 = vmatpush1.bf16.msra.mxu0 0
    %1978 = vmatprep.subr.bf16.mxu0 0
    %1979 = vmatpush1.bf16.msra.mxu0 0
    %1980 = vmatprep.mubr.bf16.mxu0 0
    %1981 = vmatmul.mubr.bf16.gmra.mrb[0].mxu0 %v1876
    %v1982 = vpop.f32.mrb[0].mxu0
    %v1983 = vadd.f32 %v1898, %v1982
    %v1984 = vpop.f32.mrb[0].mxu0
    %v1985 = vpop.f32.mrb[0].mxu0
    %v1986 = vpop.f32.mrb[0].mxu0
    %1987 = vdwg.mxu0
    %vm1988 = vcmask 15360
    %1989 = vst.msk [vmem:[%s7] sm:$0xff] %vm1988, %v1983
  $region37: #{gru_imdb_forward.3} parent=0 // pred_fallthru
    _
  // Predicated region
  $region38: #{gru_imdb_forward.3} parent=0 // pred_check
    _
  $region39: #{gru_imdb_forward.3} parent=0 // pred_check_branch
    %1991 = sbr.rel (0) target = $region41
  $region40: #{gru_imdb_forward.3} parent=0 // pred_region
    _
  $region41: #{gru_imdb_forward.3} parent=0 // pred_fallthru
    _
  // Predicated region
  $region42: #{gru_imdb_forward.3} parent=0 // pred_check
    _
  $region43: #{gru_imdb_forward.3} parent=0 // pred_check_branch
    %1993 = sbr.rel (0) target = $region45
  $region44: #{gru_imdb_forward.3} parent=0 // pred_region
    _
  $region45: #{gru_imdb_forward.3} parent=0 // pred_fallthru
    _

</llo_original>
